<compile_context>
chip_gen: v5e
topology: v5e:2x2
jax: 0.10.0
libtpu: 0.0.40
codegen_flags: <defaults>
</compile_context>

<pallas_src>
import functools
import math

import jax
import jax.numpy as jnp
from jax.experimental import pallas as pl
from jax.experimental.pallas import tpu as pltpu

VMEM_LIMIT_BYTES = 32 * 1024 * 1024          # explicit; safe on v5e/v6e/v7x
BBOX_XFORM_CLIP = math.log(1000.0 / 16.0)    # torchvision clamp for dw/dh


def _round_up(x, m):
    return ((x + m - 1) // m) * m


# --------------------------------------------------------------------------
# Pallas kernels
# --------------------------------------------------------------------------
def _conv3x3_relu_kernel(x_ref, w_ref, b_ref, o_ref, *, tile_m, wp):
    """3x3 conv (stride 1, pad 1) + bias + ReLU as 9 shifted matmuls.

    x_ref: (R_in, Cin) f32 — flattened zero-padded image, VMEM-resident.
    w_ref: (9, Cin, Cout) bf16 — tap-major weights.
    b_ref: (1, Cout) f32.
    o_ref: (tile_m, Cout) f32 — rows laid out on the padded-width grid.
    """
    cout = o_ref.shape[-1]
    r0 = pl.multiple_of(pl.program_id(0) * tile_m, 8)
    acc = jnp.zeros((tile_m, cout), jnp.float32)
    for t in range(9):
        dh, dw = divmod(t, 3)
        off = dh * wp + dw                         # constant row offset per tap
        tap = x_ref[pl.ds(r0 + off, tile_m), :].astype(jnp.bfloat16)
        acc = acc + jnp.dot(tap, w_ref[t], preferred_element_type=jnp.float32)
    o_ref[...] = jnp.maximum(acc + b_ref[...], 0.0)


def _ssd_head_kernel(ft_ref, w_ref, b_ref, anc_ref, out_ref, *,
                     num_classes, img_w, img_h, clip_val):
    """Fused SSD box/cls heads + softmax + argmax + box decode, HW on lanes.

    ft_ref : (C, tile_hw) f32 features.
    w_ref  : (Npad, C) bf16 — rows 0..3 box head, 4..4+nc-1 cls head, rest 0.
    b_ref  : (Npad, 1) f32.
    anc_ref: (4, tile_hw) f32 — rows cx, cy, w, h.
    out_ref: (8, tile_hw) f32 packed [x1, y1, x2, y2, score, label, 0, 0].
    """
    f = ft_ref[...].astype(jnp.bfloat16)
    y = jnp.dot(w_ref[...], f, preferred_element_type=jnp.float32) + b_ref[...]

    dx, dy = y[0:1], y[1:2]
    dw, dh = y[2:3], y[3:4]
    logits = y[4:4 + num_classes]                       # (nc, tile_hw)

    # softmax over classes (sublane axis); exp on EUP, approx reciprocal
    m = jnp.max(logits, axis=0, keepdims=True)
    e = jnp.exp(logits - m)
    probs = e * pl.reciprocal(jnp.sum(e, axis=0, keepdims=True), approx=True)

    fg = probs[1:]                                      # class 0 = background
    best = jnp.max(fg, axis=0, keepdims=True)           # reused: scores + argmax
    idx = jax.lax.broadcasted_iota(jnp.int32, fg.shape, 0)
    lab = jnp.min(jnp.where(fg >= best, idx, num_classes - 1),
                  axis=0, keepdims=True) + 1
    lab_f = lab.astype(jnp.float32)                     # small ints exact in f32

    # anchor decode (cx, cy, w, h) with clamped dw/dh
    anc = anc_ref[...]
    acx, acy, aw, ah = anc[0:1], anc[1:2], anc[2:3], anc[3:4]
    cx = acx + dx * 0.1 * aw
    cy = acy + dy * 0.1 * ah
    bw = aw * jnp.exp(jnp.minimum(dw * 0.2, clip_val))
    bh = ah * jnp.exp(jnp.minimum(dh * 0.2, clip_val))
    x1 = jnp.clip(cx - 0.5 * bw, 0.0, img_w)
    y1 = jnp.clip(cy - 0.5 * bh, 0.0, img_h)
    x2 = jnp.clip(cx + 0.5 * bw, 0.0, img_w)
    y2 = jnp.clip(cy + 0.5 * bh, 0.0, img_h)

    zero = jnp.zeros_like(best)
    out_ref[...] = jnp.concatenate([x1, y1, x2, y2, best, lab_f, zero, zero],
                                   axis=0)


# --------------------------------------------------------------------------
# pallas_call wrappers
# --------------------------------------------------------------------------
def conv3x3_relu(x_hwc, w_oihw, b, *, max_tile_m=512):
    """3x3 conv, stride 1, pad 1, + ReLU on a single HWC image."""
    H, W, Cin = x_hwc.shape
    Cout = w_oihw.shape[0]
    wp = W + 2
    m_out = H * wp                       # output rows on the padded-width grid

    tile_m = min(max_tile_m, _round_up(m_out, 8))
    m_pad = _round_up(m_out, tile_m)
    n_steps = m_pad // tile_m

    # zero-pad + flatten so every 3x3 tap becomes a constant row offset.
    xp = jnp.pad(x_hwc, ((1, 1), (1, 1), (0, 0))).reshape((H + 2) * wp, Cin)
    r_in = _round_up(m_pad + 2 * wp + 3, 8)
    xp = jnp.pad(xp, ((0, r_in - xp.shape[0]), (0, 0)))

    # (Cout, Cin, 3, 3) -> (3, 3, Cin, Cout) -> (9, Cin, Cout), bf16 operands
    w_taps = jnp.transpose(w_oihw, (2, 3, 1, 0)).reshape(9, Cin, Cout)
    w_taps = w_taps.astype(jnp.bfloat16)
    b2d = b.reshape(1, Cout).astype(jnp.float32)

    cost = pl.CostEstimate(
        flops=2 * m_pad * 9 * Cin * Cout,
        transcendentals=0,
        bytes_accessed=r_in * Cin * 4 + 9 * Cin * Cout * 2 + m_pad * Cout * 4)

    kernel = functools.partial(_conv3x3_relu_kernel, tile_m=tile_m, wp=wp)
    oflat = pl.pallas_call(
        kernel,
        out_shape=jax.ShapeDtypeStruct((m_pad, Cout), jnp.float32),
        grid_spec=pltpu.PrefetchScalarGridSpec(
            num_scalar_prefetch=0,
            grid=(n_steps,),
            in_specs=[
                # TODO(synk): the full padded image stays VMEM-resident; very
                # large feature maps would need halo-tiled DMA instead.
                pl.BlockSpec((r_in, Cin), lambda i: (0, 0)),
                pl.BlockSpec((9, Cin, Cout), lambda i: (0, 0, 0)),
                pl.BlockSpec((1, Cout), lambda i: (0, 0)),
            ],
            out_specs=pl.BlockSpec((tile_m, Cout), lambda i: (i, 0)),
        ),
        compiler_params=pltpu.CompilerParams(
            dimension_semantics=("parallel",),
            vmem_limit_bytes=VMEM_LIMIT_BYTES),
        cost_estimate=cost,
    )(xp, w_taps, b2d)

    # drop the 2 garbage columns introduced by the padded-width output grid
    return oflat[:m_out].reshape(H, wp, Cout)[:, :W, :]


def ssd_head(featT, w_heads, b_heads, anchorsT, img_w, img_h, num_classes):
    C, HW = featT.shape
    n_pad = w_heads.shape[0]
    tile_hw = 128 if HW % 128 == 0 else HW
    n_steps = HW // tile_hw

    cost = pl.CostEstimate(
        flops=2 * n_pad * C * HW,
        transcendentals=(num_classes + 3) * HW,
        bytes_accessed=C * HW * 4 + n_pad * C * 2 + 4 * HW * 4 + 8 * HW * 4)

    kernel = functools.partial(_ssd_head_kernel, num_classes=num_classes,
                               img_w=img_w, img_h=img_h,
                               clip_val=BBOX_XFORM_CLIP)
    packed = pl.pallas_call(
        kernel,
        out_shape=jax.ShapeDtypeStruct((8, HW), jnp.float32),
        grid_spec=pltpu.PrefetchScalarGridSpec(
            num_scalar_prefetch=0,
            grid=(n_steps,),
            in_specs=[
                pl.BlockSpec((C, tile_hw), lambda j: (0, j)),
                pl.BlockSpec((n_pad, C), lambda j: (0, 0)),
                pl.BlockSpec((n_pad, 1), lambda j: (0, 0)),
                pl.BlockSpec((4, tile_hw), lambda j: (0, j)),
            ],
            out_specs=pl.BlockSpec((8, tile_hw), lambda j: (0, j)),
        ),
        compiler_params=pltpu.CompilerParams(
            dimension_semantics=("parallel",),
            vmem_limit_bytes=VMEM_LIMIT_BYTES),
        cost_estimate=cost,
    )(featT, w_heads, b_heads, anchorsT)

    boxes = packed[0:4].T                       # (HW, 4)
    scores = packed[4]                          # (HW,)
    labels = packed[5].astype(jnp.int32)        # (HW,)
    return boxes, labels, scores


# --------------------------------------------------------------------------
# Synthetic SSD model (deterministic init) + SSDWrapper-style forward
# --------------------------------------------------------------------------
def init_params(key, cin=3, c=32, num_classes=5):
    k1, k2, k3, k4 = jax.random.split(key, 4)
    return {
        "conv1_w": 0.1 * jax.random.normal(k1, (c, cin, 3, 3), jnp.float32),
        "conv1_b": jnp.zeros((c,), jnp.float32),
        "conv2_w": 0.1 * jax.random.normal(k2, (c, c, 3, 3), jnp.float32),
        "conv2_b": jnp.zeros((c,), jnp.float32),
        "box_w": 0.1 * jax.random.normal(k3, (c, 4), jnp.float32),
        "box_b": jnp.zeros((1, 4), jnp.float32),
        "cls_w": 0.1 * jax.random.normal(k4, (c, num_classes), jnp.float32),
        "cls_b": jnp.zeros((1, num_classes), jnp.float32),
    }


def _prep_head_weights(params, c, num_classes):
    """Fuse box + cls 1x1-conv heads into one (Npad, C) bf16 weight slab."""
    n_out = 4 + num_classes
    n_pad = max(8, _round_up(n_out, 8))
    w = jnp.zeros((n_pad, c), jnp.float32)
    w = w.at[0:4].set(params["box_w"].T)
    w = w.at[4:n_out].set(params["cls_w"].T)
    b = jnp.zeros((n_pad, 1), jnp.float32)
    b = b.at[0:4, 0].set(params["box_b"].reshape(-1))
    b = b.at[4:n_out, 0].set(params["cls_b"].reshape(-1))
    return w.astype(jnp.bfloat16), b


def make_anchors_t(H, W, img_w, img_h):
    """Anchors as (4, HW): rows cx, cy, w, h (HW on lanes)."""
    stride_y = img_h / H
    stride_x = img_w / W
    ys = (jnp.arange(H, dtype=jnp.float32) + 0.5) * stride_y
    xs = (jnp.arange(W, dtype=jnp.float32) + 0.5) * stride_x
    cy, cx = jnp.meshgrid(ys, xs, indexing="ij")
    aw = jnp.full_like(cx, 2.0 * stride_x)
    ah = jnp.full_like(cy, 2.0 * stride_y)
    return jnp.stack([cx.ravel(), cy.ravel(), aw.ravel(), ah.ravel()], axis=0)


def ssd_wrapper_forward(images_nchw, params, num_classes=5):
    """Mirrors SSDWrapper.forward: run detector, return (boxes, labels, scores)
    for detections[0]. Only batch element 0 is processed — the other images
    never reach the returned outputs, so their backbone work is skipped."""
    _, _, H, W = images_nchw.shape

    x = jnp.transpose(images_nchw[0], (1, 2, 0))               # (H, W, Cin)
    x = conv3x3_relu(x, params["conv1_w"], params["conv1_b"])  # backbone
    x = conv3x3_relu(x, params["conv2_w"], params["conv2_b"])

    C = x.shape[-1]
    featT = jnp.transpose(x.reshape(H * W, C))                 # (C, HW)
    anchorsT = make_anchors_t(H, W, float(W), float(H))        # (4, HW)
    w_heads, b_heads = _prep_head_weights(params, C, num_classes)

    return ssd_head(featT, w_heads, b_heads, anchorsT,
                    float(W), float(H), num_classes)


if __name__ == "__main__":
    key = jax.random.PRNGKey(0)
    kp, kx = jax.random.split(key)

    num_classes = 5
    params = init_params(kp, cin=3, c=32, num_classes=num_classes)
    images = jax.random.uniform(kx, (2, 3, 16, 16), jnp.float32)   # NCHW input

    fwd = jax.jit(functools.partial(ssd_wrapper_forward, num_classes=num_classes))
    boxes, labels, scores = fwd(images, params)
    jax.block_until_ready((boxes, labels, scores))

    assert boxes.shape == (16 * 16, 4) and boxes.dtype == jnp.float32
    assert labels.shape == (16 * 16,) and labels.dtype == jnp.int32
    assert scores.shape == (16 * 16,) and scores.dtype == jnp.float32
    assert bool(jnp.all(jnp.isfinite(boxes)))
    assert bool(jnp.all(jnp.isfinite(scores)))
    assert bool(jnp.all((scores > 0.0) & (scores <= 1.0 + 1e-3)))
    assert bool(jnp.all((labels >= 1) & (labels < num_classes)))
    assert bool(jnp.all(boxes[:, 2] >= boxes[:, 0]))
    assert bool(jnp.all(boxes[:, 3] >= boxes[:, 1]))
    print("KERNEL_OK")
</pallas_src>

<mosaic_0001>
module attributes {stable_mosaic.version = 11 : i64} {
  func.func @_conv3x3_relu_kernel(%arg0: i32, %arg1: memref<328x3xf32, #tpu.memory_space<vmem>>, %arg2: memref<9x3x32xbf16, #tpu.memory_space<vmem>>, %arg3: memref<1x32xf32, #tpu.memory_space<vmem>>, %arg4: memref<288x32xf32, #tpu.memory_space<vmem>>) attributes {dimension_semantics = [#tpu.dimension_semantics<parallel>], iteration_bounds = array<i64: 1>, scalar_prefetch = 0 : i64, scratch_operands = 0 : i64, tpu.core_type = #tpu.core_type<tc>, window_params = [{pipeline_mode = #tpu.pipeline_mode<synchronous>, transform_indices = @transform_0, window_bounds = array<i64: 328, 3>}, {pipeline_mode = #tpu.pipeline_mode<synchronous>, transform_indices = @transform_1, window_bounds = array<i64: 9, 3, 32>}, {pipeline_mode = #tpu.pipeline_mode<synchronous>, transform_indices = @transform_2, window_bounds = array<i64: 1, 32>}, {transform_indices = @transform_3, window_bounds = array<i64: 288, 32>}]} {
    %c288_i32 = arith.constant 288 : i32
    %0 = arith.muli %arg0, %c288_i32 : i32
    %1 = tpu.assume_multiple %0, 8 : i32
    %cst = arith.constant 0.000000e+00 : f32
    %2 = vector.broadcast %cst : f32 to vector<288x32xf32>
    %c0_i32 = arith.constant 0 : i32
    %3 = arith.addi %1, %c0_i32 : i32
    %4 = arith.index_cast %3 : i32 to index
    %c0 = arith.constant 0 : index
    %5 = vector.load %arg1[%4, %c0] : memref<328x3xf32, #tpu.memory_space<vmem>>, vector<288x3xf32>
    %6 = arith.truncf %5 : vector<288x3xf32> to vector<288x3xbf16>
    %c0_0 = arith.constant 0 : index
    %c0_1 = arith.constant 0 : index
    %c0_2 = arith.constant 0 : index
    %7 = vector.load %arg2[%c0_0, %c0_1, %c0_2] : memref<9x3x32xbf16, #tpu.memory_space<vmem>>, vector<1x3x32xbf16>
    %8 = vector.shape_cast %7 : vector<1x3x32xbf16> to vector<3x32xbf16>
    %cst_3 = arith.constant dense<0.000000e+00> : vector<288x32xf32>
    %9 = tpu.matmul %6, %8, %cst_3 {dimension_numbers = #tpu.dot_dimension_numbers<[1], [0], [0], [1], [0, 0, 1, 1], [], []>} : vector<288x3xbf16>, vector<3x32xbf16>, vector<288x32xf32> -> vector<288x32xf32>
    %10 = arith.addf %2, %9 : vector<288x32xf32>
    %c1_i32 = arith.constant 1 : i32
    %11 = arith.addi %1, %c1_i32 : i32
    %12 = arith.index_cast %11 : i32 to index
    %c0_4 = arith.constant 0 : index
    %13 = vector.load %arg1[%12, %c0_4] : memref<328x3xf32, #tpu.memory_space<vmem>>, vector<288x3xf32>
    %14 = arith.truncf %13 : vector<288x3xf32> to vector<288x3xbf16>
    %c1 = arith.constant 1 : index
    %c0_5 = arith.constant 0 : index
    %c0_6 = arith.constant 0 : index
    %15 = vector.load %arg2[%c1, %c0_5, %c0_6] : memref<9x3x32xbf16, #tpu.memory_space<vmem>>, vector<1x3x32xbf16>
    %16 = vector.shape_cast %15 : vector<1x3x32xbf16> to vector<3x32xbf16>
    %cst_7 = arith.constant dense<0.000000e+00> : vector<288x32xf32>
    %17 = tpu.matmul %14, %16, %cst_7 {dimension_numbers = #tpu.dot_dimension_numbers<[1], [0], [0], [1], [0, 0, 1, 1], [], []>} : vector<288x3xbf16>, vector<3x32xbf16>, vector<288x32xf32> -> vector<288x32xf32>
    %18 = arith.addf %10, %17 : vector<288x32xf32>
    %c2_i32 = arith.constant 2 : i32
    %19 = arith.addi %1, %c2_i32 : i32
    %20 = arith.index_cast %19 : i32 to index
    %c0_8 = arith.constant 0 : index
    %21 = vector.load %arg1[%20, %c0_8] : memref<328x3xf32, #tpu.memory_space<vmem>>, vector<288x3xf32>
    %22 = arith.truncf %21 : vector<288x3xf32> to vector<288x3xbf16>
    %c2 = arith.constant 2 : index
    %c0_9 = arith.constant 0 : index
    %c0_10 = arith.constant 0 : index
    %23 = vector.load %arg2[%c2, %c0_9, %c0_10] : memref<9x3x32xbf16, #tpu.memory_space<vmem>>, vector<1x3x32xbf16>
    %24 = vector.shape_cast %23 : vector<1x3x32xbf16> to vector<3x32xbf16>
    %cst_11 = arith.constant dense<0.000000e+00> : vector<288x32xf32>
    %25 = tpu.matmul %22, %24, %cst_11 {dimension_numbers = #tpu.dot_dimension_numbers<[1], [0], [0], [1], [0, 0, 1, 1], [], []>} : vector<288x3xbf16>, vector<3x32xbf16>, vector<288x32xf32> -> vector<288x32xf32>
    %26 = arith.addf %18, %25 : vector<288x32xf32>
    %c18_i32 = arith.constant 18 : i32
    %27 = arith.addi %1, %c18_i32 : i32
    %28 = arith.index_cast %27 : i32 to index
    %c0_12 = arith.constant 0 : index
    %29 = vector.load %arg1[%28, %c0_12] : memref<328x3xf32, #tpu.memory_space<vmem>>, vector<288x3xf32>
    %30 = arith.truncf %29 : vector<288x3xf32> to vector<288x3xbf16>
    %c3 = arith.constant 3 : index
    %c0_13 = arith.constant 0 : index
    %c0_14 = arith.constant 0 : index
    %31 = vector.load %arg2[%c3, %c0_13, %c0_14] : memref<9x3x32xbf16, #tpu.memory_space<vmem>>, vector<1x3x32xbf16>
    %32 = vector.shape_cast %31 : vector<1x3x32xbf16> to vector<3x32xbf16>
    %cst_15 = arith.constant dense<0.000000e+00> : vector<288x32xf32>
    %33 = tpu.matmul %30, %32, %cst_15 {dimension_numbers = #tpu.dot_dimension_numbers<[1], [0], [0], [1], [0, 0, 1, 1], [], []>} : vector<288x3xbf16>, vector<3x32xbf16>, vector<288x32xf32> -> vector<288x32xf32>
    %34 = arith.addf %26, %33 : vector<288x32xf32>
    %c19_i32 = arith.constant 19 : i32
    %35 = arith.addi %1, %c19_i32 : i32
    %36 = arith.index_cast %35 : i32 to index
    %c0_16 = arith.constant 0 : index
    %37 = vector.load %arg1[%36, %c0_16] : memref<328x3xf32, #tpu.memory_space<vmem>>, vector<288x3xf32>
    %38 = arith.truncf %37 : vector<288x3xf32> to vector<288x3xbf16>
    %c4 = arith.constant 4 : index
    %c0_17 = arith.constant 0 : index
    %c0_18 = arith.constant 0 : index
    %39 = vector.load %arg2[%c4, %c0_17, %c0_18] : memref<9x3x32xbf16, #tpu.memory_space<vmem>>, vector<1x3x32xbf16>
    %40 = vector.shape_cast %39 : vector<1x3x32xbf16> to vector<3x32xbf16>
    %cst_19 = arith.constant dense<0.000000e+00> : vector<288x32xf32>
    %41 = tpu.matmul %38, %40, %cst_19 {dimension_numbers = #tpu.dot_dimension_numbers<[1], [0], [0], [1], [0, 0, 1, 1], [], []>} : vector<288x3xbf16>, vector<3x32xbf16>, vector<288x32xf32> -> vector<288x32xf32>
    %42 = arith.addf %34, %41 : vector<288x32xf32>
    %c20_i32 = arith.constant 20 : i32
    %43 = arith.addi %1, %c20_i32 : i32
    %44 = arith.index_cast %43 : i32 to index
    %c0_20 = arith.constant 0 : index
    %45 = vector.load %arg1[%44, %c0_20] : memref<328x3xf32, #tpu.memory_space<vmem>>, vector<288x3xf32>
    %46 = arith.truncf %45 : vector<288x3xf32> to vector<288x3xbf16>
    %c5 = arith.constant 5 : index
    %c0_21 = arith.constant 0 : index
    %c0_22 = arith.constant 0 : index
    %47 = vector.load %arg2[%c5, %c0_21, %c0_22] : memref<9x3x32xbf16, #tpu.memory_space<vmem>>, vector<1x3x32xbf16>
    %48 = vector.shape_cast %47 : vector<1x3x32xbf16> to vector<3x32xbf16>
    %cst_23 = arith.constant dense<0.000000e+00> : vector<288x32xf32>
    %49 = tpu.matmul %46, %48, %cst_23 {dimension_numbers = #tpu.dot_dimension_numbers<[1], [0], [0], [1], [0, 0, 1, 1], [], []>} : vector<288x3xbf16>, vector<3x32xbf16>, vector<288x32xf32> -> vector<288x32xf32>
    %50 = arith.addf %42, %49 : vector<288x32xf32>
    %c36_i32 = arith.constant 36 : i32
    %51 = arith.addi %1, %c36_i32 : i32
    %52 = arith.index_cast %51 : i32 to index
    %c0_24 = arith.constant 0 : index
    %53 = vector.load %arg1[%52, %c0_24] : memref<328x3xf32, #tpu.memory_space<vmem>>, vector<288x3xf32>
    %54 = arith.truncf %53 : vector<288x3xf32> to vector<288x3xbf16>
    %c6 = arith.constant 6 : index
    %c0_25 = arith.constant 0 : index
    %c0_26 = arith.constant 0 : index
    %55 = vector.load %arg2[%c6, %c0_25, %c0_26] : memref<9x3x32xbf16, #tpu.memory_space<vmem>>, vector<1x3x32xbf16>
    %56 = vector.shape_cast %55 : vector<1x3x32xbf16> to vector<3x32xbf16>
    %cst_27 = arith.constant dense<0.000000e+00> : vector<288x32xf32>
    %57 = tpu.matmul %54, %56, %cst_27 {dimension_numbers = #tpu.dot_dimension_numbers<[1], [0], [0], [1], [0, 0, 1, 1], [], []>} : vector<288x3xbf16>, vector<3x32xbf16>, vector<288x32xf32> -> vector<288x32xf32>
    %58 = arith.addf %50, %57 : vector<288x32xf32>
    %c37_i32 = arith.constant 37 : i32
    %59 = arith.addi %1, %c37_i32 : i32
    %60 = arith.index_cast %59 : i32 to index
    %c0_28 = arith.constant 0 : index
    %61 = vector.load %arg1[%60, %c0_28] : memref<328x3xf32, #tpu.memory_space<vmem>>, vector<288x3xf32>
    %62 = arith.truncf %61 : vector<288x3xf32> to vector<288x3xbf16>
    %c7 = arith.constant 7 : index
    %c0_29 = arith.constant 0 : index
    %c0_30 = arith.constant 0 : index
    %63 = vector.load %arg2[%c7, %c0_29, %c0_30] : memref<9x3x32xbf16, #tpu.memory_space<vmem>>, vector<1x3x32xbf16>
    %64 = vector.shape_cast %63 : vector<1x3x32xbf16> to vector<3x32xbf16>
    %cst_31 = arith.constant dense<0.000000e+00> : vector<288x32xf32>
    %65 = tpu.matmul %62, %64, %cst_31 {dimension_numbers = #tpu.dot_dimension_numbers<[1], [0], [0], [1], [0, 0, 1, 1], [], []>} : vector<288x3xbf16>, vector<3x32xbf16>, vector<288x32xf32> -> vector<288x32xf32>
    %66 = arith.addf %58, %65 : vector<288x32xf32>
    %c38_i32 = arith.constant 38 : i32
    %67 = arith.addi %1, %c38_i32 : i32
    %68 = arith.index_cast %67 : i32 to index
    %c0_32 = arith.constant 0 : index
    %69 = vector.load %arg1[%68, %c0_32] : memref<328x3xf32, #tpu.memory_space<vmem>>, vector<288x3xf32>
    %70 = arith.truncf %69 : vector<288x3xf32> to vector<288x3xbf16>
    %c8 = arith.constant 8 : index
    %c0_33 = arith.constant 0 : index
    %c0_34 = arith.constant 0 : index
    %71 = vector.load %arg2[%c8, %c0_33, %c0_34] : memref<9x3x32xbf16, #tpu.memory_space<vmem>>, vector<1x3x32xbf16>
    %72 = vector.shape_cast %71 : vector<1x3x32xbf16> to vector<3x32xbf16>
    %cst_35 = arith.constant dense<0.000000e+00> : vector<288x32xf32>
    %73 = tpu.matmul %70, %72, %cst_35 {dimension_numbers = #tpu.dot_dimension_numbers<[1], [0], [0], [1], [0, 0, 1, 1], [], []>} : vector<288x3xbf16>, vector<3x32xbf16>, vector<288x32xf32> -> vector<288x32xf32>
    %74 = arith.addf %66, %73 : vector<288x32xf32>
    %c0_36 = arith.constant 0 : index
    %c0_37 = arith.constant 0 : index
    %75 = vector.load %arg3[%c0_36, %c0_37] : memref<1x32xf32, #tpu.memory_space<vmem>>, vector<1x32xf32>
    %76 = vector.broadcast %75 : vector<1x32xf32> to vector<288x32xf32>
    %77 = arith.addf %74, %76 : vector<288x32xf32>
    %cst_38 = arith.constant 0.000000e+00 : f32
    %78 = vector.broadcast %cst_38 : f32 to vector<288x32xf32>
    %79 = arith.maximumf %77, %78 : vector<288x32xf32>
    %c0_39 = arith.constant 0 : index
    %c0_40 = arith.constant 0 : index
    %80 = vector.load %arg4[%c0_39, %c0_40] : memref<288x32xf32, #tpu.memory_space<vmem>>, vector<288x32xf32>
    tpu.vector_store %arg4[%c0_39, %c0_40], %79 {strides = array<i32>} : memref<288x32xf32, #tpu.memory_space<vmem>>, vector<288x32xf32>,
    return
  }
  func.func @transform_0(%arg0: i32) -> (i32, i32) {
    %c0_i32 = arith.constant 0 : i32
    %c0_i32_0 = arith.constant 0 : i32
    %c0_i32_1 = arith.constant 0 : i32
    return %c0_i32, %c0_i32_0 : i32, i32
  }
  func.func @transform_1(%arg0: i32) -> (i32, i32, i32) {
    %c0_i32 = arith.constant 0 : i32
    %c0_i32_0 = arith.constant 0 : i32
    %c0_i32_1 = arith.constant 0 : i32
    %c0_i32_2 = arith.constant 0 : i32
    return %c0_i32, %c0_i32_0, %c0_i32_1 : i32, i32, i32
  }
  func.func @transform_2(%arg0: i32) -> (i32, i32) {
    %c0_i32 = arith.constant 0 : i32
    %c0_i32_0 = arith.constant 0 : i32
    %c0_i32_1 = arith.constant 0 : i32
    return %c0_i32, %c0_i32_0 : i32, i32
  }
  func.func @transform_3(%arg0: i32) -> (i32, i32) {
    %c0_i32 = arith.constant 0 : i32
    %c0_i32_0 = arith.constant 0 : i32
    return %arg0, %c0_i32 : i32, i32
  }
}

module attributes {stable_mosaic.version = 11 : i64} {
  func.func @_conv3x3_relu_kernel(%arg0: i32, %arg1: memref<328x32xf32, #tpu.memory_space<vmem>>, %arg2: memref<9x32x32xbf16, #tpu.memory_space<vmem>>, %arg3: memref<1x32xf32, #tpu.memory_space<vmem>>, %arg4: memref<288x32xf32, #tpu.memory_space<vmem>>) attributes {dimension_semantics = [#tpu.dimension_semantics<parallel>], iteration_bounds = array<i64: 1>, scalar_prefetch = 0 : i64, scratch_operands = 0 : i64, tpu.core_type = #tpu.core_type<tc>, window_params = [{pipeline_mode = #tpu.pipeline_mode<synchronous>, transform_indices = @transform_0, window_bounds = array<i64: 328, 32>}, {pipeline_mode = #tpu.pipeline_mode<synchronous>, transform_indices = @transform_1, window_bounds = array<i64: 9, 32, 32>}, {pipeline_mode = #tpu.pipeline_mode<synchronous>, transform_indices = @transform_2, window_bounds = array<i64: 1, 32>}, {transform_indices = @transform_3, window_bounds = array<i64: 288, 32>}]} {
    %c288_i32 = arith.constant 288 : i32
    %0 = arith.muli %arg0, %c288_i32 : i32
    %1 = tpu.assume_multiple %0, 8 : i32
    %cst = arith.constant 0.000000e+00 : f32
    %2 = vector.broadcast %cst : f32 to vector<288x32xf32>
    %c0_i32 = arith.constant 0 : i32
    %3 = arith.addi %1, %c0_i32 : i32
    %4 = arith.index_cast %3 : i32 to index
    %c0 = arith.constant 0 : index
    %5 = vector.load %arg1[%4, %c0] : memref<328x32xf32, #tpu.memory_space<vmem>>, vector<288x32xf32>
    %6 = arith.truncf %5 : vector<288x32xf32> to vector<288x32xbf16>
    %c0_0 = arith.constant 0 : index
    %c0_1 = arith.constant 0 : index
    %c0_2 = arith.constant 0 : index
    %7 = vector.load %arg2[%c0_0, %c0_1, %c0_2] : memref<9x32x32xbf16, #tpu.memory_space<vmem>>, vector<1x32x32xbf16>
    %8 = vector.shape_cast %7 : vector<1x32x32xbf16> to vector<32x32xbf16>
    %cst_3 = arith.constant dense<0.000000e+00> : vector<288x32xf32>
    %9 = tpu.matmul %6, %8, %cst_3 {dimension_numbers = #tpu.dot_dimension_numbers<[1], [0], [0], [1], [0, 0, 1, 1], [], []>} : vector<288x32xbf16>, vector<32x32xbf16>, vector<288x32xf32> -> vector<288x32xf32>
    %10 = arith.addf %2, %9 : vector<288x32xf32>
    %c1_i32 = arith.constant 1 : i32
    %11 = arith.addi %1, %c1_i32 : i32
    %12 = arith.index_cast %11 : i32 to index
    %c0_4 = arith.constant 0 : index
    %13 = vector.load %arg1[%12, %c0_4] : memref<328x32xf32, #tpu.memory_space<vmem>>, vector<288x32xf32>
    %14 = arith.truncf %13 : vector<288x32xf32> to vector<288x32xbf16>
    %c1 = arith.constant 1 : index
    %c0_5 = arith.constant 0 : index
    %c0_6 = arith.constant 0 : index
    %15 = vector.load %arg2[%c1, %c0_5, %c0_6] : memref<9x32x32xbf16, #tpu.memory_space<vmem>>, vector<1x32x32xbf16>
    %16 = vector.shape_cast %15 : vector<1x32x32xbf16> to vector<32x32xbf16>
    %cst_7 = arith.constant dense<0.000000e+00> : vector<288x32xf32>
    %17 = tpu.matmul %14, %16, %cst_7 {dimension_numbers = #tpu.dot_dimension_numbers<[1], [0], [0], [1], [0, 0, 1, 1], [], []>} : vector<288x32xbf16>, vector<32x32xbf16>, vector<288x32xf32> -> vector<288x32xf32>
    %18 = arith.addf %10, %17 : vector<288x32xf32>
    %c2_i32 = arith.constant 2 : i32
    %19 = arith.addi %1, %c2_i32 : i32
    %20 = arith.index_cast %19 : i32 to index
    %c0_8 = arith.constant 0 : index
    %21 = vector.load %arg1[%20, %c0_8] : memref<328x32xf32, #tpu.memory_space<vmem>>, vector<288x32xf32>
    %22 = arith.truncf %21 : vector<288x32xf32> to vector<288x32xbf16>
    %c2 = arith.constant 2 : index
    %c0_9 = arith.constant 0 : index
    %c0_10 = arith.constant 0 : index
    %23 = vector.load %arg2[%c2, %c0_9, %c0_10] : memref<9x32x32xbf16, #tpu.memory_space<vmem>>, vector<1x32x32xbf16>
    %24 = vector.shape_cast %23 : vector<1x32x32xbf16> to vector<32x32xbf16>
    %cst_11 = arith.constant dense<0.000000e+00> : vector<288x32xf32>
    %25 = tpu.matmul %22, %24, %cst_11 {dimension_numbers = #tpu.dot_dimension_numbers<[1], [0], [0], [1], [0, 0, 1, 1], [], []>} : vector<288x32xbf16>, vector<32x32xbf16>, vector<288x32xf32> -> vector<288x32xf32>
    %26 = arith.addf %18, %25 : vector<288x32xf32>
    %c18_i32 = arith.constant 18 : i32
    %27 = arith.addi %1, %c18_i32 : i32
    %28 = arith.index_cast %27 : i32 to index
    %c0_12 = arith.constant 0 : index
    %29 = vector.load %arg1[%28, %c0_12] : memref<328x32xf32, #tpu.memory_space<vmem>>, vector<288x32xf32>
    %30 = arith.truncf %29 : vector<288x32xf32> to vector<288x32xbf16>
    %c3 = arith.constant 3 : index
    %c0_13 = arith.constant 0 : index
    %c0_14 = arith.constant 0 : index
    %31 = vector.load %arg2[%c3, %c0_13, %c0_14] : memref<9x32x32xbf16, #tpu.memory_space<vmem>>, vector<1x32x32xbf16>
    %32 = vector.shape_cast %31 : vector<1x32x32xbf16> to vector<32x32xbf16>
    %cst_15 = arith.constant dense<0.000000e+00> : vector<288x32xf32>
    %33 = tpu.matmul %30, %32, %cst_15 {dimension_numbers = #tpu.dot_dimension_numbers<[1], [0], [0], [1], [0, 0, 1, 1], [], []>} : vector<288x32xbf16>, vector<32x32xbf16>, vector<288x32xf32> -> vector<288x32xf32>
    %34 = arith.addf %26, %33 : vector<288x32xf32>
    %c19_i32 = arith.constant 19 : i32
    %35 = arith.addi %1, %c19_i32 : i32
    %36 = arith.index_cast %35 : i32 to index
    %c0_16 = arith.constant 0 : index
    %37 = vector.load %arg1[%36, %c0_16] : memref<328x32xf32, #tpu.memory_space<vmem>>, vector<288x32xf32>
    %38 = arith.truncf %37 : vector<288x32xf32> to vector<288x32xbf16>
    %c4 = arith.constant 4 : index
    %c0_17 = arith.constant 0 : index
    %c0_18 = arith.constant 0 : index
    %39 = vector.load %arg2[%c4, %c0_17, %c0_18] : memref<9x32x32xbf16, #tpu.memory_space<vmem>>, vector<1x32x32xbf16>
    %40 = vector.shape_cast %39 : vector<1x32x32xbf16> to vector<32x32xbf16>
    %cst_19 = arith.constant dense<0.000000e+00> : vector<288x32xf32>
    %41 = tpu.matmul %38, %40, %cst_19 {dimension_numbers = #tpu.dot_dimension_numbers<[1], [0], [0], [1], [0, 0, 1, 1], [], []>} : vector<288x32xbf16>, vector<32x32xbf16>, vector<288x32xf32> -> vector<288x32xf32>
    %42 = arith.addf %34, %41 : vector<288x32xf32>
    %c20_i32 = arith.constant 20 : i32
    %43 = arith.addi %1, %c20_i32 : i32
    %44 = arith.index_cast %43 : i32 to index
    %c0_20 = arith.constant 0 : index
    %45 = vector.load %arg1[%44, %c0_20] : memref<328x32xf32, #tpu.memory_space<vmem>>, vector<288x32xf32>
    %46 = arith.truncf %45 : vector<288x32xf32> to vector<288x32xbf16>
    %c5 = arith.constant 5 : index
    %c0_21 = arith.constant 0 : index
    %c0_22 = arith.constant 0 : index
    %47 = vector.load %arg2[%c5, %c0_21, %c0_22] : memref<9x32x32xbf16, #tpu.memory_space<vmem>>, vector<1x32x32xbf16>
    %48 = vector.shape_cast %47 : vector<1x32x32xbf16> to vector<32x32xbf16>
    %cst_23 = arith.constant dense<0.000000e+00> : vector<288x32xf32>
    %49 = tpu.matmul %46, %48, %cst_23 {dimension_numbers = #tpu.dot_dimension_numbers<[1], [0], [0], [1], [0, 0, 1, 1], [], []>} : vector<288x32xbf16>, vector<32x32xbf16>, vector<288x32xf32> -> vector<288x32xf32>
    %50 = arith.addf %42, %49 : vector<288x32xf32>
    %c36_i32 = arith.constant 36 : i32
    %51 = arith.addi %1, %c36_i32 : i32
    %52 = arith.index_cast %51 : i32 to index
    %c0_24 = arith.constant 0 : index
    %53 = vector.load %arg1[%52, %c0_24] : memref<328x32xf32, #tpu.memory_space<vmem>>, vector<288x32xf32>
    %54 = arith.truncf %53 : vector<288x32xf32> to vector<288x32xbf16>
    %c6 = arith.constant 6 : index
    %c0_25 = arith.constant 0 : index
    %c0_26 = arith.constant 0 : index
    %55 = vector.load %arg2[%c6, %c0_25, %c0_26] : memref<9x32x32xbf16, #tpu.memory_space<vmem>>, vector<1x32x32xbf16>
    %56 = vector.shape_cast %55 : vector<1x32x32xbf16> to vector<32x32xbf16>
    %cst_27 = arith.constant dense<0.000000e+00> : vector<288x32xf32>
    %57 = tpu.matmul %54, %56, %cst_27 {dimension_numbers = #tpu.dot_dimension_numbers<[1], [0], [0], [1], [0, 0, 1, 1], [], []>} : vector<288x32xbf16>, vector<32x32xbf16>, vector<288x32xf32> -> vector<288x32xf32>
    %58 = arith.addf %50, %57 : vector<288x32xf32>
    %c37_i32 = arith.constant 37 : i32
    %59 = arith.addi %1, %c37_i32 : i32
    %60 = arith.index_cast %59 : i32 to index
    %c0_28 = arith.constant 0 : index
    %61 = vector.load %arg1[%60, %c0_28] : memref<328x32xf32, #tpu.memory_space<vmem>>, vector<288x32xf32>
    %62 = arith.truncf %61 : vector<288x32xf32> to vector<288x32xbf16>
    %c7 = arith.constant 7 : index
    %c0_29 = arith.constant 0 : index
    %c0_30 = arith.constant 0 : index
    %63 = vector.load %arg2[%c7, %c0_29, %c0_30] : memref<9x32x32xbf16, #tpu.memory_space<vmem>>, vector<1x32x32xbf16>
    %64 = vector.shape_cast %63 : vector<1x32x32xbf16> to vector<32x32xbf16>
    %cst_31 = arith.constant dense<0.000000e+00> : vector<288x32xf32>
    %65 = tpu.matmul %62, %64, %cst_31 {dimension_numbers = #tpu.dot_dimension_numbers<[1], [0], [0], [1], [0, 0, 1, 1], [], []>} : vector<288x32xbf16>, vector<32x32xbf16>, vector<288x32xf32> -> vector<288x32xf32>
    %66 = arith.addf %58, %65 : vector<288x32xf32>
    %c38_i32 = arith.constant 38 : i32
    %67 = arith.addi %1, %c38_i32 : i32
    %68 = arith.index_cast %67 : i32 to index
    %c0_32 = arith.constant 0 : index
    %69 = vector.load %arg1[%68, %c0_32] : memref<328x32xf32, #tpu.memory_space<vmem>>, vector<288x32xf32>
    %70 = arith.truncf %69 : vector<288x32xf32> to vector<288x32xbf16>
    %c8 = arith.constant 8 : index
    %c0_33 = arith.constant 0 : index
    %c0_34 = arith.constant 0 : index
    %71 = vector.load %arg2[%c8, %c0_33, %c0_34] : memref<9x32x32xbf16, #tpu.memory_space<vmem>>, vector<1x32x32xbf16>
    %72 = vector.shape_cast %71 : vector<1x32x32xbf16> to vector<32x32xbf16>
    %cst_35 = arith.constant dense<0.000000e+00> : vector<288x32xf32>
    %73 = tpu.matmul %70, %72, %cst_35 {dimension_numbers = #tpu.dot_dimension_numbers<[1], [0], [0], [1], [0, 0, 1, 1], [], []>} : vector<288x32xbf16>, vector<32x32xbf16>, vector<288x32xf32> -> vector<288x32xf32>
    %74 = arith.addf %66, %73 : vector<288x32xf32>
    %c0_36 = arith.constant 0 : index
    %c0_37 = arith.constant 0 : index
    %75 = vector.load %arg3[%c0_36, %c0_37] : memref<1x32xf32, #tpu.memory_space<vmem>>, vector<1x32xf32>
    %76 = vector.broadcast %75 : vector<1x32xf32> to vector<288x32xf32>
    %77 = arith.addf %74, %76 : vector<288x32xf32>
    %cst_38 = arith.constant 0.000000e+00 : f32
    %78 = vector.broadcast %cst_38 : f32 to vector<288x32xf32>
    %79 = arith.maximumf %77, %78 : vector<288x32xf32>
    %c0_39 = arith.constant 0 : index
    %c0_40 = arith.constant 0 : index
    %80 = vector.load %arg4[%c0_39, %c0_40] : memref<288x32xf32, #tpu.memory_space<vmem>>, vector<288x32xf32>
    tpu.vector_store %arg4[%c0_39, %c0_40], %79 {strides = array<i32>} : memref<288x32xf32, #tpu.memory_space<vmem>>, vector<288x32xf32>,
    return
  }
  func.func @transform_0(%arg0: i32) -> (i32, i32) {
    %c0_i32 = arith.constant 0 : i32
    %c0_i32_0 = arith.constant 0 : i32
    %c0_i32_1 = arith.constant 0 : i32
    return %c0_i32, %c0_i32_0 : i32, i32
  }
  func.func @transform_1(%arg0: i32) -> (i32, i32, i32) {
    %c0_i32 = arith.constant 0 : i32
    %c0_i32_0 = arith.constant 0 : i32
    %c0_i32_1 = arith.constant 0 : i32
    %c0_i32_2 = arith.constant 0 : i32
    return %c0_i32, %c0_i32_0, %c0_i32_1 : i32, i32, i32
  }
  func.func @transform_2(%arg0: i32) -> (i32, i32) {
    %c0_i32 = arith.constant 0 : i32
    %c0_i32_0 = arith.constant 0 : i32
    %c0_i32_1 = arith.constant 0 : i32
    return %c0_i32, %c0_i32_0 : i32, i32
  }
  func.func @transform_3(%arg0: i32) -> (i32, i32) {
    %c0_i32 = arith.constant 0 : i32
    %c0_i32_0 = arith.constant 0 : i32
    return %arg0, %c0_i32 : i32, i32
  }
}

module attributes {stable_mosaic.version = 11 : i64} {
  func.func @_ssd_head_kernel(%arg0: i32, %arg1: memref<32x128xf32, #tpu.memory_space<vmem>>, %arg2: memref<16x32xbf16, #tpu.memory_space<vmem>>, %arg3: memref<16x1xf32, #tpu.memory_space<vmem>>, %arg4: memref<4x128xf32, #tpu.memory_space<vmem>>, %arg5: memref<8x128xf32, #tpu.memory_space<vmem>>) attributes {dimension_semantics = [#tpu.dimension_semantics<parallel>], iteration_bounds = array<i64: 2>, scalar_prefetch = 0 : i64, scratch_operands = 0 : i64, tpu.core_type = #tpu.core_type<tc>, window_params = [{transform_indices = @transform_0, window_bounds = array<i64: 32, 128>}, {pipeline_mode = #tpu.pipeline_mode<synchronous>, transform_indices = @transform_1, window_bounds = array<i64: 16, 32>}, {pipeline_mode = #tpu.pipeline_mode<synchronous>, transform_indices = @transform_2, window_bounds = array<i64: 16, 1>}, {transform_indices = @transform_3, window_bounds = array<i64: 4, 128>}, {transform_indices = @transform_4, window_bounds = array<i64: 8, 128>}]} {
    %c0 = arith.constant 0 : index
    %c0_0 = arith.constant 0 : index
    %0 = vector.load %arg1[%c0, %c0_0] : memref<32x128xf32, #tpu.memory_space<vmem>>, vector<32x128xf32>
    %1 = arith.truncf %0 : vector<32x128xf32> to vector<32x128xbf16>
    %c0_1 = arith.constant 0 : index
    %c0_2 = arith.constant 0 : index
    %2 = vector.load %arg2[%c0_1, %c0_2] : memref<16x32xbf16, #tpu.memory_space<vmem>>, vector<16x32xbf16>
    %cst = arith.constant dense<0.000000e+00> : vector<16x128xf32>
    %3 = tpu.matmul %2, %1, %cst {dimension_numbers = #tpu.dot_dimension_numbers<[1], [0], [0], [1], [0, 0, 1, 1], [], []>} : vector<16x32xbf16>, vector<32x128xbf16>, vector<16x128xf32> -> vector<16x128xf32>
    %c0_3 = arith.constant 0 : index
    %c0_4 = arith.constant 0 : index
    %4 = vector.load %arg3[%c0_3, %c0_4] : memref<16x1xf32, #tpu.memory_space<vmem>>, vector<16x1xf32>
    %5 = vector.broadcast %4 : vector<16x1xf32> to vector<16x128xf32>
    %6 = arith.addf %3, %5 : vector<16x128xf32>
    %7 = vector.extract_strided_slice %6 {offsets = [0, 0], sizes = [1, 128], strides = [1, 1]} : vector<16x128xf32> to vector<1x128xf32>
    %8 = vector.extract_strided_slice %6 {offsets = [1, 0], sizes = [1, 128], strides = [1, 1]} : vector<16x128xf32> to vector<1x128xf32>
    %9 = vector.extract_strided_slice %6 {offsets = [2, 0], sizes = [1, 128], strides = [1, 1]} : vector<16x128xf32> to vector<1x128xf32>
    %10 = vector.extract_strided_slice %6 {offsets = [3, 0], sizes = [1, 128], strides = [1, 1]} : vector<16x128xf32> to vector<1x128xf32>
    %11 = vector.extract_strided_slice %6 {offsets = [4, 0], sizes = [5, 128], strides = [1, 1]} : vector<16x128xf32> to vector<5x128xf32>
    %cst_5 = arith.constant dense<0xFF800000> : vector<128xf32>
    %12 = vector.multi_reduction <maximumf>, %11, %cst_5 [0] : vector<5x128xf32> to vector<128xf32>
    %13 = vector.shape_cast %12 : vector<128xf32> to vector<1x128xf32>
    %14 = vector.broadcast %13 : vector<1x128xf32> to vector<5x128xf32>
    %15 = arith.subf %11, %14 : vector<5x128xf32>
    %16 = math.exp %15 : vector<5x128xf32>
    %cst_6 = arith.constant dense<0.000000e+00> : vector<128xf32>
    %17 = vector.multi_reduction <add>, %16, %cst_6 [0] : vector<5x128xf32> to vector<128xf32>
    %18 = vector.shape_cast %17 : vector<128xf32> to vector<1x128xf32>
    %19 = tpu.reciprocal %18 {approx = true} : vector<1x128xf32> -> vector<1x128xf32>
    %20 = vector.broadcast %19 : vector<1x128xf32> to vector<5x128xf32>
    %21 = arith.mulf %16, %20 : vector<5x128xf32>
    %22 = vector.extract_strided_slice %21 {offsets = [1, 0], sizes = [4, 128], strides = [1, 1]} : vector<5x128xf32> to vector<4x128xf32>
    %cst_7 = arith.constant dense<0xFF800000> : vector<128xf32>
    %23 = vector.multi_reduction <maximumf>, %22, %cst_7 [0] : vector<4x128xf32> to vector<128xf32>
    %24 = vector.shape_cast %23 : vector<128xf32> to vector<1x128xf32>
    %25 = tpu.iota {dimensions = array<i32: 0>} : vector<4x128xi32>
    %26 = vector.broadcast %24 : vector<1x128xf32> to vector<4x128xf32>
    %27 = arith.cmpf oge, %22, %26 : vector<4x128xf32>
    %c4_i32 = arith.constant 4 : i32
    %28 = vector.broadcast %c4_i32 : i32 to vector<4x128xi32>
    %29 = arith.select %27, %25, %28 : vector<4x128xi1>, vector<4x128xi32>
    %cst_8 = arith.constant dense<2147483647> : vector<128xi32>
    %30 = vector.multi_reduction <minsi>, %29, %cst_8 [0] : vector<4x128xi32> to vector<128xi32>
    %31 = vector.shape_cast %30 : vector<128xi32> to vector<1x128xi32>
    %c1_i32 = arith.constant 1 : i32
    %32 = vector.broadcast %c1_i32 : i32 to vector<1x128xi32>
    %33 = arith.addi %31, %32 : vector<1x128xi32>
    %34 = arith.sitofp %33 : vector<1x128xi32> to vector<1x128xf32>
    %c0_9 = arith.constant 0 : index
    %c0_10 = arith.constant 0 : index
    %35 = vector.load %arg4[%c0_9, %c0_10] : memref<4x128xf32, #tpu.memory_space<vmem>>, vector<4x128xf32>
    %36 = vector.extract_strided_slice %35 {offsets = [0, 0], sizes = [1, 128], strides = [1, 1]} : vector<4x128xf32> to vector<1x128xf32>
    %37 = vector.extract_strided_slice %35 {offsets = [1, 0], sizes = [1, 128], strides = [1, 1]} : vector<4x128xf32> to vector<1x128xf32>
    %38 = vector.extract_strided_slice %35 {offsets = [2, 0], sizes = [1, 128], strides = [1, 1]} : vector<4x128xf32> to vector<1x128xf32>
    %39 = vector.extract_strided_slice %35 {offsets = [3, 0], sizes = [1, 128], strides = [1, 1]} : vector<4x128xf32> to vector<1x128xf32>
    %cst_11 = arith.constant 1.000000e-01 : f32
    %40 = vector.broadcast %cst_11 : f32 to vector<1x128xf32>
    %41 = arith.mulf %7, %40 : vector<1x128xf32>
    %42 = arith.mulf %41, %38 : vector<1x128xf32>
    %43 = arith.addf %36, %42 : vector<1x128xf32>
    %cst_12 = arith.constant 1.000000e-01 : f32
    %44 = vector.broadcast %cst_12 : f32 to vector<1x128xf32>
    %45 = arith.mulf %8, %44 : vector<1x128xf32>
    %46 = arith.mulf %45, %39 : vector<1x128xf32>
    %47 = arith.addf %37, %46 : vector<1x128xf32>
    %cst_13 = arith.constant 2.000000e-01 : f32
    %48 = vector.broadcast %cst_13 : f32 to vector<1x128xf32>
    %49 = arith.mulf %9, %48 : vector<1x128xf32>
    %cst_14 = arith.constant 4.13516665 : f32
    %50 = vector.broadcast %cst_14 : f32 to vector<1x128xf32>
    %51 = arith.minimumf %49, %50 : vector<1x128xf32>
    %52 = math.exp %51 : vector<1x128xf32>
    %53 = arith.mulf %38, %52 : vector<1x128xf32>
    %cst_15 = arith.constant 2.000000e-01 : f32
    %54 = vector.broadcast %cst_15 : f32 to vector<1x128xf32>
    %55 = arith.mulf %10, %54 : vector<1x128xf32>
    %cst_16 = arith.constant 4.13516665 : f32
    %56 = vector.broadcast %cst_16 : f32 to vector<1x128xf32>
    %57 = arith.minimumf %55, %56 : vector<1x128xf32>
    %58 = math.exp %57 : vector<1x128xf32>
    %59 = arith.mulf %39, %58 : vector<1x128xf32>
    %cst_17 = arith.constant 5.000000e-01 : f32
    %60 = vector.broadcast %cst_17 : f32 to vector<1x128xf32>
    %61 = arith.mulf %60, %53 : vector<1x128xf32>
    %62 = arith.subf %43, %61 : vector<1x128xf32>
    %cst_18 = arith.constant 0.000000e+00 : f32
    %cst_19 = arith.constant 1.600000e+01 : f32
    %63 = vector.broadcast %cst_18 : f32 to vector<1x128xf32>
    %64 = arith.maximumf %63, %62 : vector<1x128xf32>
    %65 = vector.broadcast %cst_19 : f32 to vector<1x128xf32>
    %66 = arith.minimumf %65, %64 : vector<1x128xf32>
    %cst_20 = arith.constant 5.000000e-01 : f32
    %67 = vector.broadcast %cst_20 : f32 to vector<1x128xf32>
    %68 = arith.mulf %67, %59 : vector<1x128xf32>
    %69 = arith.subf %47, %68 : vector<1x128xf32>
    %cst_21 = arith.constant 0.000000e+00 : f32
    %cst_22 = arith.constant 1.600000e+01 : f32
    %70 = vector.broadcast %cst_21 : f32 to vector<1x128xf32>
    %71 = arith.maximumf %70, %69 : vector<1x128xf32>
    %72 = vector.broadcast %cst_22 : f32 to vector<1x128xf32>
    %73 = arith.minimumf %72, %71 : vector<1x128xf32>
    %cst_23 = arith.constant 5.000000e-01 : f32
    %74 = vector.broadcast %cst_23 : f32 to vector<1x128xf32>
    %75 = arith.mulf %74, %53 : vector<1x128xf32>
    %76 = arith.addf %43, %75 : vector<1x128xf32>
    %cst_24 = arith.constant 0.000000e+00 : f32
    %cst_25 = arith.constant 1.600000e+01 : f32
    %77 = vector.broadcast %cst_24 : f32 to vector<1x128xf32>
    %78 = arith.maximumf %77, %76 : vector<1x128xf32>
    %79 = vector.broadcast %cst_25 : f32 to vector<1x128xf32>
    %80 = arith.minimumf %79, %78 : vector<1x128xf32>
    %cst_26 = arith.constant 5.000000e-01 : f32
    %81 = vector.broadcast %cst_26 : f32 to vector<1x128xf32>
    %82 = arith.mulf %81, %59 : vector<1x128xf32>
    %83 = arith.addf %47, %82 : vector<1x128xf32>
    %cst_27 = arith.constant 0.000000e+00 : f32
    %cst_28 = arith.constant 1.600000e+01 : f32
    %84 = vector.broadcast %cst_27 : f32 to vector<1x128xf32>
    %85 = arith.maximumf %84, %83 : vector<1x128xf32>
    %86 = vector.broadcast %cst_28 : f32 to vector<1x128xf32>
    %87 = arith.minimumf %86, %85 : vector<1x128xf32>
    %cst_29 = arith.constant 0.000000e+00 : f32
    %88 = vector.broadcast %cst_29 : f32 to vector<1x128xf32>
    %89 = tpu.concatenate %66, %73, %80, %87, %24, %34, %88, %88 in 0 : vector<1x128xf32>, vector<1x128xf32>, vector<1x128xf32>, vector<1x128xf32>, vector<1x128xf32>, vector<1x128xf32>, vector<1x128xf32>, vector<1x128xf32> -> vector<8x128xf32>
    %c0_30 = arith.constant 0 : index
    %c0_31 = arith.constant 0 : index
    %90 = vector.load %arg5[%c0_30, %c0_31] : memref<8x128xf32, #tpu.memory_space<vmem>>, vector<8x128xf32>
    tpu.vector_store %arg5[%c0_30, %c0_31], %89 {strides = array<i32>} : memref<8x128xf32, #tpu.memory_space<vmem>>, vector<8x128xf32>,
    return
  }
  func.func @transform_0(%arg0: i32) -> (i32, i32) {
    %c0_i32 = arith.constant 0 : i32
    %c0_i32_0 = arith.constant 0 : i32
    return %c0_i32, %arg0 : i32, i32
  }
  func.func @transform_1(%arg0: i32) -> (i32, i32) {
    %c0_i32 = arith.constant 0 : i32
    %c0_i32_0 = arith.constant 0 : i32
    %c0_i32_1 = arith.constant 0 : i32
    return %c0_i32, %c0_i32_0 : i32, i32
  }
  func.func @transform_2(%arg0: i32) -> (i32, i32) {
    %c0_i32 = arith.constant 0 : i32
    %c0_i32_0 = arith.constant 0 : i32
    %c0_i32_1 = arith.constant 0 : i32
    return %c0_i32, %c0_i32_0 : i32, i32
  }
  func.func @transform_3(%arg0: i32) -> (i32, i32) {
    %c0_i32 = arith.constant 0 : i32
    %c0_i32_0 = arith.constant 0 : i32
    return %c0_i32, %arg0 : i32, i32
  }
  func.func @transform_4(%arg0: i32) -> (i32, i32) {
    %c0_i32 = arith.constant 0 : i32
    %c0_i32_0 = arith.constant 0 : i32
    return %c0_i32, %arg0 : i32, i32
  }
}

</mosaic_0001>

<llo_original>
// kernel: ssd_wrapper_forward.3
$region0: #{ssd_wrapper_forward.3}
  #allocation0 [shape = 'u32[]', space=smem, size = 0x4, offset = 0x4, fixed_abs, tag = 'smem constant byte address 0x4 - core index']
  #allocation1 [shape = 'u32[72,128]{1,0:T(1,128)}', space=vmem, size = 0x9000, scoped, tag = 'internal scratch']
  %s0 = inlined_call_operand.vmem [shape: f32[328,3], index: 0, kind: input, shape index: {}]
  %s1 = inlined_call_operand.vmem [shape: bf16[9,3,32], index: 1, kind: input, shape index: {}]
  %s2 = inlined_call_operand.vmem [shape: f32[1,32], index: 2, kind: input, shape index: {}]
  %s3 = inlined_call_operand.vmem [shape: f32[288,32], index: 3, kind: output, shape index: {}]
  %s4 = sld [smem:[#allocation0]]
  $region22: #{ssd_wrapper_forward.3} parent=0
    _
  %s6 = ssub.s32 1, %s4
  %s7 = scalar_select 0, %s6, %s4
  // Predicated region
  $region2: #{ssd_wrapper_forward.3} parent=0 // pred_check
    _
  $region3: #{ssd_wrapper_forward.3} parent=0 // pred_check_branch
    %9 = sbr.rel (0) target = $region5
  $region4: #{ssd_wrapper_forward.3} parent=0 // pred_region
    _
  $region5: #{ssd_wrapper_forward.3} parent=0 // pred_fallthru
    _
  // Predicated region
  $region6: #{ssd_wrapper_forward.3} parent=0 // pred_check
    _
  $region7: #{ssd_wrapper_forward.3} parent=0 // pred_check_branch
    %11 = sbr.rel (0) target = $region9
  $region8: #{ssd_wrapper_forward.3} parent=0 // pred_region
    _
  $region9: #{ssd_wrapper_forward.3} parent=0 // pred_fallthru
    _
  // Predicated region
  $region10: #{ssd_wrapper_forward.3} parent=0 // pred_check
    _
  $region11: #{ssd_wrapper_forward.3} parent=0 // pred_check_branch
    %13 = sbr.rel (0) target = $region13
  $region12: #{ssd_wrapper_forward.3} parent=0 // pred_region
    _
  $region13: #{ssd_wrapper_forward.3} parent=0 // pred_fallthru
    _
  %s15 = smul.u32 0, 288
  %s16 = scalar_lea.vmem %s0, %s15
  %v17 = vld [vmem:[%s16] sm:$0xff]
  %v18 = vld [vmem:[%s16 + $0x8] sm:$0xff]
  %v19 = vld [vmem:[%s16 + $0x10] sm:$0xff]
  %v20 = vld [vmem:[%s16 + $0x18] sm:$0xff]
  %v21 = vld [vmem:[%s16 + $0x20] sm:$0xff]
  %v22 = vld [vmem:[%s16 + $0x28] sm:$0xff]
  %v23 = vld [vmem:[%s16 + $0x30] sm:$0xff]
  %v24 = vld [vmem:[%s16 + $0x38] sm:$0xff]
  %v25 = vld [vmem:[%s16 + $0x40] sm:$0xff]
  %v26 = vld [vmem:[%s16 + $0x48] sm:$0xff]
  %v27 = vld [vmem:[%s16 + $0x50] sm:$0xff]
  %v28 = vld [vmem:[%s16 + $0x58] sm:$0xff]
  %v29 = vld [vmem:[%s16 + $0x60] sm:$0xff]
  %v30 = vld [vmem:[%s16 + $0x68] sm:$0xff]
  %v31 = vld [vmem:[%s16 + $0x70] sm:$0xff]
  %v32 = vld [vmem:[%s16 + $0x78] sm:$0xff]
  %v33 = vld [vmem:[%s16 + $0x80] sm:$0xff]
  %v34 = vld [vmem:[%s16 + $0x88] sm:$0xff]
  %v35 = vld [vmem:[%s16 + $0x90] sm:$0xff]
  %v36 = vld [vmem:[%s16 + $0x98] sm:$0xff]
  %v37 = vld [vmem:[%s16 + $0xa0] sm:$0xff]
  %v38 = vld [vmem:[%s16 + $0xa8] sm:$0xff]
  %v39 = vld [vmem:[%s16 + $0xb0] sm:$0xff]
  %v40 = vld [vmem:[%s16 + $0xb8] sm:$0xff]
  %v41 = vld [vmem:[%s16 + $0xc0] sm:$0xff]
  %v42 = vld [vmem:[%s16 + $0xc8] sm:$0xff]
  %v43 = vld [vmem:[%s16 + $0xd0] sm:$0xff]
  %v44 = vld [vmem:[%s16 + $0xd8] sm:$0xff]
  %v45 = vld [vmem:[%s16 + $0xe0] sm:$0xff]
  %v46 = vld [vmem:[%s16 + $0xe8] sm:$0xff]
  %v47 = vld [vmem:[%s16 + $0xf0] sm:$0xff]
  %v48 = vld [vmem:[%s16 + $0xf8] sm:$0xff]
  %v49 = vld [vmem:[%s16 + $0x100] sm:$0xff]
  %v50 = vld [vmem:[%s16 + $0x108] sm:$0xff]
  %v51 = vld [vmem:[%s16 + $0x110] sm:$0xff]
  %v52 = vld [vmem:[%s16 + $0x118] sm:$0xff]
  %v53 = vpack.c.bf16 %v18, %v17
  %v54 = vpack.c.bf16 %v20, %v19
  %v55 = vpack.c.bf16 %v22, %v21
  %v56 = vpack.c.bf16 %v24, %v23
  %v57 = vpack.c.bf16 %v26, %v25
  %v58 = vpack.c.bf16 %v28, %v27
  %v59 = vpack.c.bf16 %v30, %v29
  %v60 = vpack.c.bf16 %v32, %v31
  %v61 = vpack.c.bf16 %v34, %v33
  %v62 = vpack.c.bf16 %v36, %v35
  %v63 = vpack.c.bf16 %v38, %v37
  %v64 = vpack.c.bf16 %v40, %v39
  %v65 = vpack.c.bf16 %v42, %v41
  %v66 = vpack.c.bf16 %v44, %v43
  %v67 = vpack.c.bf16 %v46, %v45
  %v68 = vpack.c.bf16 %v48, %v47
  %v69 = vpack.c.bf16 %v50, %v49
  %v70 = vpack.c.bf16 %v52, %v51
  %v71 = vld [vmem:[%s1] sm:$0x3]
  %s72 = sadd.s32 %s15, 1
  %s73 = scalar_lea.vmem %s0, %s72
  %v74 = vld [vmem:[%s73] sm:$0xff]
  %v75 = vld [vmem:[%s73 + $0x8] sm:$0xff]
  %v76 = vld [vmem:[%s73 + $0x10] sm:$0xff]
  %v77 = vld [vmem:[%s73 + $0x18] sm:$0xff]
  %v78 = vld [vmem:[%s73 + $0x20] sm:$0xff]
  %v79 = vld [vmem:[%s73 + $0x28] sm:$0xff]
  %v80 = vld [vmem:[%s73 + $0x30] sm:$0xff]
  %v81 = vld [vmem:[%s73 + $0x38] sm:$0xff]
  %v82 = vld [vmem:[%s73 + $0x40] sm:$0xff]
  %v83 = vld [vmem:[%s73 + $0x48] sm:$0xff]
  %v84 = vld [vmem:[%s73 + $0x50] sm:$0xff]
  %v85 = vld [vmem:[%s73 + $0x58] sm:$0xff]
  %v86 = vld [vmem:[%s73 + $0x60] sm:$0xff]
  %v87 = vld [vmem:[%s73 + $0x68] sm:$0xff]
  %v88 = vld [vmem:[%s73 + $0x70] sm:$0xff]
  %v89 = vld [vmem:[%s73 + $0x78] sm:$0xff]
  %v90 = vld [vmem:[%s73 + $0x80] sm:$0xff]
  %v91 = vld [vmem:[%s73 + $0x88] sm:$0xff]
  %v92 = vld [vmem:[%s73 + $0x90] sm:$0xff]
  %v93 = vld [vmem:[%s73 + $0x98] sm:$0xff]
  %v94 = vld [vmem:[%s73 + $0xa0] sm:$0xff]
  %v95 = vld [vmem:[%s73 + $0xa8] sm:$0xff]
  %v96 = vld [vmem:[%s73 + $0xb0] sm:$0xff]
  %v97 = vld [vmem:[%s73 + $0xb8] sm:$0xff]
  %v98 = vld [vmem:[%s73 + $0xc0] sm:$0xff]
  %v99 = vld [vmem:[%s73 + $0xc8] sm:$0xff]
  %v100 = vld [vmem:[%s73 + $0xd0] sm:$0xff]
  %v101 = vld [vmem:[%s73 + $0xd8] sm:$0xff]
  %v102 = vld [vmem:[%s73 + $0xe0] sm:$0xff]
  %v103 = vld [vmem:[%s73 + $0xe8] sm:$0xff]
  %v104 = vld [vmem:[%s73 + $0xf0] sm:$0xff]
  %v105 = vld [vmem:[%s73 + $0xf8] sm:$0xff]
  %v106 = vld [vmem:[%s73 + $0x100] sm:$0xff]
  %v107 = vld [vmem:[%s73 + $0x108] sm:$0xff]
  %v108 = vld [vmem:[%s73 + $0x110] sm:$0xff]
  %v109 = vld [vmem:[%s73 + $0x118] sm:$0xff]
  %v110 = vpack.c.bf16 %v75, %v74
  %v111 = vpack.c.bf16 %v77, %v76
  %v112 = vpack.c.bf16 %v79, %v78
  %v113 = vpack.c.bf16 %v81, %v80
  %v114 = vpack.c.bf16 %v83, %v82
  %v115 = vpack.c.bf16 %v85, %v84
  %v116 = vpack.c.bf16 %v87, %v86
  %v117 = vpack.c.bf16 %v89, %v88
  %v118 = vpack.c.bf16 %v91, %v90
  %v119 = vpack.c.bf16 %v93, %v92
  %v120 = vpack.c.bf16 %v95, %v94
  %v121 = vpack.c.bf16 %v97, %v96
  %v122 = vpack.c.bf16 %v99, %v98
  %v123 = vpack.c.bf16 %v101, %v100
  %v124 = vpack.c.bf16 %v103, %v102
  %v125 = vpack.c.bf16 %v105, %v104
  %v126 = vpack.c.bf16 %v107, %v106
  %v127 = vpack.c.bf16 %v109, %v108
  %s128 = scalar_lea.vmem %s1, 2
  %v129 = vld [vmem:[%s128] sm:$0x3]
  %vm130 = vcmask 23552
  %v132 = vsel %vm130, %v110, 0
  %v135 = vsel %vm130, %v111, 0
  %v138 = vsel %vm130, %v112, 0
  %v141 = vsel %vm130, %v113, 0
  %v144 = vsel %vm130, %v114, 0
  %v147 = vsel %vm130, %v115, 0
  %v150 = vsel %vm130, %v116, 0
  %v153 = vsel %vm130, %v117, 0
  %v156 = vsel %vm130, %v118, 0
  %v159 = vsel %vm130, %v119, 0
  %v162 = vsel %vm130, %v120, 0
  %v165 = vsel %vm130, %v121, 0
  %v168 = vsel %vm130, %v122, 0
  %v171 = vsel %vm130, %v123, 0
  %v174 = vsel %vm130, %v124, 0
  %v177 = vsel %vm130, %v125, 0
  %v180 = vsel %vm130, %v126, 0
  %v183 = vsel %vm130, %v127, 0
  %vm185 = vcmask 1040384
  %vm186 = vcmask 1041408
  %v187 = vsel %vm185, 4294967295, 65535
  %v188 = vsel %vm186, %v187, 0
  %v190 = vand.u32 %v129, %v188
  %192 = vmatpush.bf16.msra.mxu0 0
  %193 = vmatpush.bf16.msra.mxu0 0
  %194 = vmatpush.bf16.msra.mxu0 0
  %195 = vmatpush.bf16.msra.mxu0 0
  %196 = vmatpush.bf16.msra.mxu0 0
  %197 = vmatpush.bf16.msra.mxu0 0
  %198 = vmatpush.bf16.msra.mxu0 0
  %199 = vmatpush.bf16.msra.mxu0 %v190
  %200 = vmatmul.bf16.gmra.mxu0 %v132
  %v201 = vpop.f32.mrf.mxu0
  %v202 = vadd.f32 0.0, %v201
  %v203 = vpop.f32.mrf.mxu0
  %v204 = vadd.f32 0.0, %v203
  %205 = vmatmul.bf16.gmra.mxu0 %v135
  %v206 = vpop.f32.mrf.mxu0
  %v207 = vadd.f32 0.0, %v206
  %v208 = vpop.f32.mrf.mxu0
  %v209 = vadd.f32 0.0, %v208
  %210 = vmatmul.bf16.gmra.mxu0 %v138
  %v211 = vpop.f32.mrf.mxu0
  %v212 = vadd.f32 0.0, %v211
  %v213 = vpop.f32.mrf.mxu0
  %v214 = vadd.f32 0.0, %v213
  %215 = vmatmul.bf16.gmra.mxu0 %v141
  %v216 = vpop.f32.mrf.mxu0
  %v217 = vadd.f32 0.0, %v216
  %v218 = vpop.f32.mrf.mxu0
  %v219 = vadd.f32 0.0, %v218
  %220 = vmatmul.bf16.gmra.mxu0 %v144
  %v221 = vpop.f32.mrf.mxu0
  %v222 = vadd.f32 0.0, %v221
  %v223 = vpop.f32.mrf.mxu0
  %v224 = vadd.f32 0.0, %v223
  %225 = vmatmul.bf16.gmra.mxu0 %v147
  %v226 = vpop.f32.mrf.mxu0
  %v227 = vadd.f32 0.0, %v226
  %v228 = vpop.f32.mrf.mxu0
  %v229 = vadd.f32 0.0, %v228
  %230 = vmatmul.bf16.gmra.mxu0 %v150
  %v231 = vpop.f32.mrf.mxu0
  %v232 = vadd.f32 0.0, %v231
  %v233 = vpop.f32.mrf.mxu0
  %v234 = vadd.f32 0.0, %v233
  %235 = vmatmul.bf16.gmra.mxu0 %v153
  %v236 = vpop.f32.mrf.mxu0
  %v237 = vadd.f32 0.0, %v236
  %v238 = vpop.f32.mrf.mxu0
  %v239 = vadd.f32 0.0, %v238
  %240 = vmatmul.bf16.gmra.mxu0 %v156
  %v241 = vpop.f32.mrf.mxu0
  %v242 = vadd.f32 0.0, %v241
  %v243 = vpop.f32.mrf.mxu0
  %v244 = vadd.f32 0.0, %v243
  %245 = vmatmul.bf16.gmra.mxu0 %v159
  %v246 = vpop.f32.mrf.mxu0
  %v247 = vadd.f32 0.0, %v246
  %v248 = vpop.f32.mrf.mxu0
  %v249 = vadd.f32 0.0, %v248
  %250 = vmatmul.bf16.gmra.mxu0 %v162
  %v251 = vpop.f32.mrf.mxu0
  %v252 = vadd.f32 0.0, %v251
  %v253 = vpop.f32.mrf.mxu0
  %v254 = vadd.f32 0.0, %v253
  %255 = vmatmul.bf16.gmra.mxu0 %v165
  %v256 = vpop.f32.mrf.mxu0
  %v257 = vadd.f32 0.0, %v256
  %v258 = vpop.f32.mrf.mxu0
  %v259 = vadd.f32 0.0, %v258
  %260 = vmatmul.bf16.gmra.mxu0 %v168
  %v261 = vpop.f32.mrf.mxu0
  %v262 = vadd.f32 0.0, %v261
  %v263 = vpop.f32.mrf.mxu0
  %v264 = vadd.f32 0.0, %v263
  %265 = vmatmul.bf16.gmra.mxu0 %v171
  %v266 = vpop.f32.mrf.mxu0
  %v267 = vadd.f32 0.0, %v266
  %v268 = vpop.f32.mrf.mxu0
  %v269 = vadd.f32 0.0, %v268
  %270 = vmatmul.bf16.gmra.mxu0 %v174
  %v271 = vpop.f32.mrf.mxu0
  %v272 = vadd.f32 0.0, %v271
  %v273 = vpop.f32.mrf.mxu0
  %v274 = vadd.f32 0.0, %v273
  %275 = vmatmul.bf16.gmra.mxu0 %v177
  %v276 = vpop.f32.mrf.mxu0
  %v277 = vadd.f32 0.0, %v276
  %v278 = vpop.f32.mrf.mxu0
  %v279 = vadd.f32 0.0, %v278
  %280 = vmatmul.bf16.gmra.mxu0 %v180
  %v281 = vpop.f32.mrf.mxu0
  %v282 = vadd.f32 0.0, %v281
  %v283 = vpop.f32.mrf.mxu0
  %v284 = vadd.f32 0.0, %v283
  %285 = vmatmul.bf16.gmra.mxu0 %v183
  %v286 = vpop.f32.mrf.mxu0
  %v287 = vadd.f32 0.0, %v286
  %v288 = vpop.f32.mrf.mxu0
  %v289 = vadd.f32 0.0, %v288
  %290 = vdwg.mxu0
  %v292 = vsel %vm130, %v53, 0
  %v295 = vsel %vm130, %v54, 0
  %v298 = vsel %vm130, %v55, 0
  %v301 = vsel %vm130, %v56, 0
  %v304 = vsel %vm130, %v57, 0
  %v307 = vsel %vm130, %v58, 0
  %v310 = vsel %vm130, %v59, 0
  %v313 = vsel %vm130, %v60, 0
  %v316 = vsel %vm130, %v61, 0
  %v319 = vsel %vm130, %v62, 0
  %v322 = vsel %vm130, %v63, 0
  %v325 = vsel %vm130, %v64, 0
  %v328 = vsel %vm130, %v65, 0
  %v331 = vsel %vm130, %v66, 0
  %v334 = vsel %vm130, %v67, 0
  %v337 = vsel %vm130, %v68, 0
  %v340 = vsel %vm130, %v69, 0
  %v343 = vsel %vm130, %v70, 0
  %v346 = vand.u32 %v71, %v188
  %348 = vmatpush.bf16.msra.mxu0 0
  %349 = vmatpush.bf16.msra.mxu0 0
  %350 = vmatpush.bf16.msra.mxu0 0
  %351 = vmatpush.bf16.msra.mxu0 0
  %352 = vmatpush.bf16.msra.mxu0 0
  %353 = vmatpush.bf16.msra.mxu0 0
  %354 = vmatpush.bf16.msra.mxu0 0
  %355 = vmatpush.bf16.msra.mxu0 %v346
  %356 = vmatmul.bf16.gmra.mxu0 %v292
  %v357 = vpop.f32.mrf.mxu0
  %v358 = vadd.f32 %v202, %v357
  %v359 = vpop.f32.mrf.mxu0
  %v360 = vadd.f32 %v204, %v359
  %361 = vmatmul.bf16.gmra.mxu0 %v295
  %v362 = vpop.f32.mrf.mxu0
  %v363 = vadd.f32 %v207, %v362
  %v364 = vpop.f32.mrf.mxu0
  %v365 = vadd.f32 %v209, %v364
  %366 = vmatmul.bf16.gmra.mxu0 %v298
  %v367 = vpop.f32.mrf.mxu0
  %v368 = vadd.f32 %v212, %v367
  %v369 = vpop.f32.mrf.mxu0
  %v370 = vadd.f32 %v214, %v369
  %371 = vmatmul.bf16.gmra.mxu0 %v301
  %v372 = vpop.f32.mrf.mxu0
  %v373 = vadd.f32 %v217, %v372
  %v374 = vpop.f32.mrf.mxu0
  %v375 = vadd.f32 %v219, %v374
  %376 = vmatmul.bf16.gmra.mxu0 %v304
  %v377 = vpop.f32.mrf.mxu0
  %v378 = vadd.f32 %v222, %v377
  %v379 = vpop.f32.mrf.mxu0
  %v380 = vadd.f32 %v224, %v379
  %381 = vmatmul.bf16.gmra.mxu0 %v307
  %v382 = vpop.f32.mrf.mxu0
  %v383 = vadd.f32 %v227, %v382
  %v384 = vpop.f32.mrf.mxu0
  %v385 = vadd.f32 %v229, %v384
  %386 = vmatmul.bf16.gmra.mxu0 %v310
  %v387 = vpop.f32.mrf.mxu0
  %v388 = vadd.f32 %v232, %v387
  %v389 = vpop.f32.mrf.mxu0
  %v390 = vadd.f32 %v234, %v389
  %391 = vmatmul.bf16.gmra.mxu0 %v313
  %v392 = vpop.f32.mrf.mxu0
  %v393 = vadd.f32 %v237, %v392
  %v394 = vpop.f32.mrf.mxu0
  %v395 = vadd.f32 %v239, %v394
  %396 = vmatmul.bf16.gmra.mxu0 %v316
  %v397 = vpop.f32.mrf.mxu0
  %v398 = vadd.f32 %v242, %v397
  %v399 = vpop.f32.mrf.mxu0
  %v400 = vadd.f32 %v244, %v399
  %401 = vmatmul.bf16.gmra.mxu0 %v319
  %v402 = vpop.f32.mrf.mxu0
  %v403 = vadd.f32 %v247, %v402
  %v404 = vpop.f32.mrf.mxu0
  %v405 = vadd.f32 %v249, %v404
  %406 = vmatmul.bf16.gmra.mxu0 %v322
  %v407 = vpop.f32.mrf.mxu0
  %v408 = vadd.f32 %v252, %v407
  %v409 = vpop.f32.mrf.mxu0
  %v410 = vadd.f32 %v254, %v409
  %411 = vmatmul.bf16.gmra.mxu0 %v325
  %v412 = vpop.f32.mrf.mxu0
  %v413 = vadd.f32 %v257, %v412
  %v414 = vpop.f32.mrf.mxu0
  %v415 = vadd.f32 %v259, %v414
  %416 = vmatmul.bf16.gmra.mxu0 %v328
  %v417 = vpop.f32.mrf.mxu0
  %v418 = vadd.f32 %v262, %v417
  %v419 = vpop.f32.mrf.mxu0
  %v420 = vadd.f32 %v264, %v419
  %421 = vmatmul.bf16.gmra.mxu0 %v331
  %v422 = vpop.f32.mrf.mxu0
  %v423 = vadd.f32 %v267, %v422
  %v424 = vpop.f32.mrf.mxu0
  %v425 = vadd.f32 %v269, %v424
  %426 = vmatmul.bf16.gmra.mxu0 %v334
  %v427 = vpop.f32.mrf.mxu0
  %v428 = vadd.f32 %v272, %v427
  %v429 = vpop.f32.mrf.mxu0
  %v430 = vadd.f32 %v274, %v429
  %431 = vmatmul.bf16.gmra.mxu0 %v337
  %v432 = vpop.f32.mrf.mxu0
  %v433 = vadd.f32 %v277, %v432
  %v434 = vpop.f32.mrf.mxu0
  %v435 = vadd.f32 %v279, %v434
  %436 = vmatmul.bf16.gmra.mxu0 %v340
  %v437 = vpop.f32.mrf.mxu0
  %v438 = vadd.f32 %v282, %v437
  %v439 = vpop.f32.mrf.mxu0
  %v440 = vadd.f32 %v284, %v439
  %441 = vmatmul.bf16.gmra.mxu0 %v343
  %v442 = vpop.f32.mrf.mxu0
  %v443 = vadd.f32 %v287, %v442
  %v444 = vpop.f32.mrf.mxu0
  %v445 = vadd.f32 %v289, %v444
  %446 = vdwg.mxu0
  %s447 = sadd.s32 %s15, 2
  %s448 = scalar_lea.vmem %s0, %s447
  %v449 = vld [vmem:[%s448] sm:$0xff]
  %v450 = vld [vmem:[%s448 + $0x8] sm:$0xff]
  %v451 = vld [vmem:[%s448 + $0x10] sm:$0xff]
  %v452 = vld [vmem:[%s448 + $0x18] sm:$0xff]
  %v453 = vld [vmem:[%s448 + $0x20] sm:$0xff]
  %v454 = vld [vmem:[%s448 + $0x28] sm:$0xff]
  %v455 = vld [vmem:[%s448 + $0x30] sm:$0xff]
  %v456 = vld [vmem:[%s448 + $0x38] sm:$0xff]
  %v457 = vld [vmem:[%s448 + $0x40] sm:$0xff]
  %v458 = vld [vmem:[%s448 + $0x48] sm:$0xff]
  %v459 = vld [vmem:[%s448 + $0x50] sm:$0xff]
  %v460 = vld [vmem:[%s448 + $0x58] sm:$0xff]
  %v461 = vld [vmem:[%s448 + $0x60] sm:$0xff]
  %v462 = vld [vmem:[%s448 + $0x68] sm:$0xff]
  %v463 = vld [vmem:[%s448 + $0x70] sm:$0xff]
  %v464 = vld [vmem:[%s448 + $0x78] sm:$0xff]
  %v465 = vld [vmem:[%s448 + $0x80] sm:$0xff]
  %v466 = vld [vmem:[%s448 + $0x88] sm:$0xff]
  %v467 = vld [vmem:[%s448 + $0x90] sm:$0xff]
  %v468 = vld [vmem:[%s448 + $0x98] sm:$0xff]
  %v469 = vld [vmem:[%s448 + $0xa0] sm:$0xff]
  %v470 = vld [vmem:[%s448 + $0xa8] sm:$0xff]
  %v471 = vld [vmem:[%s448 + $0xb0] sm:$0xff]
  %v472 = vld [vmem:[%s448 + $0xb8] sm:$0xff]
  %v473 = vld [vmem:[%s448 + $0xc0] sm:$0xff]
  %v474 = vld [vmem:[%s448 + $0xc8] sm:$0xff]
  %v475 = vld [vmem:[%s448 + $0xd0] sm:$0xff]
  %v476 = vld [vmem:[%s448 + $0xd8] sm:$0xff]
  %v477 = vld [vmem:[%s448 + $0xe0] sm:$0xff]
  %v478 = vld [vmem:[%s448 + $0xe8] sm:$0xff]
  %v479 = vld [vmem:[%s448 + $0xf0] sm:$0xff]
  %v480 = vld [vmem:[%s448 + $0xf8] sm:$0xff]
  %v481 = vld [vmem:[%s448 + $0x100] sm:$0xff]
  %v482 = vld [vmem:[%s448 + $0x108] sm:$0xff]
  %v483 = vld [vmem:[%s448 + $0x110] sm:$0xff]
  %v484 = vld [vmem:[%s448 + $0x118] sm:$0xff]
  %v485 = vpack.c.bf16 %v450, %v449
  %v486 = vpack.c.bf16 %v452, %v451
  %v487 = vpack.c.bf16 %v454, %v453
  %v488 = vpack.c.bf16 %v456, %v455
  %v489 = vpack.c.bf16 %v458, %v457
  %v490 = vpack.c.bf16 %v460, %v459
  %v491 = vpack.c.bf16 %v462, %v461
  %v492 = vpack.c.bf16 %v464, %v463
  %v493 = vpack.c.bf16 %v466, %v465
  %v494 = vpack.c.bf16 %v468, %v467
  %v495 = vpack.c.bf16 %v470, %v469
  %v496 = vpack.c.bf16 %v472, %v471
  %v497 = vpack.c.bf16 %v474, %v473
  %v498 = vpack.c.bf16 %v476, %v475
  %v499 = vpack.c.bf16 %v478, %v477
  %v500 = vpack.c.bf16 %v480, %v479
  %v501 = vpack.c.bf16 %v482, %v481
  %v502 = vpack.c.bf16 %v484, %v483
  %s503 = scalar_lea.vmem %s1, 4
  %v504 = vld [vmem:[%s503] sm:$0x3]
  %v506 = vsel %vm130, %v485, 0
  %v509 = vsel %vm130, %v486, 0
  %v512 = vsel %vm130, %v487, 0
  %v515 = vsel %vm130, %v488, 0
  %v518 = vsel %vm130, %v489, 0
  %v521 = vsel %vm130, %v490, 0
  %v524 = vsel %vm130, %v491, 0
  %v527 = vsel %vm130, %v492, 0
  %v530 = vsel %vm130, %v493, 0
  %v533 = vsel %vm130, %v494, 0
  %v536 = vsel %vm130, %v495, 0
  %v539 = vsel %vm130, %v496, 0
  %v542 = vsel %vm130, %v497, 0
  %v545 = vsel %vm130, %v498, 0
  %v548 = vsel %vm130, %v499, 0
  %v551 = vsel %vm130, %v500, 0
  %v554 = vsel %vm130, %v501, 0
  %v557 = vsel %vm130, %v502, 0
  %v560 = vand.u32 %v504, %v188
  %562 = vmatpush.bf16.msra.mxu0 0
  %563 = vmatpush.bf16.msra.mxu0 0
  %564 = vmatpush.bf16.msra.mxu0 0
  %565 = vmatpush.bf16.msra.mxu0 0
  %566 = vmatpush.bf16.msra.mxu0 0
  %567 = vmatpush.bf16.msra.mxu0 0
  %568 = vmatpush.bf16.msra.mxu0 0
  %569 = vmatpush.bf16.msra.mxu0 %v560
  %570 = vmatmul.bf16.gmra.mxu0 %v506
  %v571 = vpop.f32.mrf.mxu0
  %v572 = vadd.f32 0.0, %v571
  %v573 = vpop.f32.mrf.mxu0
  %v574 = vadd.f32 0.0, %v573
  %575 = vmatmul.bf16.gmra.mxu0 %v509
  %v576 = vpop.f32.mrf.mxu0
  %v577 = vadd.f32 0.0, %v576
  %v578 = vpop.f32.mrf.mxu0
  %v579 = vadd.f32 0.0, %v578
  %580 = vmatmul.bf16.gmra.mxu0 %v512
  %v581 = vpop.f32.mrf.mxu0
  %v582 = vadd.f32 0.0, %v581
  %v583 = vpop.f32.mrf.mxu0
  %v584 = vadd.f32 0.0, %v583
  %585 = vmatmul.bf16.gmra.mxu0 %v515
  %v586 = vpop.f32.mrf.mxu0
  %v587 = vadd.f32 0.0, %v586
  %v588 = vpop.f32.mrf.mxu0
  %v589 = vadd.f32 0.0, %v588
  %590 = vmatmul.bf16.gmra.mxu0 %v518
  %v591 = vpop.f32.mrf.mxu0
  %v592 = vadd.f32 0.0, %v591
  %v593 = vpop.f32.mrf.mxu0
  %v594 = vadd.f32 0.0, %v593
  %595 = vmatmul.bf16.gmra.mxu0 %v521
  %v596 = vpop.f32.mrf.mxu0
  %v597 = vadd.f32 0.0, %v596
  %v598 = vpop.f32.mrf.mxu0
  %v599 = vadd.f32 0.0, %v598
  %600 = vmatmul.bf16.gmra.mxu0 %v524
  %v601 = vpop.f32.mrf.mxu0
  %v602 = vadd.f32 0.0, %v601
  %v603 = vpop.f32.mrf.mxu0
  %v604 = vadd.f32 0.0, %v603
  %605 = vmatmul.bf16.gmra.mxu0 %v527
  %v606 = vpop.f32.mrf.mxu0
  %v607 = vadd.f32 0.0, %v606
  %v608 = vpop.f32.mrf.mxu0
  %v609 = vadd.f32 0.0, %v608
  %610 = vmatmul.bf16.gmra.mxu0 %v530
  %v611 = vpop.f32.mrf.mxu0
  %v612 = vadd.f32 0.0, %v611
  %v613 = vpop.f32.mrf.mxu0
  %v614 = vadd.f32 0.0, %v613
  %615 = vmatmul.bf16.gmra.mxu0 %v533
  %v616 = vpop.f32.mrf.mxu0
  %v617 = vadd.f32 0.0, %v616
  %v618 = vpop.f32.mrf.mxu0
  %v619 = vadd.f32 0.0, %v618
  %620 = vmatmul.bf16.gmra.mxu0 %v536
  %v621 = vpop.f32.mrf.mxu0
  %v622 = vadd.f32 0.0, %v621
  %v623 = vpop.f32.mrf.mxu0
  %v624 = vadd.f32 0.0, %v623
  %625 = vmatmul.bf16.gmra.mxu0 %v539
  %v626 = vpop.f32.mrf.mxu0
  %v627 = vadd.f32 0.0, %v626
  %v628 = vpop.f32.mrf.mxu0
  %v629 = vadd.f32 0.0, %v628
  %630 = vmatmul.bf16.gmra.mxu0 %v542
  %v631 = vpop.f32.mrf.mxu0
  %v632 = vadd.f32 0.0, %v631
  %v633 = vpop.f32.mrf.mxu0
  %v634 = vadd.f32 0.0, %v633
  %635 = vmatmul.bf16.gmra.mxu0 %v545
  %v636 = vpop.f32.mrf.mxu0
  %v637 = vadd.f32 0.0, %v636
  %v638 = vpop.f32.mrf.mxu0
  %v639 = vadd.f32 0.0, %v638
  %640 = vmatmul.bf16.gmra.mxu0 %v548
  %v641 = vpop.f32.mrf.mxu0
  %v642 = vadd.f32 0.0, %v641
  %v643 = vpop.f32.mrf.mxu0
  %v644 = vadd.f32 0.0, %v643
  %645 = vmatmul.bf16.gmra.mxu0 %v551
  %v646 = vpop.f32.mrf.mxu0
  %v647 = vadd.f32 0.0, %v646
  %v648 = vpop.f32.mrf.mxu0
  %v649 = vadd.f32 0.0, %v648
  %650 = vmatmul.bf16.gmra.mxu0 %v554
  %v651 = vpop.f32.mrf.mxu0
  %v652 = vadd.f32 0.0, %v651
  %v653 = vpop.f32.mrf.mxu0
  %v654 = vadd.f32 0.0, %v653
  %655 = vmatmul.bf16.gmra.mxu0 %v557
  %v656 = vpop.f32.mrf.mxu0
  %v657 = vadd.f32 0.0, %v656
  %v658 = vpop.f32.mrf.mxu0
  %v659 = vadd.f32 0.0, %v658
  %660 = vdwg.mxu0
  %v661 = vadd.f32 %v358, %v572
  %v662 = vadd.f32 %v360, %v574
  %v663 = vadd.f32 %v363, %v577
  %v664 = vadd.f32 %v365, %v579
  %v665 = vadd.f32 %v368, %v582
  %v666 = vadd.f32 %v370, %v584
  %v667 = vadd.f32 %v373, %v587
  %v668 = vadd.f32 %v375, %v589
  %v669 = vadd.f32 %v378, %v592
  %v670 = vadd.f32 %v380, %v594
  %v671 = vadd.f32 %v383, %v597
  %v672 = vadd.f32 %v385, %v599
  %v673 = vadd.f32 %v388, %v602
  %v674 = vadd.f32 %v390, %v604
  %v675 = vadd.f32 %v393, %v607
  %v676 = vadd.f32 %v395, %v609
  %v677 = vadd.f32 %v398, %v612
  %v678 = vadd.f32 %v400, %v614
  %v679 = vadd.f32 %v403, %v617
  %v680 = vadd.f32 %v405, %v619
  %v681 = vadd.f32 %v408, %v622
  %v682 = vadd.f32 %v410, %v624
  %v683 = vadd.f32 %v413, %v627
  %v684 = vadd.f32 %v415, %v629
  %v685 = vadd.f32 %v418, %v632
  %v686 = vadd.f32 %v420, %v634
  %v687 = vadd.f32 %v423, %v637
  %v688 = vadd.f32 %v425, %v639
  %v689 = vadd.f32 %v428, %v642
  %v690 = vadd.f32 %v430, %v644
  %v691 = vadd.f32 %v433, %v647
  %v692 = vadd.f32 %v435, %v649
  %v693 = vadd.f32 %v438, %v652
  %v694 = vadd.f32 %v440, %v654
  %v695 = vadd.f32 %v443, %v657
  %v696 = vadd.f32 %v445, %v659
  %s697 = sadd.s32 %s15, 18
  %s698 = scalar_lea.vmem %s0, %s697
  %v699 = vld [vmem:[%s698] sm:$0xff]
  %v700 = vld [vmem:[%s698 + $0x8] sm:$0xff]
  %v701 = vld [vmem:[%s698 + $0x10] sm:$0xff]
  %v702 = vld [vmem:[%s698 + $0x18] sm:$0xff]
  %v703 = vld [vmem:[%s698 + $0x20] sm:$0xff]
  %v704 = vld [vmem:[%s698 + $0x28] sm:$0xff]
  %v705 = vld [vmem:[%s698 + $0x30] sm:$0xff]
  %v706 = vld [vmem:[%s698 + $0x38] sm:$0xff]
  %v707 = vld [vmem:[%s698 + $0x40] sm:$0xff]
  %v708 = vld [vmem:[%s698 + $0x48] sm:$0xff]
  %v709 = vld [vmem:[%s698 + $0x50] sm:$0xff]
  %v710 = vld [vmem:[%s698 + $0x58] sm:$0xff]
  %v711 = vld [vmem:[%s698 + $0x60] sm:$0xff]
  %v712 = vld [vmem:[%s698 + $0x68] sm:$0xff]
  %v713 = vld [vmem:[%s698 + $0x70] sm:$0xff]
  %v714 = vld [vmem:[%s698 + $0x78] sm:$0xff]
  %v715 = vld [vmem:[%s698 + $0x80] sm:$0xff]
  %v716 = vld [vmem:[%s698 + $0x88] sm:$0xff]
  %v717 = vld [vmem:[%s698 + $0x90] sm:$0xff]
  %v718 = vld [vmem:[%s698 + $0x98] sm:$0xff]
  %v719 = vld [vmem:[%s698 + $0xa0] sm:$0xff]
  %v720 = vld [vmem:[%s698 + $0xa8] sm:$0xff]
  %v721 = vld [vmem:[%s698 + $0xb0] sm:$0xff]
  %v722 = vld [vmem:[%s698 + $0xb8] sm:$0xff]
  %v723 = vld [vmem:[%s698 + $0xc0] sm:$0xff]
  %v724 = vld [vmem:[%s698 + $0xc8] sm:$0xff]
  %v725 = vld [vmem:[%s698 + $0xd0] sm:$0xff]
  %v726 = vld [vmem:[%s698 + $0xd8] sm:$0xff]
  %v727 = vld [vmem:[%s698 + $0xe0] sm:$0xff]
  %v728 = vld [vmem:[%s698 + $0xe8] sm:$0xff]
  %v729 = vld [vmem:[%s698 + $0xf0] sm:$0xff]
  %v730 = vld [vmem:[%s698 + $0xf8] sm:$0xff]
  %v731 = vld [vmem:[%s698 + $0x100] sm:$0xff]
  %v732 = vld [vmem:[%s698 + $0x108] sm:$0xff]
  %v733 = vld [vmem:[%s698 + $0x110] sm:$0xff]
  %v734 = vld [vmem:[%s698 + $0x118] sm:$0xff]
  %v735 = vpack.c.bf16 %v700, %v699
  %v736 = vpack.c.bf16 %v702, %v701
  %v737 = vpack.c.bf16 %v704, %v703
  %v738 = vpack.c.bf16 %v706, %v705
  %v739 = vpack.c.bf16 %v708, %v707
  %v740 = vpack.c.bf16 %v710, %v709
  %v741 = vpack.c.bf16 %v712, %v711
  %v742 = vpack.c.bf16 %v714, %v713
  %v743 = vpack.c.bf16 %v716, %v715
  %v744 = vpack.c.bf16 %v718, %v717
  %v745 = vpack.c.bf16 %v720, %v719
  %v746 = vpack.c.bf16 %v722, %v721
  %v747 = vpack.c.bf16 %v724, %v723
  %v748 = vpack.c.bf16 %v726, %v725
  %v749 = vpack.c.bf16 %v728, %v727
  %v750 = vpack.c.bf16 %v730, %v729
  %v751 = vpack.c.bf16 %v732, %v731
  %v752 = vpack.c.bf16 %v734, %v733
  %s753 = scalar_lea.vmem %s1, 6
  %v754 = vld [vmem:[%s753] sm:$0x3]
  %v756 = vsel %vm130, %v735, 0
  %v759 = vsel %vm130, %v736, 0
  %v762 = vsel %vm130, %v737, 0
  %v765 = vsel %vm130, %v738, 0
  %v768 = vsel %vm130, %v739, 0
  %v771 = vsel %vm130, %v740, 0
  %v774 = vsel %vm130, %v741, 0
  %v777 = vsel %vm130, %v742, 0
  %v780 = vsel %vm130, %v743, 0
  %v783 = vsel %vm130, %v744, 0
  %v786 = vsel %vm130, %v745, 0
  %v789 = vsel %vm130, %v746, 0
  %v792 = vsel %vm130, %v747, 0
  %v795 = vsel %vm130, %v748, 0
  %v798 = vsel %vm130, %v749, 0
  %v801 = vsel %vm130, %v750, 0
  %v804 = vsel %vm130, %v751, 0
  %v807 = vsel %vm130, %v752, 0
  %v810 = vand.u32 %v754, %v188
  %812 = vmatpush.bf16.msra.mxu0 0
  %813 = vmatpush.bf16.msra.mxu0 0
  %814 = vmatpush.bf16.msra.mxu0 0
  %815 = vmatpush.bf16.msra.mxu0 0
  %816 = vmatpush.bf16.msra.mxu0 0
  %817 = vmatpush.bf16.msra.mxu0 0
  %818 = vmatpush.bf16.msra.mxu0 0
  %819 = vmatpush.bf16.msra.mxu0 %v810
  %820 = vmatmul.bf16.gmra.mxu0 %v756
  %v821 = vpop.f32.mrf.mxu0
  %v822 = vadd.f32 0.0, %v821
  %v823 = vpop.f32.mrf.mxu0
  %v824 = vadd.f32 0.0, %v823
  %825 = vmatmul.bf16.gmra.mxu0 %v759
  %v826 = vpop.f32.mrf.mxu0
  %v827 = vadd.f32 0.0, %v826
  %v828 = vpop.f32.mrf.mxu0
  %v829 = vadd.f32 0.0, %v828
  %830 = vmatmul.bf16.gmra.mxu0 %v762
  %v831 = vpop.f32.mrf.mxu0
  %v832 = vadd.f32 0.0, %v831
  %v833 = vpop.f32.mrf.mxu0
  %v834 = vadd.f32 0.0, %v833
  %835 = vmatmul.bf16.gmra.mxu0 %v765
  %v836 = vpop.f32.mrf.mxu0
  %v837 = vadd.f32 0.0, %v836
  %v838 = vpop.f32.mrf.mxu0
  %v839 = vadd.f32 0.0, %v838
  %840 = vmatmul.bf16.gmra.mxu0 %v768
  %v841 = vpop.f32.mrf.mxu0
  %v842 = vadd.f32 0.0, %v841
  %v843 = vpop.f32.mrf.mxu0
  %v844 = vadd.f32 0.0, %v843
  %845 = vmatmul.bf16.gmra.mxu0 %v771
  %v846 = vpop.f32.mrf.mxu0
  %v847 = vadd.f32 0.0, %v846
  %v848 = vpop.f32.mrf.mxu0
  %v849 = vadd.f32 0.0, %v848
  %850 = vmatmul.bf16.gmra.mxu0 %v774
  %v851 = vpop.f32.mrf.mxu0
  %v852 = vadd.f32 0.0, %v851
  %v853 = vpop.f32.mrf.mxu0
  %v854 = vadd.f32 0.0, %v853
  %855 = vmatmul.bf16.gmra.mxu0 %v777
  %v856 = vpop.f32.mrf.mxu0
  %v857 = vadd.f32 0.0, %v856
  %v858 = vpop.f32.mrf.mxu0
  %v859 = vadd.f32 0.0, %v858
  %860 = vmatmul.bf16.gmra.mxu0 %v780
  %v861 = vpop.f32.mrf.mxu0
  %v862 = vadd.f32 0.0, %v861
  %v863 = vpop.f32.mrf.mxu0
  %v864 = vadd.f32 0.0, %v863
  %865 = vmatmul.bf16.gmra.mxu0 %v783
  %v866 = vpop.f32.mrf.mxu0
  %v867 = vadd.f32 0.0, %v866
  %v868 = vpop.f32.mrf.mxu0
  %v869 = vadd.f32 0.0, %v868
  %870 = vmatmul.bf16.gmra.mxu0 %v786
  %v871 = vpop.f32.mrf.mxu0
  %v872 = vadd.f32 0.0, %v871
  %v873 = vpop.f32.mrf.mxu0
  %v874 = vadd.f32 0.0, %v873
  %875 = vmatmul.bf16.gmra.mxu0 %v789
  %v876 = vpop.f32.mrf.mxu0
  %v877 = vadd.f32 0.0, %v876
  %v878 = vpop.f32.mrf.mxu0
  %v879 = vadd.f32 0.0, %v878
  %880 = vmatmul.bf16.gmra.mxu0 %v792
  %v881 = vpop.f32.mrf.mxu0
  %v882 = vadd.f32 0.0, %v881
  %v883 = vpop.f32.mrf.mxu0
  %v884 = vadd.f32 0.0, %v883
  %885 = vmatmul.bf16.gmra.mxu0 %v795
  %v886 = vpop.f32.mrf.mxu0
  %v887 = vadd.f32 0.0, %v886
  %v888 = vpop.f32.mrf.mxu0
  %v889 = vadd.f32 0.0, %v888
  %890 = vmatmul.bf16.gmra.mxu0 %v798
  %v891 = vpop.f32.mrf.mxu0
  %v892 = vadd.f32 0.0, %v891
  %v893 = vpop.f32.mrf.mxu0
  %v894 = vadd.f32 0.0, %v893
  %895 = vmatmul.bf16.gmra.mxu0 %v801
  %v896 = vpop.f32.mrf.mxu0
  %v897 = vadd.f32 0.0, %v896
  %v898 = vpop.f32.mrf.mxu0
  %v899 = vadd.f32 0.0, %v898
  %900 = vmatmul.bf16.gmra.mxu0 %v804
  %v901 = vpop.f32.mrf.mxu0
  %v902 = vadd.f32 0.0, %v901
  %v903 = vpop.f32.mrf.mxu0
  %v904 = vadd.f32 0.0, %v903
  %905 = vmatmul.bf16.gmra.mxu0 %v807
  %v906 = vpop.f32.mrf.mxu0
  %v907 = vadd.f32 0.0, %v906
  %v908 = vpop.f32.mrf.mxu0
  %v909 = vadd.f32 0.0, %v908
  %910 = vdwg.mxu0
  %v911 = vadd.f32 %v661, %v822
  %v912 = vadd.f32 %v662, %v824
  %v913 = vadd.f32 %v663, %v827
  %v914 = vadd.f32 %v664, %v829
  %v915 = vadd.f32 %v665, %v832
  %v916 = vadd.f32 %v666, %v834
  %v917 = vadd.f32 %v667, %v837
  %v918 = vadd.f32 %v668, %v839
  %v919 = vadd.f32 %v669, %v842
  %v920 = vadd.f32 %v670, %v844
  %v921 = vadd.f32 %v671, %v847
  %v922 = vadd.f32 %v672, %v849
  %v923 = vadd.f32 %v673, %v852
  %v924 = vadd.f32 %v674, %v854
  %v925 = vadd.f32 %v675, %v857
  %v926 = vadd.f32 %v676, %v859
  %v927 = vadd.f32 %v677, %v862
  %v928 = vadd.f32 %v678, %v864
  %v929 = vadd.f32 %v679, %v867
  %v930 = vadd.f32 %v680, %v869
  %v931 = vadd.f32 %v681, %v872
  %v932 = vadd.f32 %v682, %v874
  %v933 = vadd.f32 %v683, %v877
  %v934 = vadd.f32 %v684, %v879
  %v935 = vadd.f32 %v685, %v882
  %v936 = vadd.f32 %v686, %v884
  %v937 = vadd.f32 %v687, %v887
  %v938 = vadd.f32 %v688, %v889
  %v939 = vadd.f32 %v689, %v892
  %v940 = vadd.f32 %v690, %v894
  %v941 = vadd.f32 %v691, %v897
  %v942 = vadd.f32 %v692, %v899
  %v943 = vadd.f32 %v693, %v902
  %v944 = vadd.f32 %v694, %v904
  %v945 = vadd.f32 %v695, %v907
  %v946 = vadd.f32 %v696, %v909
  %s947 = sadd.s32 %s15, 19
  %s948 = scalar_lea.vmem %s0, %s947
  %v949 = vld [vmem:[%s948] sm:$0xff]
  %v950 = vld [vmem:[%s948 + $0x8] sm:$0xff]
  %v951 = vld [vmem:[%s948 + $0x10] sm:$0xff]
  %v952 = vld [vmem:[%s948 + $0x18] sm:$0xff]
  %v953 = vld [vmem:[%s948 + $0x20] sm:$0xff]
  %v954 = vld [vmem:[%s948 + $0x28] sm:$0xff]
  %v955 = vld [vmem:[%s948 + $0x30] sm:$0xff]
  %v956 = vld [vmem:[%s948 + $0x38] sm:$0xff]
  %v957 = vld [vmem:[%s948 + $0x40] sm:$0xff]
  %v958 = vld [vmem:[%s948 + $0x48] sm:$0xff]
  %v959 = vld [vmem:[%s948 + $0x50] sm:$0xff]
  %v960 = vld [vmem:[%s948 + $0x58] sm:$0xff]
  %v961 = vld [vmem:[%s948 + $0x60] sm:$0xff]
  %v962 = vld [vmem:[%s948 + $0x68] sm:$0xff]
  %v963 = vld [vmem:[%s948 + $0x70] sm:$0xff]
  %v964 = vld [vmem:[%s948 + $0x78] sm:$0xff]
  %v965 = vld [vmem:[%s948 + $0x80] sm:$0xff]
  %v966 = vld [vmem:[%s948 + $0x88] sm:$0xff]
  %v967 = vld [vmem:[%s948 + $0x90] sm:$0xff]
  %v968 = vld [vmem:[%s948 + $0x98] sm:$0xff]
  %v969 = vld [vmem:[%s948 + $0xa0] sm:$0xff]
  %v970 = vld [vmem:[%s948 + $0xa8] sm:$0xff]
  %v971 = vld [vmem:[%s948 + $0xb0] sm:$0xff]
  %v972 = vld [vmem:[%s948 + $0xb8] sm:$0xff]
  %v973 = vld [vmem:[%s948 + $0xc0] sm:$0xff]
  %v974 = vld [vmem:[%s948 + $0xc8] sm:$0xff]
  %v975 = vld [vmem:[%s948 + $0xd0] sm:$0xff]
  %v976 = vld [vmem:[%s948 + $0xd8] sm:$0xff]
  %v977 = vld [vmem:[%s948 + $0xe0] sm:$0xff]
  %v978 = vld [vmem:[%s948 + $0xe8] sm:$0xff]
  %v979 = vld [vmem:[%s948 + $0xf0] sm:$0xff]
  %v980 = vld [vmem:[%s948 + $0xf8] sm:$0xff]
  %v981 = vld [vmem:[%s948 + $0x100] sm:$0xff]
  %v982 = vld [vmem:[%s948 + $0x108] sm:$0xff]
  %v983 = vld [vmem:[%s948 + $0x110] sm:$0xff]
  %v984 = vld [vmem:[%s948 + $0x118] sm:$0xff]
  %v985 = vpack.c.bf16 %v950, %v949
  %v986 = vpack.c.bf16 %v952, %v951
  %v987 = vpack.c.bf16 %v954, %v953
  %v988 = vpack.c.bf16 %v956, %v955
  %v989 = vpack.c.bf16 %v958, %v957
  %v990 = vpack.c.bf16 %v960, %v959
  %v991 = vpack.c.bf16 %v962, %v961
  %v992 = vpack.c.bf16 %v964, %v963
  %v993 = vpack.c.bf16 %v966, %v965
  %v994 = vpack.c.bf16 %v968, %v967
  %v995 = vpack.c.bf16 %v970, %v969
  %v996 = vpack.c.bf16 %v972, %v971
  %v997 = vpack.c.bf16 %v974, %v973
  %v998 = vpack.c.bf16 %v976, %v975
  %v999 = vpack.c.bf16 %v978, %v977
  %v1000 = vpack.c.bf16 %v980, %v979
  %v1001 = vpack.c.bf16 %v982, %v981
  %v1002 = vpack.c.bf16 %v984, %v983
  %s1003 = scalar_lea.vmem %s1, 8
  %v1004 = vld [vmem:[%s1003] sm:$0x3]
  %v1006 = vsel %vm130, %v985, 0
  %v1009 = vsel %vm130, %v986, 0
  %v1012 = vsel %vm130, %v987, 0
  %v1015 = vsel %vm130, %v988, 0
  %v1018 = vsel %vm130, %v989, 0
  %v1021 = vsel %vm130, %v990, 0
  %v1024 = vsel %vm130, %v991, 0
  %v1027 = vsel %vm130, %v992, 0
  %v1030 = vsel %vm130, %v993, 0
  %v1033 = vsel %vm130, %v994, 0
  %v1036 = vsel %vm130, %v995, 0
  %v1039 = vsel %vm130, %v996, 0
  %v1042 = vsel %vm130, %v997, 0
  %v1045 = vsel %vm130, %v998, 0
  %v1048 = vsel %vm130, %v999, 0
  %v1051 = vsel %vm130, %v1000, 0
  %v1054 = vsel %vm130, %v1001, 0
  %v1057 = vsel %vm130, %v1002, 0
  %v1060 = vand.u32 %v1004, %v188
  %1062 = vmatpush.bf16.msra.mxu0 0
  %1063 = vmatpush.bf16.msra.mxu0 0
  %1064 = vmatpush.bf16.msra.mxu0 0
  %1065 = vmatpush.bf16.msra.mxu0 0
  %1066 = vmatpush.bf16.msra.mxu0 0
  %1067 = vmatpush.bf16.msra.mxu0 0
  %1068 = vmatpush.bf16.msra.mxu0 0
  %1069 = vmatpush.bf16.msra.mxu0 %v1060
  %1070 = vmatmul.bf16.gmra.mxu0 %v1006
  %v1071 = vpop.f32.mrf.mxu0
  %v1072 = vadd.f32 0.0, %v1071
  %v1073 = vpop.f32.mrf.mxu0
  %v1074 = vadd.f32 0.0, %v1073
  %1075 = vmatmul.bf16.gmra.mxu0 %v1009
  %v1076 = vpop.f32.mrf.mxu0
  %v1077 = vadd.f32 0.0, %v1076
  %v1078 = vpop.f32.mrf.mxu0
  %v1079 = vadd.f32 0.0, %v1078
  %1080 = vmatmul.bf16.gmra.mxu0 %v1012
  %v1081 = vpop.f32.mrf.mxu0
  %v1082 = vadd.f32 0.0, %v1081
  %v1083 = vpop.f32.mrf.mxu0
  %v1084 = vadd.f32 0.0, %v1083
  %1085 = vmatmul.bf16.gmra.mxu0 %v1015
  %v1086 = vpop.f32.mrf.mxu0
  %v1087 = vadd.f32 0.0, %v1086
  %v1088 = vpop.f32.mrf.mxu0
  %v1089 = vadd.f32 0.0, %v1088
  %1090 = vmatmul.bf16.gmra.mxu0 %v1018
  %v1091 = vpop.f32.mrf.mxu0
  %v1092 = vadd.f32 0.0, %v1091
  %v1093 = vpop.f32.mrf.mxu0
  %v1094 = vadd.f32 0.0, %v1093
  %1095 = vmatmul.bf16.gmra.mxu0 %v1021
  %v1096 = vpop.f32.mrf.mxu0
  %v1097 = vadd.f32 0.0, %v1096
  %v1098 = vpop.f32.mrf.mxu0
  %v1099 = vadd.f32 0.0, %v1098
  %1100 = vmatmul.bf16.gmra.mxu0 %v1024
  %v1101 = vpop.f32.mrf.mxu0
  %v1102 = vadd.f32 0.0, %v1101
  %v1103 = vpop.f32.mrf.mxu0
  %v1104 = vadd.f32 0.0, %v1103
  %1105 = vmatmul.bf16.gmra.mxu0 %v1027
  %v1106 = vpop.f32.mrf.mxu0
  %v1107 = vadd.f32 0.0, %v1106
  %v1108 = vpop.f32.mrf.mxu0
  %v1109 = vadd.f32 0.0, %v1108
  %1110 = vmatmul.bf16.gmra.mxu0 %v1030
  %v1111 = vpop.f32.mrf.mxu0
  %v1112 = vadd.f32 0.0, %v1111
  %v1113 = vpop.f32.mrf.mxu0
  %v1114 = vadd.f32 0.0, %v1113
  %1115 = vmatmul.bf16.gmra.mxu0 %v1033
  %v1116 = vpop.f32.mrf.mxu0
  %v1117 = vadd.f32 0.0, %v1116
  %v1118 = vpop.f32.mrf.mxu0
  %v1119 = vadd.f32 0.0, %v1118
  %1120 = vmatmul.bf16.gmra.mxu0 %v1036
  %v1121 = vpop.f32.mrf.mxu0
  %v1122 = vadd.f32 0.0, %v1121
  %v1123 = vpop.f32.mrf.mxu0
  %v1124 = vadd.f32 0.0, %v1123
  %1125 = vmatmul.bf16.gmra.mxu0 %v1039
  %v1126 = vpop.f32.mrf.mxu0
  %v1127 = vadd.f32 0.0, %v1126
  %v1128 = vpop.f32.mrf.mxu0
  %v1129 = vadd.f32 0.0, %v1128
  %1130 = vmatmul.bf16.gmra.mxu0 %v1042
  %v1131 = vpop.f32.mrf.mxu0
  %v1132 = vadd.f32 0.0, %v1131
  %v1133 = vpop.f32.mrf.mxu0
  %v1134 = vadd.f32 0.0, %v1133
  %1135 = vmatmul.bf16.gmra.mxu0 %v1045
  %v1136 = vpop.f32.mrf.mxu0
  %v1137 = vadd.f32 0.0, %v1136
  %v1138 = vpop.f32.mrf.mxu0
  %v1139 = vadd.f32 0.0, %v1138
  %1140 = vmatmul.bf16.gmra.mxu0 %v1048
  %v1141 = vpop.f32.mrf.mxu0
  %v1142 = vadd.f32 0.0, %v1141
  %v1143 = vpop.f32.mrf.mxu0
  %v1144 = vadd.f32 0.0, %v1143
  %1145 = vmatmul.bf16.gmra.mxu0 %v1051
  %v1146 = vpop.f32.mrf.mxu0
  %v1147 = vadd.f32 0.0, %v1146
  %v1148 = vpop.f32.mrf.mxu0
  %v1149 = vadd.f32 0.0, %v1148
  %1150 = vmatmul.bf16.gmra.mxu0 %v1054
  %v1151 = vpop.f32.mrf.mxu0
  %v1152 = vadd.f32 0.0, %v1151
  %v1153 = vpop.f32.mrf.mxu0
  %v1154 = vadd.f32 0.0, %v1153
  %1155 = vmatmul.bf16.gmra.mxu0 %v1057
  %v1156 = vpop.f32.mrf.mxu0
  %v1157 = vadd.f32 0.0, %v1156
  %v1158 = vpop.f32.mrf.mxu0
  %v1159 = vadd.f32 0.0, %v1158
  %1160 = vdwg.mxu0
  %v1161 = vadd.f32 %v911, %v1072
  %v1162 = vadd.f32 %v912, %v1074
  %v1163 = vadd.f32 %v913, %v1077
  %v1164 = vadd.f32 %v914, %v1079
  %v1165 = vadd.f32 %v915, %v1082
  %v1166 = vadd.f32 %v916, %v1084
  %v1167 = vadd.f32 %v917, %v1087
  %v1168 = vadd.f32 %v918, %v1089
  %v1169 = vadd.f32 %v919, %v1092
  %v1170 = vadd.f32 %v920, %v1094
  %v1171 = vadd.f32 %v921, %v1097
  %v1172 = vadd.f32 %v922, %v1099
  %v1173 = vadd.f32 %v923, %v1102
  %v1174 = vadd.f32 %v924, %v1104
  %v1175 = vadd.f32 %v925, %v1107
  %v1176 = vadd.f32 %v926, %v1109
  %v1177 = vadd.f32 %v927, %v1112
  %v1178 = vadd.f32 %v928, %v1114
  %v1179 = vadd.f32 %v929, %v1117
  %v1180 = vadd.f32 %v930, %v1119
  %v1181 = vadd.f32 %v931, %v1122
  %v1182 = vadd.f32 %v932, %v1124
  %v1183 = vadd.f32 %v933, %v1127
  %v1184 = vadd.f32 %v934, %v1129
  %v1185 = vadd.f32 %v935, %v1132
  %v1186 = vadd.f32 %v936, %v1134
  %v1187 = vadd.f32 %v937, %v1137
  %v1188 = vadd.f32 %v938, %v1139
  %v1189 = vadd.f32 %v939, %v1142
  %v1190 = vadd.f32 %v940, %v1144
  %v1191 = vadd.f32 %v941, %v1147
  %v1192 = vadd.f32 %v942, %v1149
  %v1193 = vadd.f32 %v943, %v1152
  %v1194 = vadd.f32 %v944, %v1154
  %v1195 = vadd.f32 %v945, %v1157
  %v1196 = vadd.f32 %v946, %v1159
  %s1197 = sadd.s32 %s15, 20
  %s1198 = scalar_lea.vmem %s0, %s1197
  %v1199 = vld [vmem:[%s1198] sm:$0xff]
  %v1200 = vld [vmem:[%s1198 + $0x8] sm:$0xff]
  %v1201 = vld [vmem:[%s1198 + $0x10] sm:$0xff]
  %v1202 = vld [vmem:[%s1198 + $0x18] sm:$0xff]
  %v1203 = vld [vmem:[%s1198 + $0x20] sm:$0xff]
  %v1204 = vld [vmem:[%s1198 + $0x28] sm:$0xff]
  %v1205 = vld [vmem:[%s1198 + $0x30] sm:$0xff]
  %v1206 = vld [vmem:[%s1198 + $0x38] sm:$0xff]
  %v1207 = vld [vmem:[%s1198 + $0x40] sm:$0xff]
  %v1208 = vld [vmem:[%s1198 + $0x48] sm:$0xff]
  %v1209 = vld [vmem:[%s1198 + $0x50] sm:$0xff]
  %v1210 = vld [vmem:[%s1198 + $0x58] sm:$0xff]
  %v1211 = vld [vmem:[%s1198 + $0x60] sm:$0xff]
  %v1212 = vld [vmem:[%s1198 + $0x68] sm:$0xff]
  %v1213 = vld [vmem:[%s1198 + $0x70] sm:$0xff]
  %v1214 = vld [vmem:[%s1198 + $0x78] sm:$0xff]
  %v1215 = vld [vmem:[%s1198 + $0x80] sm:$0xff]
  %v1216 = vld [vmem:[%s1198 + $0x88] sm:$0xff]
  %v1217 = vld [vmem:[%s1198 + $0x90] sm:$0xff]
  %v1218 = vld [vmem:[%s1198 + $0x98] sm:$0xff]
  %v1219 = vld [vmem:[%s1198 + $0xa0] sm:$0xff]
  %v1220 = vld [vmem:[%s1198 + $0xa8] sm:$0xff]
  %v1221 = vld [vmem:[%s1198 + $0xb0] sm:$0xff]
  %v1222 = vld [vmem:[%s1198 + $0xb8] sm:$0xff]
  %v1223 = vld [vmem:[%s1198 + $0xc0] sm:$0xff]
  %v1224 = vld [vmem:[%s1198 + $0xc8] sm:$0xff]
  %v1225 = vld [vmem:[%s1198 + $0xd0] sm:$0xff]
  %v1226 = vld [vmem:[%s1198 + $0xd8] sm:$0xff]
  %v1227 = vld [vmem:[%s1198 + $0xe0] sm:$0xff]
  %v1228 = vld [vmem:[%s1198 + $0xe8] sm:$0xff]
  %v1229 = vld [vmem:[%s1198 + $0xf0] sm:$0xff]
  %v1230 = vld [vmem:[%s1198 + $0xf8] sm:$0xff]
  %v1231 = vld [vmem:[%s1198 + $0x100] sm:$0xff]
  %v1232 = vld [vmem:[%s1198 + $0x108] sm:$0xff]
  %v1233 = vld [vmem:[%s1198 + $0x110] sm:$0xff]
  %v1234 = vld [vmem:[%s1198 + $0x118] sm:$0xff]
  %v1235 = vpack.c.bf16 %v1200, %v1199
  %v1236 = vpack.c.bf16 %v1202, %v1201
  %v1237 = vpack.c.bf16 %v1204, %v1203
  %v1238 = vpack.c.bf16 %v1206, %v1205
  %v1239 = vpack.c.bf16 %v1208, %v1207
  %v1240 = vpack.c.bf16 %v1210, %v1209
  %v1241 = vpack.c.bf16 %v1212, %v1211
  %v1242 = vpack.c.bf16 %v1214, %v1213
  %v1243 = vpack.c.bf16 %v1216, %v1215
  %v1244 = vpack.c.bf16 %v1218, %v1217
  %v1245 = vpack.c.bf16 %v1220, %v1219
  %v1246 = vpack.c.bf16 %v1222, %v1221
  %v1247 = vpack.c.bf16 %v1224, %v1223
  %v1248 = vpack.c.bf16 %v1226, %v1225
  %v1249 = vpack.c.bf16 %v1228, %v1227
  %v1250 = vpack.c.bf16 %v1230, %v1229
  %v1251 = vpack.c.bf16 %v1232, %v1231
  %v1252 = vpack.c.bf16 %v1234, %v1233
  %s1253 = scalar_lea.vmem %s1, 10
  %v1254 = vld [vmem:[%s1253] sm:$0x3]
  %v1256 = vsel %vm130, %v1235, 0
  %v1259 = vsel %vm130, %v1236, 0
  %v1262 = vsel %vm130, %v1237, 0
  %v1265 = vsel %vm130, %v1238, 0
  %v1268 = vsel %vm130, %v1239, 0
  %v1271 = vsel %vm130, %v1240, 0
  %v1274 = vsel %vm130, %v1241, 0
  %v1277 = vsel %vm130, %v1242, 0
  %v1280 = vsel %vm130, %v1243, 0
  %v1283 = vsel %vm130, %v1244, 0
  %v1286 = vsel %vm130, %v1245, 0
  %v1289 = vsel %vm130, %v1246, 0
  %v1292 = vsel %vm130, %v1247, 0
  %v1295 = vsel %vm130, %v1248, 0
  %v1298 = vsel %vm130, %v1249, 0
  %v1301 = vsel %vm130, %v1250, 0
  %v1304 = vsel %vm130, %v1251, 0
  %v1307 = vsel %vm130, %v1252, 0
  %v1310 = vand.u32 %v1254, %v188
  %1312 = vmatpush.bf16.msra.mxu0 0
  %1313 = vmatpush.bf16.msra.mxu0 0
  %1314 = vmatpush.bf16.msra.mxu0 0
  %1315 = vmatpush.bf16.msra.mxu0 0
  %1316 = vmatpush.bf16.msra.mxu0 0
  %1317 = vmatpush.bf16.msra.mxu0 0
  %1318 = vmatpush.bf16.msra.mxu0 0
  %1319 = vmatpush.bf16.msra.mxu0 %v1310
  %1320 = vmatmul.bf16.gmra.mxu0 %v1256
  %v1321 = vpop.f32.mrf.mxu0
  %v1322 = vadd.f32 0.0, %v1321
  %v1323 = vpop.f32.mrf.mxu0
  %v1324 = vadd.f32 0.0, %v1323
  %1325 = vmatmul.bf16.gmra.mxu0 %v1259
  %v1326 = vpop.f32.mrf.mxu0
  %v1327 = vadd.f32 0.0, %v1326
  %v1328 = vpop.f32.mrf.mxu0
  %v1329 = vadd.f32 0.0, %v1328
  %1330 = vmatmul.bf16.gmra.mxu0 %v1262
  %v1331 = vpop.f32.mrf.mxu0
  %v1332 = vadd.f32 0.0, %v1331
  %v1333 = vpop.f32.mrf.mxu0
  %v1334 = vadd.f32 0.0, %v1333
  %1335 = vmatmul.bf16.gmra.mxu0 %v1265
  %v1336 = vpop.f32.mrf.mxu0
  %v1337 = vadd.f32 0.0, %v1336
  %v1338 = vpop.f32.mrf.mxu0
  %v1339 = vadd.f32 0.0, %v1338
  %1340 = vmatmul.bf16.gmra.mxu0 %v1268
  %v1341 = vpop.f32.mrf.mxu0
  %v1342 = vadd.f32 0.0, %v1341
  %v1343 = vpop.f32.mrf.mxu0
  %v1344 = vadd.f32 0.0, %v1343
  %1345 = vmatmul.bf16.gmra.mxu0 %v1271
  %v1346 = vpop.f32.mrf.mxu0
  %v1347 = vadd.f32 0.0, %v1346
  %v1348 = vpop.f32.mrf.mxu0
  %v1349 = vadd.f32 0.0, %v1348
  %1350 = vmatmul.bf16.gmra.mxu0 %v1274
  %v1351 = vpop.f32.mrf.mxu0
  %v1352 = vadd.f32 0.0, %v1351
  %v1353 = vpop.f32.mrf.mxu0
  %v1354 = vadd.f32 0.0, %v1353
  %1355 = vmatmul.bf16.gmra.mxu0 %v1277
  %v1356 = vpop.f32.mrf.mxu0
  %v1357 = vadd.f32 0.0, %v1356
  %v1358 = vpop.f32.mrf.mxu0
  %v1359 = vadd.f32 0.0, %v1358
  %1360 = vmatmul.bf16.gmra.mxu0 %v1280
  %v1361 = vpop.f32.mrf.mxu0
  %v1362 = vadd.f32 0.0, %v1361
  %v1363 = vpop.f32.mrf.mxu0
  %v1364 = vadd.f32 0.0, %v1363
  %1365 = vmatmul.bf16.gmra.mxu0 %v1283
  %v1366 = vpop.f32.mrf.mxu0
  %v1367 = vadd.f32 0.0, %v1366
  %v1368 = vpop.f32.mrf.mxu0
  %v1369 = vadd.f32 0.0, %v1368
  %1370 = vmatmul.bf16.gmra.mxu0 %v1286
  %v1371 = vpop.f32.mrf.mxu0
  %v1372 = vadd.f32 0.0, %v1371
  %v1373 = vpop.f32.mrf.mxu0
  %v1374 = vadd.f32 0.0, %v1373
  %1375 = vmatmul.bf16.gmra.mxu0 %v1289
  %v1376 = vpop.f32.mrf.mxu0
  %v1377 = vadd.f32 0.0, %v1376
  %v1378 = vpop.f32.mrf.mxu0
  %v1379 = vadd.f32 0.0, %v1378
  %1380 = vmatmul.bf16.gmra.mxu0 %v1292
  %v1381 = vpop.f32.mrf.mxu0
  %v1382 = vadd.f32 0.0, %v1381
  %v1383 = vpop.f32.mrf.mxu0
  %v1384 = vadd.f32 0.0, %v1383
  %1385 = vmatmul.bf16.gmra.mxu0 %v1295
  %v1386 = vpop.f32.mrf.mxu0
  %v1387 = vadd.f32 0.0, %v1386
  %v1388 = vpop.f32.mrf.mxu0
  %v1389 = vadd.f32 0.0, %v1388
  %1390 = vmatmul.bf16.gmra.mxu0 %v1298
  %v1391 = vpop.f32.mrf.mxu0
  %v1392 = vadd.f32 0.0, %v1391
  %v1393 = vpop.f32.mrf.mxu0
  %v1394 = vadd.f32 0.0, %v1393
  %1395 = vmatmul.bf16.gmra.mxu0 %v1301
  %v1396 = vpop.f32.mrf.mxu0
  %v1397 = vadd.f32 0.0, %v1396
  %v1398 = vpop.f32.mrf.mxu0
  %v1399 = vadd.f32 0.0, %v1398
  %1400 = vmatmul.bf16.gmra.mxu0 %v1304
  %v1401 = vpop.f32.mrf.mxu0
  %v1402 = vadd.f32 0.0, %v1401
  %v1403 = vpop.f32.mrf.mxu0
  %v1404 = vadd.f32 0.0, %v1403
  %1405 = vmatmul.bf16.gmra.mxu0 %v1307
  %v1406 = vpop.f32.mrf.mxu0
  %v1407 = vadd.f32 0.0, %v1406
  %v1408 = vpop.f32.mrf.mxu0
  %v1409 = vadd.f32 0.0, %v1408
  %1410 = vdwg.mxu0
  %v1411 = vadd.f32 %v1161, %v1322
  %v1412 = vadd.f32 %v1162, %v1324
  %v1413 = vadd.f32 %v1163, %v1327
  %v1414 = vadd.f32 %v1164, %v1329
  %v1415 = vadd.f32 %v1165, %v1332
  %v1416 = vadd.f32 %v1166, %v1334
  %v1417 = vadd.f32 %v1167, %v1337
  %v1418 = vadd.f32 %v1168, %v1339
  %v1419 = vadd.f32 %v1169, %v1342
  %v1420 = vadd.f32 %v1170, %v1344
  %v1421 = vadd.f32 %v1171, %v1347
  %v1422 = vadd.f32 %v1172, %v1349
  %v1423 = vadd.f32 %v1173, %v1352
  %v1424 = vadd.f32 %v1174, %v1354
  %v1425 = vadd.f32 %v1175, %v1357
  %v1426 = vadd.f32 %v1176, %v1359
  %v1427 = vadd.f32 %v1177, %v1362
  %v1428 = vadd.f32 %v1178, %v1364
  %v1429 = vadd.f32 %v1179, %v1367
  %v1430 = vadd.f32 %v1180, %v1369
  %v1431 = vadd.f32 %v1181, %v1372
  %v1432 = vadd.f32 %v1182, %v1374
  %v1433 = vadd.f32 %v1183, %v1377
  %v1434 = vadd.f32 %v1184, %v1379
  %v1435 = vadd.f32 %v1185, %v1382
  %v1436 = vadd.f32 %v1186, %v1384
  %v1437 = vadd.f32 %v1187, %v1387
  %v1438 = vadd.f32 %v1188, %v1389
  %v1439 = vadd.f32 %v1189, %v1392
  %v1440 = vadd.f32 %v1190, %v1394
  %v1441 = vadd.f32 %v1191, %v1397
  %v1442 = vadd.f32 %v1192, %v1399
  %v1443 = vadd.f32 %v1193, %v1402
  %v1444 = vadd.f32 %v1194, %v1404
  %v1445 = vadd.f32 %v1195, %v1407
  %v1446 = vadd.f32 %v1196, %v1409
  %s1447 = sadd.s32 %s15, 36
  %s1448 = scalar_lea.vmem %s0, %s1447
  %v1449 = vld [vmem:[%s1448] sm:$0xff]
  %v1450 = vld [vmem:[%s1448 + $0x8] sm:$0xff]
  %v1451 = vld [vmem:[%s1448 + $0x10] sm:$0xff]
  %v1452 = vld [vmem:[%s1448 + $0x18] sm:$0xff]
  %v1453 = vld [vmem:[%s1448 + $0x20] sm:$0xff]
  %v1454 = vld [vmem:[%s1448 + $0x28] sm:$0xff]
  %v1455 = vld [vmem:[%s1448 + $0x30] sm:$0xff]
  %v1456 = vld [vmem:[%s1448 + $0x38] sm:$0xff]
  %v1457 = vld [vmem:[%s1448 + $0x40] sm:$0xff]
  %v1458 = vld [vmem:[%s1448 + $0x48] sm:$0xff]
  %v1459 = vld [vmem:[%s1448 + $0x50] sm:$0xff]
  %v1460 = vld [vmem:[%s1448 + $0x58] sm:$0xff]
  %v1461 = vld [vmem:[%s1448 + $0x60] sm:$0xff]
  %v1462 = vld [vmem:[%s1448 + $0x68] sm:$0xff]
  %v1463 = vld [vmem:[%s1448 + $0x70] sm:$0xff]
  %v1464 = vld [vmem:[%s1448 + $0x78] sm:$0xff]
  %v1465 = vld [vmem:[%s1448 + $0x80] sm:$0xff]
  %v1466 = vld [vmem:[%s1448 + $0x88] sm:$0xff]
  %v1467 = vld [vmem:[%s1448 + $0x90] sm:$0xff]
  %v1468 = vld [vmem:[%s1448 + $0x98] sm:$0xff]
  %v1469 = vld [vmem:[%s1448 + $0xa0] sm:$0xff]
  %v1470 = vld [vmem:[%s1448 + $0xa8] sm:$0xff]
  %v1471 = vld [vmem:[%s1448 + $0xb0] sm:$0xff]
  %v1472 = vld [vmem:[%s1448 + $0xb8] sm:$0xff]
  %v1473 = vld [vmem:[%s1448 + $0xc0] sm:$0xff]
  %v1474 = vld [vmem:[%s1448 + $0xc8] sm:$0xff]
  %v1475 = vld [vmem:[%s1448 + $0xd0] sm:$0xff]
  %v1476 = vld [vmem:[%s1448 + $0xd8] sm:$0xff]
  %v1477 = vld [vmem:[%s1448 + $0xe0] sm:$0xff]
  %v1478 = vld [vmem:[%s1448 + $0xe8] sm:$0xff]
  %v1479 = vld [vmem:[%s1448 + $0xf0] sm:$0xff]
  %v1480 = vld [vmem:[%s1448 + $0xf8] sm:$0xff]
  %v1481 = vld [vmem:[%s1448 + $0x100] sm:$0xff]
  %v1482 = vld [vmem:[%s1448 + $0x108] sm:$0xff]
  %v1483 = vld [vmem:[%s1448 + $0x110] sm:$0xff]
  %v1484 = vld [vmem:[%s1448 + $0x118] sm:$0xff]
  %v1485 = vpack.c.bf16 %v1450, %v1449
  %v1486 = vpack.c.bf16 %v1452, %v1451
  %v1487 = vpack.c.bf16 %v1454, %v1453
  %v1488 = vpack.c.bf16 %v1456, %v1455
  %v1489 = vpack.c.bf16 %v1458, %v1457
  %v1490 = vpack.c.bf16 %v1460, %v1459
  %v1491 = vpack.c.bf16 %v1462, %v1461
  %v1492 = vpack.c.bf16 %v1464, %v1463
  %v1493 = vpack.c.bf16 %v1466, %v1465
  %v1494 = vpack.c.bf16 %v1468, %v1467
  %v1495 = vpack.c.bf16 %v1470, %v1469
  %v1496 = vpack.c.bf16 %v1472, %v1471
  %v1497 = vpack.c.bf16 %v1474, %v1473
  %v1498 = vpack.c.bf16 %v1476, %v1475
  %v1499 = vpack.c.bf16 %v1478, %v1477
  %v1500 = vpack.c.bf16 %v1480, %v1479
  %v1501 = vpack.c.bf16 %v1482, %v1481
  %v1502 = vpack.c.bf16 %v1484, %v1483
  %s1503 = scalar_lea.vmem %s1, 12
  %v1504 = vld [vmem:[%s1503] sm:$0x3]
  %v1506 = vsel %vm130, %v1485, 0
  %v1509 = vsel %vm130, %v1486, 0
  %v1512 = vsel %vm130, %v1487, 0
  %v1515 = vsel %vm130, %v1488, 0
  %v1518 = vsel %vm130, %v1489, 0
  %v1521 = vsel %vm130, %v1490, 0
  %v1524 = vsel %vm130, %v1491, 0
  %v1527 = vsel %vm130, %v1492, 0
  %v1530 = vsel %vm130, %v1493, 0
  %v1533 = vsel %vm130, %v1494, 0
  %v1536 = vsel %vm130, %v1495, 0
  %v1539 = vsel %vm130, %v1496, 0
  %v1542 = vsel %vm130, %v1497, 0
  %v1545 = vsel %vm130, %v1498, 0
  %v1548 = vsel %vm130, %v1499, 0
  %v1551 = vsel %vm130, %v1500, 0
  %v1554 = vsel %vm130, %v1501, 0
  %v1557 = vsel %vm130, %v1502, 0
  %v1560 = vand.u32 %v1504, %v188
  %1562 = vmatpush.bf16.msra.mxu0 0
  %1563 = vmatpush.bf16.msra.mxu0 0
  %1564 = vmatpush.bf16.msra.mxu0 0
  %1565 = vmatpush.bf16.msra.mxu0 0
  %1566 = vmatpush.bf16.msra.mxu0 0
  %1567 = vmatpush.bf16.msra.mxu0 0
  %1568 = vmatpush.bf16.msra.mxu0 0
  %1569 = vmatpush.bf16.msra.mxu0 %v1560
  %1570 = vmatmul.bf16.gmra.mxu0 %v1506
  %v1571 = vpop.f32.mrf.mxu0
  %v1572 = vadd.f32 0.0, %v1571
  %v1573 = vpop.f32.mrf.mxu0
  %v1574 = vadd.f32 0.0, %v1573
  %1575 = vmatmul.bf16.gmra.mxu0 %v1509
  %v1576 = vpop.f32.mrf.mxu0
  %v1577 = vadd.f32 0.0, %v1576
  %v1578 = vpop.f32.mrf.mxu0
  %v1579 = vadd.f32 0.0, %v1578
  %1580 = vmatmul.bf16.gmra.mxu0 %v1512
  %v1581 = vpop.f32.mrf.mxu0
  %v1582 = vadd.f32 0.0, %v1581
  %v1583 = vpop.f32.mrf.mxu0
  %v1584 = vadd.f32 0.0, %v1583
  %1585 = vmatmul.bf16.gmra.mxu0 %v1515
  %v1586 = vpop.f32.mrf.mxu0
  %v1587 = vadd.f32 0.0, %v1586
  %v1588 = vpop.f32.mrf.mxu0
  %v1589 = vadd.f32 0.0, %v1588
  %1590 = vmatmul.bf16.gmra.mxu0 %v1518
  %v1591 = vpop.f32.mrf.mxu0
  %v1592 = vadd.f32 0.0, %v1591
  %v1593 = vpop.f32.mrf.mxu0
  %v1594 = vadd.f32 0.0, %v1593
  %1595 = vmatmul.bf16.gmra.mxu0 %v1521
  %v1596 = vpop.f32.mrf.mxu0
  %v1597 = vadd.f32 0.0, %v1596
  %v1598 = vpop.f32.mrf.mxu0
  %v1599 = vadd.f32 0.0, %v1598
  %1600 = vmatmul.bf16.gmra.mxu0 %v1524
  %v1601 = vpop.f32.mrf.mxu0
  %v1602 = vadd.f32 0.0, %v1601
  %v1603 = vpop.f32.mrf.mxu0
  %v1604 = vadd.f32 0.0, %v1603
  %1605 = vmatmul.bf16.gmra.mxu0 %v1527
  %v1606 = vpop.f32.mrf.mxu0
  %v1607 = vadd.f32 0.0, %v1606
  %v1608 = vpop.f32.mrf.mxu0
  %v1609 = vadd.f32 0.0, %v1608
  %1610 = vmatmul.bf16.gmra.mxu0 %v1530
  %v1611 = vpop.f32.mrf.mxu0
  %v1612 = vadd.f32 0.0, %v1611
  %v1613 = vpop.f32.mrf.mxu0
  %v1614 = vadd.f32 0.0, %v1613
  %1615 = vmatmul.bf16.gmra.mxu0 %v1533
  %v1616 = vpop.f32.mrf.mxu0
  %v1617 = vadd.f32 0.0, %v1616
  %v1618 = vpop.f32.mrf.mxu0
  %v1619 = vadd.f32 0.0, %v1618
  %1620 = vmatmul.bf16.gmra.mxu0 %v1536
  %v1621 = vpop.f32.mrf.mxu0
  %v1622 = vadd.f32 0.0, %v1621
  %v1623 = vpop.f32.mrf.mxu0
  %v1624 = vadd.f32 0.0, %v1623
  %1625 = vmatmul.bf16.gmra.mxu0 %v1539
  %v1626 = vpop.f32.mrf.mxu0
  %v1627 = vadd.f32 0.0, %v1626
  %v1628 = vpop.f32.mrf.mxu0
  %v1629 = vadd.f32 0.0, %v1628
  %1630 = vmatmul.bf16.gmra.mxu0 %v1542
  %v1631 = vpop.f32.mrf.mxu0
  %v1632 = vadd.f32 0.0, %v1631
  %v1633 = vpop.f32.mrf.mxu0
  %v1634 = vadd.f32 0.0, %v1633
  %1635 = vmatmul.bf16.gmra.mxu0 %v1545
  %v1636 = vpop.f32.mrf.mxu0
  %v1637 = vadd.f32 0.0, %v1636
  %v1638 = vpop.f32.mrf.mxu0
  %v1639 = vadd.f32 0.0, %v1638
  %1640 = vmatmul.bf16.gmra.mxu0 %v1548
  %v1641 = vpop.f32.mrf.mxu0
  %v1642 = vadd.f32 0.0, %v1641
  %v1643 = vpop.f32.mrf.mxu0
  %v1644 = vadd.f32 0.0, %v1643
  %1645 = vmatmul.bf16.gmra.mxu0 %v1551
  %v1646 = vpop.f32.mrf.mxu0
  %v1647 = vadd.f32 0.0, %v1646
  %v1648 = vpop.f32.mrf.mxu0
  %v1649 = vadd.f32 0.0, %v1648
  %1650 = vmatmul.bf16.gmra.mxu0 %v1554
  %v1651 = vpop.f32.mrf.mxu0
  %v1652 = vadd.f32 0.0, %v1651
  %v1653 = vpop.f32.mrf.mxu0
  %v1654 = vadd.f32 0.0, %v1653
  %1655 = vmatmul.bf16.gmra.mxu0 %v1557
  %v1656 = vpop.f32.mrf.mxu0
  %v1657 = vadd.f32 0.0, %v1656
  %v1658 = vpop.f32.mrf.mxu0
  %v1659 = vadd.f32 0.0, %v1658
  %1660 = vdwg.mxu0
  %v1661 = vadd.f32 %v1411, %v1572
  %v1662 = vadd.f32 %v1412, %v1574
  %v1663 = vadd.f32 %v1413, %v1577
  %v1664 = vadd.f32 %v1414, %v1579
  %v1665 = vadd.f32 %v1415, %v1582
  %v1666 = vadd.f32 %v1416, %v1584
  %v1667 = vadd.f32 %v1417, %v1587
  %v1668 = vadd.f32 %v1418, %v1589
  %v1669 = vadd.f32 %v1419, %v1592
  %v1670 = vadd.f32 %v1420, %v1594
  %v1671 = vadd.f32 %v1421, %v1597
  %v1672 = vadd.f32 %v1422, %v1599
  %v1673 = vadd.f32 %v1423, %v1602
  %v1674 = vadd.f32 %v1424, %v1604
  %v1675 = vadd.f32 %v1425, %v1607
  %v1676 = vadd.f32 %v1426, %v1609
  %v1677 = vadd.f32 %v1427, %v1612
  %v1678 = vadd.f32 %v1428, %v1614
  %v1679 = vadd.f32 %v1429, %v1617
  %v1680 = vadd.f32 %v1430, %v1619
  %v1681 = vadd.f32 %v1431, %v1622
  %v1682 = vadd.f32 %v1432, %v1624
  %v1683 = vadd.f32 %v1433, %v1627
  %v1684 = vadd.f32 %v1434, %v1629
  %v1685 = vadd.f32 %v1435, %v1632
  %v1686 = vadd.f32 %v1436, %v1634
  %v1687 = vadd.f32 %v1437, %v1637
  %v1688 = vadd.f32 %v1438, %v1639
  %v1689 = vadd.f32 %v1439, %v1642
  %v1690 = vadd.f32 %v1440, %v1644
  %v1691 = vadd.f32 %v1441, %v1647
  %v1692 = vadd.f32 %v1442, %v1649
  %v1693 = vadd.f32 %v1443, %v1652
  %v1694 = vadd.f32 %v1444, %v1654
  %v1695 = vadd.f32 %v1445, %v1657
  %v1696 = vadd.f32 %v1446, %v1659
  %s1697 = sadd.s32 %s15, 37
  %s1698 = scalar_lea.vmem %s0, %s1697
  %v1699 = vld [vmem:[%s1698] sm:$0xff]
  %v1700 = vld [vmem:[%s1698 + $0x8] sm:$0xff]
  %v1701 = vld [vmem:[%s1698 + $0x10] sm:$0xff]
  %v1702 = vld [vmem:[%s1698 + $0x18] sm:$0xff]
  %v1703 = vld [vmem:[%s1698 + $0x20] sm:$0xff]
  %v1704 = vld [vmem:[%s1698 + $0x28] sm:$0xff]
  %v1705 = vld [vmem:[%s1698 + $0x30] sm:$0xff]
  %v1706 = vld [vmem:[%s1698 + $0x38] sm:$0xff]
  %v1707 = vld [vmem:[%s1698 + $0x40] sm:$0xff]
  %v1708 = vld [vmem:[%s1698 + $0x48] sm:$0xff]
  %v1709 = vld [vmem:[%s1698 + $0x50] sm:$0xff]
  %v1710 = vld [vmem:[%s1698 + $0x58] sm:$0xff]
  %v1711 = vld [vmem:[%s1698 + $0x60] sm:$0xff]
  %v1712 = vld [vmem:[%s1698 + $0x68] sm:$0xff]
  %v1713 = vld [vmem:[%s1698 + $0x70] sm:$0xff]
  %v1714 = vld [vmem:[%s1698 + $0x78] sm:$0xff]
  %v1715 = vld [vmem:[%s1698 + $0x80] sm:$0xff]
  %v1716 = vld [vmem:[%s1698 + $0x88] sm:$0xff]
  %v1717 = vld [vmem:[%s1698 + $0x90] sm:$0xff]
  %v1718 = vld [vmem:[%s1698 + $0x98] sm:$0xff]
  %v1719 = vld [vmem:[%s1698 + $0xa0] sm:$0xff]
  %v1720 = vld [vmem:[%s1698 + $0xa8] sm:$0xff]
  %v1721 = vld [vmem:[%s1698 + $0xb0] sm:$0xff]
  %v1722 = vld [vmem:[%s1698 + $0xb8] sm:$0xff]
  %v1723 = vld [vmem:[%s1698 + $0xc0] sm:$0xff]
  %v1724 = vld [vmem:[%s1698 + $0xc8] sm:$0xff]
  %v1725 = vld [vmem:[%s1698 + $0xd0] sm:$0xff]
  %v1726 = vld [vmem:[%s1698 + $0xd8] sm:$0xff]
  %v1727 = vld [vmem:[%s1698 + $0xe0] sm:$0xff]
  %v1728 = vld [vmem:[%s1698 + $0xe8] sm:$0xff]
  %v1729 = vld [vmem:[%s1698 + $0xf0] sm:$0xff]
  %v1730 = vld [vmem:[%s1698 + $0xf8] sm:$0xff]
  %v1731 = vld [vmem:[%s1698 + $0x100] sm:$0xff]
  %v1732 = vld [vmem:[%s1698 + $0x108] sm:$0xff]
  %v1733 = vld [vmem:[%s1698 + $0x110] sm:$0xff]
  %v1734 = vld [vmem:[%s1698 + $0x118] sm:$0xff]
  %v1735 = vpack.c.bf16 %v1700, %v1699
  %v1736 = vpack.c.bf16 %v1702, %v1701
  %v1737 = vpack.c.bf16 %v1704, %v1703
  %v1738 = vpack.c.bf16 %v1706, %v1705
  %v1739 = vpack.c.bf16 %v1708, %v1707
  %v1740 = vpack.c.bf16 %v1710, %v1709
  %v1741 = vpack.c.bf16 %v1712, %v1711
  %v1742 = vpack.c.bf16 %v1714, %v1713
  %v1743 = vpack.c.bf16 %v1716, %v1715
  %v1744 = vpack.c.bf16 %v1718, %v1717
  %v1745 = vpack.c.bf16 %v1720, %v1719
  %v1746 = vpack.c.bf16 %v1722, %v1721
  %v1747 = vpack.c.bf16 %v1724, %v1723
  %v1748 = vpack.c.bf16 %v1726, %v1725
  %v1749 = vpack.c.bf16 %v1728, %v1727
  %v1750 = vpack.c.bf16 %v1730, %v1729
  %v1751 = vpack.c.bf16 %v1732, %v1731
  %v1752 = vpack.c.bf16 %v1734, %v1733
  %s1753 = scalar_lea.vmem %s1, 14
  %v1754 = vld [vmem:[%s1753] sm:$0x3]
  %v1756 = vsel %vm130, %v1735, 0
  %v1759 = vsel %vm130, %v1736, 0
  %v1762 = vsel %vm130, %v1737, 0
  %v1765 = vsel %vm130, %v1738, 0
  %v1768 = vsel %vm130, %v1739, 0
  %v1771 = vsel %vm130, %v1740, 0
  %v1774 = vsel %vm130, %v1741, 0
  %v1777 = vsel %vm130, %v1742, 0
  %v1780 = vsel %vm130, %v1743, 0
  %v1783 = vsel %vm130, %v1744, 0
  %v1786 = vsel %vm130, %v1745, 0
  %v1789 = vsel %vm130, %v1746, 0
  %v1792 = vsel %vm130, %v1747, 0
  %v1795 = vsel %vm130, %v1748, 0
  %v1798 = vsel %vm130, %v1749, 0
  %v1801 = vsel %vm130, %v1750, 0
  %v1804 = vsel %vm130, %v1751, 0
  %v1807 = vsel %vm130, %v1752, 0
  %v1810 = vand.u32 %v1754, %v188
  %1812 = vmatpush.bf16.msra.mxu0 0
  %1813 = vmatpush.bf16.msra.mxu0 0
  %1814 = vmatpush.bf16.msra.mxu0 0
  %1815 = vmatpush.bf16.msra.mxu0 0
  %1816 = vmatpush.bf16.msra.mxu0 0
  %1817 = vmatpush.bf16.msra.mxu0 0
  %1818 = vmatpush.bf16.msra.mxu0 0
  %1819 = vmatpush.bf16.msra.mxu0 %v1810
  %1820 = vmatmul.bf16.gmra.mxu0 %v1756
  %v1821 = vpop.f32.mrf.mxu0
  %v1822 = vadd.f32 0.0, %v1821
  %v1823 = vpop.f32.mrf.mxu0
  %v1824 = vadd.f32 0.0, %v1823
  %1825 = vmatmul.bf16.gmra.mxu0 %v1759
  %v1826 = vpop.f32.mrf.mxu0
  %v1827 = vadd.f32 0.0, %v1826
  %v1828 = vpop.f32.mrf.mxu0
  %v1829 = vadd.f32 0.0, %v1828
  %1830 = vmatmul.bf16.gmra.mxu0 %v1762
  %v1831 = vpop.f32.mrf.mxu0
  %v1832 = vadd.f32 0.0, %v1831
  %v1833 = vpop.f32.mrf.mxu0
  %v1834 = vadd.f32 0.0, %v1833
  %1835 = vmatmul.bf16.gmra.mxu0 %v1765
  %v1836 = vpop.f32.mrf.mxu0
  %v1837 = vadd.f32 0.0, %v1836
  %v1838 = vpop.f32.mrf.mxu0
  %v1839 = vadd.f32 0.0, %v1838
  %1840 = vmatmul.bf16.gmra.mxu0 %v1768
  %v1841 = vpop.f32.mrf.mxu0
  %v1842 = vadd.f32 0.0, %v1841
  %v1843 = vpop.f32.mrf.mxu0
  %v1844 = vadd.f32 0.0, %v1843
  %1845 = vmatmul.bf16.gmra.mxu0 %v1771
  %v1846 = vpop.f32.mrf.mxu0
  %v1847 = vadd.f32 0.0, %v1846
  %v1848 = vpop.f32.mrf.mxu0
  %v1849 = vadd.f32 0.0, %v1848
  %1850 = vmatmul.bf16.gmra.mxu0 %v1774
  %v1851 = vpop.f32.mrf.mxu0
  %v1852 = vadd.f32 0.0, %v1851
  %v1853 = vpop.f32.mrf.mxu0
  %v1854 = vadd.f32 0.0, %v1853
  %1855 = vmatmul.bf16.gmra.mxu0 %v1777
  %v1856 = vpop.f32.mrf.mxu0
  %v1857 = vadd.f32 0.0, %v1856
  %v1858 = vpop.f32.mrf.mxu0
  %v1859 = vadd.f32 0.0, %v1858
  %1860 = vmatmul.bf16.gmra.mxu0 %v1780
  %v1861 = vpop.f32.mrf.mxu0
  %v1862 = vadd.f32 0.0, %v1861
  %v1863 = vpop.f32.mrf.mxu0
  %v1864 = vadd.f32 0.0, %v1863
  %1865 = vmatmul.bf16.gmra.mxu0 %v1783
  %v1866 = vpop.f32.mrf.mxu0
  %v1867 = vadd.f32 0.0, %v1866
  %v1868 = vpop.f32.mrf.mxu0
  %v1869 = vadd.f32 0.0, %v1868
  %1870 = vmatmul.bf16.gmra.mxu0 %v1786
  %v1871 = vpop.f32.mrf.mxu0
  %v1872 = vadd.f32 0.0, %v1871
  %v1873 = vpop.f32.mrf.mxu0
  %v1874 = vadd.f32 0.0, %v1873
  %1875 = vmatmul.bf16.gmra.mxu0 %v1789
  %v1876 = vpop.f32.mrf.mxu0
  %v1877 = vadd.f32 0.0, %v1876
  %v1878 = vpop.f32.mrf.mxu0
  %v1879 = vadd.f32 0.0, %v1878
  %1880 = vmatmul.bf16.gmra.mxu0 %v1792
  %v1881 = vpop.f32.mrf.mxu0
  %v1882 = vadd.f32 0.0, %v1881
  %v1883 = vpop.f32.mrf.mxu0
  %v1884 = vadd.f32 0.0, %v1883
  %1885 = vmatmul.bf16.gmra.mxu0 %v1795
  %v1886 = vpop.f32.mrf.mxu0
  %v1887 = vadd.f32 0.0, %v1886
  %v1888 = vpop.f32.mrf.mxu0
  %v1889 = vadd.f32 0.0, %v1888
  %1890 = vmatmul.bf16.gmra.mxu0 %v1798
  %v1891 = vpop.f32.mrf.mxu0
  %v1892 = vadd.f32 0.0, %v1891
  %v1893 = vpop.f32.mrf.mxu0
  %v1894 = vadd.f32 0.0, %v1893
  %1895 = vmatmul.bf16.gmra.mxu0 %v1801
  %v1896 = vpop.f32.mrf.mxu0
  %v1897 = vadd.f32 0.0, %v1896
  %v1898 = vpop.f32.mrf.mxu0
  %v1899 = vadd.f32 0.0, %v1898
  %1900 = vmatmul.bf16.gmra.mxu0 %v1804
  %v1901 = vpop.f32.mrf.mxu0
  %v1902 = vadd.f32 0.0, %v1901
  %v1903 = vpop.f32.mrf.mxu0
  %v1904 = vadd.f32 0.0, %v1903
  %1905 = vmatmul.bf16.gmra.mxu0 %v1807
  %v1906 = vpop.f32.mrf.mxu0
  %v1907 = vadd.f32 0.0, %v1906
  %v1908 = vpop.f32.mrf.mxu0
  %v1909 = vadd.f32 0.0, %v1908
  %1910 = vdwg.mxu0
  %v1911 = vadd.f32 %v1661, %v1822
  %v1912 = vadd.f32 %v1662, %v1824
  %v1913 = vadd.f32 %v1663, %v1827
  %v1914 = vadd.f32 %v1664, %v1829
  %v1915 = vadd.f32 %v1665, %v1832
  %v1916 = vadd.f32 %v1666, %v1834
  %v1917 = vadd.f32 %v1667, %v1837
  %v1918 = vadd.f32 %v1668, %v1839
  %v1919 = vadd.f32 %v1669, %v1842
  %v1920 = vadd.f32 %v1670, %v1844
  %v1921 = vadd.f32 %v1671, %v1847
  %v1922 = vadd.f32 %v1672, %v1849
  %v1923 = vadd.f32 %v1673, %v1852
  %v1924 = vadd.f32 %v1674, %v1854
  %v1925 = vadd.f32 %v1675, %v1857
  %v1926 = vadd.f32 %v1676, %v1859
  %v1927 = vadd.f32 %v1677, %v1862
  %v1928 = vadd.f32 %v1678, %v1864
  %v1929 = vadd.f32 %v1679, %v1867
  %v1930 = vadd.f32 %v1680, %v1869
  %v1931 = vadd.f32 %v1681, %v1872
  %v1932 = vadd.f32 %v1682, %v1874
  %v1933 = vadd.f32 %v1683, %v1877
  %v1934 = vadd.f32 %v1684, %v1879
  %v1935 = vadd.f32 %v1685, %v1882
  %v1936 = vadd.f32 %v1686, %v1884
  %v1937 = vadd.f32 %v1687, %v1887
  %v1938 = vadd.f32 %v1688, %v1889
  %v1939 = vadd.f32 %v1689, %v1892
  %v1940 = vadd.f32 %v1690, %v1894
  %v1941 = vadd.f32 %v1691, %v1897
  %v1942 = vadd.f32 %v1692, %v1899
  %v1943 = vadd.f32 %v1693, %v1902
  %v1944 = vadd.f32 %v1694, %v1904
  %v1945 = vadd.f32 %v1695, %v1907
  %v1946 = vadd.f32 %v1696, %v1909
  %s1947 = sadd.s32 %s15, 38
  %s1948 = scalar_lea.vmem %s0, %s1947
  %v1949 = vld [vmem:[%s1948] sm:$0xff]
  %v1950 = vld [vmem:[%s1948 + $0x8] sm:$0xff]
  %v1951 = vld [vmem:[%s1948 + $0x10] sm:$0xff]
  %v1952 = vld [vmem:[%s1948 + $0x18] sm:$0xff]
  %v1953 = vld [vmem:[%s1948 + $0x20] sm:$0xff]
  %v1954 = vld [vmem:[%s1948 + $0x28] sm:$0xff]
  %v1955 = vld [vmem:[%s1948 + $0x30] sm:$0xff]
  %v1956 = vld [vmem:[%s1948 + $0x38] sm:$0xff]
  %v1957 = vld [vmem:[%s1948 + $0x40] sm:$0xff]
  %v1958 = vld [vmem:[%s1948 + $0x48] sm:$0xff]
  %v1959 = vld [vmem:[%s1948 + $0x50] sm:$0xff]
  %v1960 = vld [vmem:[%s1948 + $0x58] sm:$0xff]
  %v1961 = vld [vmem:[%s1948 + $0x60] sm:$0xff]
  %v1962 = vld [vmem:[%s1948 + $0x68] sm:$0xff]
  %v1963 = vld [vmem:[%s1948 + $0x70] sm:$0xff]
  %v1964 = vld [vmem:[%s1948 + $0x78] sm:$0xff]
  %v1965 = vld [vmem:[%s1948 + $0x80] sm:$0xff]
  %v1966 = vld [vmem:[%s1948 + $0x88] sm:$0xff]
  %v1967 = vld [vmem:[%s1948 + $0x90] sm:$0xff]
  %v1968 = vld [vmem:[%s1948 + $0x98] sm:$0xff]
  %v1969 = vld [vmem:[%s1948 + $0xa0] sm:$0xff]
  %v1970 = vld [vmem:[%s1948 + $0xa8] sm:$0xff]
  %v1971 = vld [vmem:[%s1948 + $0xb0] sm:$0xff]
  %v1972 = vld [vmem:[%s1948 + $0xb8] sm:$0xff]
  %v1973 = vld [vmem:[%s1948 + $0xc0] sm:$0xff]
  %v1974 = vld [vmem:[%s1948 + $0xc8] sm:$0xff]
  %v1975 = vld [vmem:[%s1948 + $0xd0] sm:$0xff]
  %v1976 = vld [vmem:[%s1948 + $0xd8] sm:$0xff]
  %v1977 = vld [vmem:[%s1948 + $0xe0] sm:$0xff]
  %v1978 = vld [vmem:[%s1948 + $0xe8] sm:$0xff]
  %v1979 = vld [vmem:[%s1948 + $0xf0] sm:$0xff]
  %v1980 = vld [vmem:[%s1948 + $0xf8] sm:$0xff]
  %v1981 = vld [vmem:[%s1948 + $0x100] sm:$0xff]
  %v1982 = vld [vmem:[%s1948 + $0x108] sm:$0xff]
  %v1983 = vld [vmem:[%s1948 + $0x110] sm:$0xff]
  %v1984 = vld [vmem:[%s1948 + $0x118] sm:$0xff]
  %v1985 = vpack.c.bf16 %v1950, %v1949
  %v1986 = vpack.c.bf16 %v1952, %v1951
  %v1987 = vpack.c.bf16 %v1954, %v1953
  %v1988 = vpack.c.bf16 %v1956, %v1955
  %v1989 = vpack.c.bf16 %v1958, %v1957
  %v1990 = vpack.c.bf16 %v1960, %v1959
  %v1991 = vpack.c.bf16 %v1962, %v1961
  %v1992 = vpack.c.bf16 %v1964, %v1963
  %v1993 = vpack.c.bf16 %v1966, %v1965
  %v1994 = vpack.c.bf16 %v1968, %v1967
  %v1995 = vpack.c.bf16 %v1970, %v1969
  %v1996 = vpack.c.bf16 %v1972, %v1971
  %v1997 = vpack.c.bf16 %v1974, %v1973
  %v1998 = vpack.c.bf16 %v1976, %v1975
  %v1999 = vpack.c.bf16 %v1978, %v1977
  %v2000 = vpack.c.bf16 %v1980, %v1979
  %v2001 = vpack.c.bf16 %v1982, %v1981
  %v2002 = vpack.c.bf16 %v1984, %v1983
  %s2003 = scalar_lea.vmem %s1, 16
  %v2004 = vld [vmem:[%s2003] sm:$0x3]
  %v2006 = vsel %vm130, %v1985, 0
  %v2009 = vsel %vm130, %v1986, 0
  %v2012 = vsel %vm130, %v1987, 0
  %v2015 = vsel %vm130, %v1988, 0
  %v2018 = vsel %vm130, %v1989, 0
  %v2021 = vsel %vm130, %v1990, 0
  %v2024 = vsel %vm130, %v1991, 0
  %v2027 = vsel %vm130, %v1992, 0
  %v2030 = vsel %vm130, %v1993, 0
  %v2033 = vsel %vm130, %v1994, 0
  %v2036 = vsel %vm130, %v1995, 0
  %v2039 = vsel %vm130, %v1996, 0
  %v2042 = vsel %vm130, %v1997, 0
  %v2045 = vsel %vm130, %v1998, 0
  %v2048 = vsel %vm130, %v1999, 0
  %v2051 = vsel %vm130, %v2000, 0
  %v2054 = vsel %vm130, %v2001, 0
  %v2057 = vsel %vm130, %v2002, 0
  %v2060 = vand.u32 %v2004, %v188
  %2062 = vmatpush.bf16.msra.mxu0 0
  %2063 = vmatpush.bf16.msra.mxu0 0
  %2064 = vmatpush.bf16.msra.mxu0 0
  %2065 = vmatpush.bf16.msra.mxu0 0
  %2066 = vmatpush.bf16.msra.mxu0 0
  %2067 = vmatpush.bf16.msra.mxu0 0
  %2068 = vmatpush.bf16.msra.mxu0 0
  %2069 = vmatpush.bf16.msra.mxu0 %v2060
  %2070 = vmatmul.bf16.gmra.mxu0 %v2006
  %v2071 = vpop.f32.mrf.mxu0
  %v2072 = vadd.f32 0.0, %v2071
  %v2073 = vpop.f32.mrf.mxu0
  %v2074 = vadd.f32 0.0, %v2073
  %2075 = vmatmul.bf16.gmra.mxu0 %v2009
  %v2076 = vpop.f32.mrf.mxu0
  %v2077 = vadd.f32 0.0, %v2076
  %v2078 = vpop.f32.mrf.mxu0
  %v2079 = vadd.f32 0.0, %v2078
  %2080 = vmatmul.bf16.gmra.mxu0 %v2012
  %v2081 = vpop.f32.mrf.mxu0
  %v2082 = vadd.f32 0.0, %v2081
  %v2083 = vpop.f32.mrf.mxu0
  %v2084 = vadd.f32 0.0, %v2083
  %2085 = vmatmul.bf16.gmra.mxu0 %v2015
  %v2086 = vpop.f32.mrf.mxu0
  %v2087 = vadd.f32 0.0, %v2086
  %v2088 = vpop.f32.mrf.mxu0
  %v2089 = vadd.f32 0.0, %v2088
  %2090 = vmatmul.bf16.gmra.mxu0 %v2018
  %v2091 = vpop.f32.mrf.mxu0
  %v2092 = vadd.f32 0.0, %v2091
  %v2093 = vpop.f32.mrf.mxu0
  %v2094 = vadd.f32 0.0, %v2093
  %2095 = vmatmul.bf16.gmra.mxu0 %v2021
  %v2096 = vpop.f32.mrf.mxu0
  %v2097 = vadd.f32 0.0, %v2096
  %v2098 = vpop.f32.mrf.mxu0
  %v2099 = vadd.f32 0.0, %v2098
  %2100 = vmatmul.bf16.gmra.mxu0 %v2024
  %v2101 = vpop.f32.mrf.mxu0
  %v2102 = vadd.f32 0.0, %v2101
  %v2103 = vpop.f32.mrf.mxu0
  %v2104 = vadd.f32 0.0, %v2103
  %2105 = vmatmul.bf16.gmra.mxu0 %v2027
  %v2106 = vpop.f32.mrf.mxu0
  %v2107 = vadd.f32 0.0, %v2106
  %v2108 = vpop.f32.mrf.mxu0
  %v2109 = vadd.f32 0.0, %v2108
  %2110 = vmatmul.bf16.gmra.mxu0 %v2030
  %v2111 = vpop.f32.mrf.mxu0
  %v2112 = vadd.f32 0.0, %v2111
  %v2113 = vpop.f32.mrf.mxu0
  %v2114 = vadd.f32 0.0, %v2113
  %2115 = vmatmul.bf16.gmra.mxu0 %v2033
  %v2116 = vpop.f32.mrf.mxu0
  %v2117 = vadd.f32 0.0, %v2116
  %v2118 = vpop.f32.mrf.mxu0
  %v2119 = vadd.f32 0.0, %v2118
  %2120 = vmatmul.bf16.gmra.mxu0 %v2036
  %v2121 = vpop.f32.mrf.mxu0
  %v2122 = vadd.f32 0.0, %v2121
  %v2123 = vpop.f32.mrf.mxu0
  %v2124 = vadd.f32 0.0, %v2123
  %2125 = vmatmul.bf16.gmra.mxu0 %v2039
  %v2126 = vpop.f32.mrf.mxu0
  %v2127 = vadd.f32 0.0, %v2126
  %v2128 = vpop.f32.mrf.mxu0
  %v2129 = vadd.f32 0.0, %v2128
  %2130 = vmatmul.bf16.gmra.mxu0 %v2042
  %v2131 = vpop.f32.mrf.mxu0
  %v2132 = vadd.f32 0.0, %v2131
  %v2133 = vpop.f32.mrf.mxu0
  %v2134 = vadd.f32 0.0, %v2133
  %2135 = vmatmul.bf16.gmra.mxu0 %v2045
  %v2136 = vpop.f32.mrf.mxu0
  %v2137 = vadd.f32 0.0, %v2136
  %v2138 = vpop.f32.mrf.mxu0
  %v2139 = vadd.f32 0.0, %v2138
  %2140 = vmatmul.bf16.gmra.mxu0 %v2048
  %v2141 = vpop.f32.mrf.mxu0
  %v2142 = vadd.f32 0.0, %v2141
  %v2143 = vpop.f32.mrf.mxu0
  %v2144 = vadd.f32 0.0, %v2143
  %2145 = vmatmul.bf16.gmra.mxu0 %v2051
  %v2146 = vpop.f32.mrf.mxu0
  %v2147 = vadd.f32 0.0, %v2146
  %v2148 = vpop.f32.mrf.mxu0
  %v2149 = vadd.f32 0.0, %v2148
  %2150 = vmatmul.bf16.gmra.mxu0 %v2054
  %v2151 = vpop.f32.mrf.mxu0
  %v2152 = vadd.f32 0.0, %v2151
  %v2153 = vpop.f32.mrf.mxu0
  %v2154 = vadd.f32 0.0, %v2153
  %2155 = vmatmul.bf16.gmra.mxu0 %v2057
  %v2156 = vpop.f32.mrf.mxu0
  %v2157 = vadd.f32 0.0, %v2156
  %v2158 = vpop.f32.mrf.mxu0
  %v2159 = vadd.f32 0.0, %v2158
  %2160 = vdwg.mxu0
  %v2161 = vadd.f32 %v1911, %v2072
  %v2162 = vadd.f32 %v1912, %v2074
  %v2163 = vadd.f32 %v1913, %v2077
  %v2164 = vadd.f32 %v1914, %v2079
  %v2165 = vadd.f32 %v1915, %v2082
  %v2166 = vadd.f32 %v1916, %v2084
  %v2167 = vadd.f32 %v1917, %v2087
  %v2168 = vadd.f32 %v1918, %v2089
  %v2169 = vadd.f32 %v1919, %v2092
  %v2170 = vadd.f32 %v1920, %v2094
  %v2171 = vadd.f32 %v1921, %v2097
  %v2172 = vadd.f32 %v1922, %v2099
  %v2173 = vadd.f32 %v1923, %v2102
  %v2174 = vadd.f32 %v1924, %v2104
  %v2175 = vadd.f32 %v1925, %v2107
  %v2176 = vadd.f32 %v1926, %v2109
  %v2177 = vadd.f32 %v1927, %v2112
  %v2178 = vadd.f32 %v1928, %v2114
  %v2179 = vadd.f32 %v1929, %v2117
  %v2180 = vadd.f32 %v1930, %v2119
  %v2181 = vadd.f32 %v1931, %v2122
  %v2182 = vadd.f32 %v1932, %v2124
  %v2183 = vadd.f32 %v1933, %v2127
  %v2184 = vadd.f32 %v1934, %v2129
  %v2185 = vadd.f32 %v1935, %v2132
  %v2186 = vadd.f32 %v1936, %v2134
  %v2187 = vadd.f32 %v1937, %v2137
  %v2188 = vadd.f32 %v1938, %v2139
  %v2189 = vadd.f32 %v1939, %v2142
  %v2190 = vadd.f32 %v1940, %v2144
  %v2191 = vadd.f32 %v1941, %v2147
  %v2192 = vadd.f32 %v1942, %v2149
  %v2193 = vadd.f32 %v1943, %v2152
  %v2194 = vadd.f32 %v1944, %v2154
  %v2195 = vadd.f32 %v1945, %v2157
  %v2196 = vadd.f32 %v1946, %v2159
  %v2197 = vld [vmem:[%s2] sm:$0x1]
  %v2199 = vperm.slane %v2197, 0
  %v2201 = vadd.f32 %v2161, %v2199
  %v2202 = vadd.f32 %v2162, %v2199
  %v2203 = vadd.f32 %v2163, %v2199
  %v2204 = vadd.f32 %v2164, %v2199
  %v2205 = vadd.f32 %v2165, %v2199
  %v2206 = vadd.f32 %v2166, %v2199
  %v2207 = vadd.f32 %v2167, %v2199
  %v2208 = vadd.f32 %v2168, %v2199
  %v2209 = vadd.f32 %v2169, %v2199
  %v2210 = vadd.f32 %v2170, %v2199
  %v2211 = vadd.f32 %v2171, %v2199
  %v2212 = vadd.f32 %v2172, %v2199
  %v2213 = vadd.f32 %v2173, %v2199
  %v2214 = vadd.f32 %v2174, %v2199
  %v2215 = vadd.f32 %v2175, %v2199
  %v2216 = vadd.f32 %v2176, %v2199
  %v2217 = vadd.f32 %v2177, %v2199
  %v2218 = vadd.f32 %v2178, %v2199
  %v2219 = vadd.f32 %v2179, %v2199
  %v2220 = vadd.f32 %v2180, %v2199
  %v2221 = vadd.f32 %v2181, %v2199
  %v2222 = vadd.f32 %v2182, %v2199
  %v2223 = vadd.f32 %v2183, %v2199
  %v2224 = vadd.f32 %v2184, %v2199
  %v2225 = vadd.f32 %v2185, %v2199
  %v2226 = vadd.f32 %v2186, %v2199
  %v2227 = vadd.f32 %v2187, %v2199
  %v2228 = vadd.f32 %v2188, %v2199
  %v2229 = vadd.f32 %v2189, %v2199
  %v2230 = vadd.f32 %v2190, %v2199
  %v2231 = vadd.f32 %v2191, %v2199
  %v2232 = vadd.f32 %v2192, %v2199
  %v2233 = vadd.f32 %v2193, %v2199
  %v2234 = vadd.f32 %v2194, %v2199
  %v2235 = vadd.f32 %v2195, %v2199
  %v2236 = vadd.f32 %v2196, %v2199
  %v2237 = vmax.f32 %v2201, 0.0
  %v2238 = vmax.f32 %v2202, 0.0
  %v2239 = vmax.f32 %v2203, 0.0
  %v2240 = vmax.f32 %v2204, 0.0
  %v2241 = vmax.f32 %v2205, 0.0
  %v2242 = vmax.f32 %v2206, 0.0
  %v2243 = vmax.f32 %v2207, 0.0
  %v2244 = vmax.f32 %v2208, 0.0
  %v2245 = vmax.f32 %v2209, 0.0
  %v2246 = vmax.f32 %v2210, 0.0
  %v2247 = vmax.f32 %v2211, 0.0
  %v2248 = vmax.f32 %v2212, 0.0
  %v2249 = vmax.f32 %v2213, 0.0
  %v2250 = vmax.f32 %v2214, 0.0
  %v2251 = vmax.f32 %v2215, 0.0
  %v2252 = vmax.f32 %v2216, 0.0
  %v2253 = vmax.f32 %v2217, 0.0
  %v2254 = vmax.f32 %v2218, 0.0
  %v2255 = vmax.f32 %v2219, 0.0
  %v2256 = vmax.f32 %v2220, 0.0
  %v2257 = vmax.f32 %v2221, 0.0
  %v2258 = vmax.f32 %v2222, 0.0
  %v2259 = vmax.f32 %v2223, 0.0
  %v2260 = vmax.f32 %v2224, 0.0
  %v2261 = vmax.f32 %v2225, 0.0
  %v2262 = vmax.f32 %v2226, 0.0
  %v2263 = vmax.f32 %v2227, 0.0
  %v2264 = vmax.f32 %v2228, 0.0
  %v2265 = vmax.f32 %v2229, 0.0
  %v2266 = vmax.f32 %v2230, 0.0
  %v2267 = vmax.f32 %v2231, 0.0
  %v2268 = vmax.f32 %v2232, 0.0
  %v2269 = vmax.f32 %v2233, 0.0
  %v2270 = vmax.f32 %v2234, 0.0
  %v2271 = vmax.f32 %v2235, 0.0
  %v2272 = vmax.f32 %v2236, 0.0
  %vm2273 = vcmask 261120
  %2274 = vst.msk [vmem:[%s3] sm:$0xff] %vm2273, %v2237
  %2275 = vst.msk [vmem:[%s3 + $0x8] sm:$0xff] %vm2273, %v2238
  %2276 = vst.msk [vmem:[%s3 + $0x10] sm:$0xff] %vm2273, %v2239
  %2277 = vst.msk [vmem:[%s3 + $0x18] sm:$0xff] %vm2273, %v2240
  %2278 = vst.msk [vmem:[%s3 + $0x20] sm:$0xff] %vm2273, %v2241
  %2279 = vst.msk [vmem:[%s3 + $0x28] sm:$0xff] %vm2273, %v2242
  %2280 = vst.msk [vmem:[%s3 + $0x30] sm:$0xff] %vm2273, %v2243
  %2281 = vst.msk [vmem:[%s3 + $0x38] sm:$0xff] %vm2273, %v2244
  %2282 = vst.msk [vmem:[%s3 + $0x40] sm:$0xff] %vm2273, %v2245
  %2283 = vst.msk [vmem:[%s3 + $0x48] sm:$0xff] %vm2273, %v2246
  %2284 = vst.msk [vmem:[%s3 + $0x50] sm:$0xff] %vm2273, %v2247
  %2285 = vst.msk [vmem:[%s3 + $0x58] sm:$0xff] %vm2273, %v2248
  %2286 = vst.msk [vmem:[%s3 + $0x60] sm:$0xff] %vm2273, %v2249
  %2287 = vst.msk [vmem:[%s3 + $0x68] sm:$0xff] %vm2273, %v2250
  %2288 = vst.msk [vmem:[%s3 + $0x70] sm:$0xff] %vm2273, %v2251
  %2289 = vst.msk [vmem:[%s3 + $0x78] sm:$0xff] %vm2273, %v2252
  %2290 = vst.msk [vmem:[%s3 + $0x80] sm:$0xff] %vm2273, %v2253
  %2291 = vst.msk [vmem:[%s3 + $0x88] sm:$0xff] %vm2273, %v2254
  %2292 = vst.msk [vmem:[%s3 + $0x90] sm:$0xff] %vm2273, %v2255
  %2293 = vst.msk [vmem:[%s3 + $0x98] sm:$0xff] %vm2273, %v2256
  %2294 = vst.msk [vmem:[%s3 + $0xa0] sm:$0xff] %vm2273, %v2257
  %2295 = vst.msk [vmem:[%s3 + $0xa8] sm:$0xff] %vm2273, %v2258
  %2296 = vst.msk [vmem:[%s3 + $0xb0] sm:$0xff] %vm2273, %v2259
  %2297 = vst.msk [vmem:[%s3 + $0xb8] sm:$0xff] %vm2273, %v2260
  %2298 = vst.msk [vmem:[%s3 + $0xc0] sm:$0xff] %vm2273, %v2261
  %2299 = vst.msk [vmem:[%s3 + $0xc8] sm:$0xff] %vm2273, %v2262
  %2300 = vst.msk [vmem:[%s3 + $0xd0] sm:$0xff] %vm2273, %v2263
  %2301 = vst.msk [vmem:[%s3 + $0xd8] sm:$0xff] %vm2273, %v2264
  %2302 = vst.msk [vmem:[%s3 + $0xe0] sm:$0xff] %vm2273, %v2265
  %2303 = vst.msk [vmem:[%s3 + $0xe8] sm:$0xff] %vm2273, %v2266
  %2304 = vst.msk [vmem:[%s3 + $0xf0] sm:$0xff] %vm2273, %v2267
  %2305 = vst.msk [vmem:[%s3 + $0xf8] sm:$0xff] %vm2273, %v2268
  %2306 = vst.msk [vmem:[%s3 + $0x100] sm:$0xff] %vm2273, %v2269
  %2307 = vst.msk [vmem:[%s3 + $0x108] sm:$0xff] %vm2273, %v2270
  %2308 = vst.msk [vmem:[%s3 + $0x110] sm:$0xff] %vm2273, %v2271
  %2309 = vst.msk [vmem:[%s3 + $0x118] sm:$0xff] %vm2273, %v2272
  // Predicated region
  $region14: #{ssd_wrapper_forward.3} parent=0 // pred_check
    _
  $region15: #{ssd_wrapper_forward.3} parent=0 // pred_check_branch
    %2311 = sbr.rel (0) target = $region17
  $region16: #{ssd_wrapper_forward.3} parent=0 // pred_region
    _
  $region17: #{ssd_wrapper_forward.3} parent=0 // pred_fallthru
    _
  // Predicated region
  $region18: #{ssd_wrapper_forward.3} parent=0 // pred_check
    _
  $region19: #{ssd_wrapper_forward.3} parent=0 // pred_check_branch
    %2313 = sbr.rel (0) target = $region21
  $region20: #{ssd_wrapper_forward.3} parent=0 // pred_region
    _
  $region21: #{ssd_wrapper_forward.3} parent=0 // pred_fallthru
    _

// kernel: ssd_wrapper_forward.4
$region0: #{ssd_wrapper_forward.4}
  #allocation0 [shape = 'u32[]', space=smem, size = 0x4, offset = 0x4, fixed_abs, tag = 'smem constant byte address 0x4 - core index']
  #allocation1 [shape = 'u32[72,128]{1,0:T(1,128)}', space=vmem, size = 0x9000, scoped, tag = 'internal scratch']
  %s0 = inlined_call_operand.vmem [shape: f32[328,32], index: 0, kind: input, shape index: {}]
  %s1 = inlined_call_operand.vmem [shape: bf16[9,32,32], index: 1, kind: input, shape index: {}]
  %s2 = inlined_call_operand.vmem [shape: f32[1,32], index: 2, kind: input, shape index: {}]
  %s3 = inlined_call_operand.vmem [shape: f32[288,32], index: 3, kind: output, shape index: {}]
  %s4 = sld [smem:[#allocation0]]
  $region22: #{ssd_wrapper_forward.4} parent=0
    _
  %s6 = ssub.s32 1, %s4
  %s7 = scalar_select 0, %s6, %s4
  // Predicated region
  $region2: #{ssd_wrapper_forward.4} parent=0 // pred_check
    _
  $region3: #{ssd_wrapper_forward.4} parent=0 // pred_check_branch
    %9 = sbr.rel (0) target = $region5
  $region4: #{ssd_wrapper_forward.4} parent=0 // pred_region
    _
  $region5: #{ssd_wrapper_forward.4} parent=0 // pred_fallthru
    _
  // Predicated region
  $region6: #{ssd_wrapper_forward.4} parent=0 // pred_check
    _
  $region7: #{ssd_wrapper_forward.4} parent=0 // pred_check_branch
    %11 = sbr.rel (0) target = $region9
  $region8: #{ssd_wrapper_forward.4} parent=0 // pred_region
    _
  $region9: #{ssd_wrapper_forward.4} parent=0 // pred_fallthru
    _
  // Predicated region
  $region10: #{ssd_wrapper_forward.4} parent=0 // pred_check
    _
  $region11: #{ssd_wrapper_forward.4} parent=0 // pred_check_branch
    %13 = sbr.rel (0) target = $region13
  $region12: #{ssd_wrapper_forward.4} parent=0 // pred_region
    _
  $region13: #{ssd_wrapper_forward.4} parent=0 // pred_fallthru
    _
  %s15 = smul.u32 0, 288
  %s16 = scalar_lea.vmem %s0, %s15
  %v17 = vld [vmem:[%s16] sm:$0xff]
  %v18 = vld [vmem:[%s16 + $0x8] sm:$0xff]
  %v19 = vld [vmem:[%s16 + $0x10] sm:$0xff]
  %v20 = vld [vmem:[%s16 + $0x18] sm:$0xff]
  %v21 = vld [vmem:[%s16 + $0x20] sm:$0xff]
  %v22 = vld [vmem:[%s16 + $0x28] sm:$0xff]
  %v23 = vld [vmem:[%s16 + $0x30] sm:$0xff]
  %v24 = vld [vmem:[%s16 + $0x38] sm:$0xff]
  %v25 = vld [vmem:[%s16 + $0x40] sm:$0xff]
  %v26 = vld [vmem:[%s16 + $0x48] sm:$0xff]
  %v27 = vld [vmem:[%s16 + $0x50] sm:$0xff]
  %v28 = vld [vmem:[%s16 + $0x58] sm:$0xff]
  %v29 = vld [vmem:[%s16 + $0x60] sm:$0xff]
  %v30 = vld [vmem:[%s16 + $0x68] sm:$0xff]
  %v31 = vld [vmem:[%s16 + $0x70] sm:$0xff]
  %v32 = vld [vmem:[%s16 + $0x78] sm:$0xff]
  %v33 = vld [vmem:[%s16 + $0x80] sm:$0xff]
  %v34 = vld [vmem:[%s16 + $0x88] sm:$0xff]
  %v35 = vld [vmem:[%s16 + $0x90] sm:$0xff]
  %v36 = vld [vmem:[%s16 + $0x98] sm:$0xff]
  %v37 = vld [vmem:[%s16 + $0xa0] sm:$0xff]
  %v38 = vld [vmem:[%s16 + $0xa8] sm:$0xff]
  %v39 = vld [vmem:[%s16 + $0xb0] sm:$0xff]
  %v40 = vld [vmem:[%s16 + $0xb8] sm:$0xff]
  %v41 = vld [vmem:[%s16 + $0xc0] sm:$0xff]
  %v42 = vld [vmem:[%s16 + $0xc8] sm:$0xff]
  %v43 = vld [vmem:[%s16 + $0xd0] sm:$0xff]
  %v44 = vld [vmem:[%s16 + $0xd8] sm:$0xff]
  %v45 = vld [vmem:[%s16 + $0xe0] sm:$0xff]
  %v46 = vld [vmem:[%s16 + $0xe8] sm:$0xff]
  %v47 = vld [vmem:[%s16 + $0xf0] sm:$0xff]
  %v48 = vld [vmem:[%s16 + $0xf8] sm:$0xff]
  %v49 = vld [vmem:[%s16 + $0x100] sm:$0xff]
  %v50 = vld [vmem:[%s16 + $0x108] sm:$0xff]
  %v51 = vld [vmem:[%s16 + $0x110] sm:$0xff]
  %v52 = vld [vmem:[%s16 + $0x118] sm:$0xff]
  %v53 = vpack.c.bf16 %v18, %v17
  %v54 = vpack.c.bf16 %v20, %v19
  %v55 = vpack.c.bf16 %v22, %v21
  %v56 = vpack.c.bf16 %v24, %v23
  %v57 = vpack.c.bf16 %v26, %v25
  %v58 = vpack.c.bf16 %v28, %v27
  %v59 = vpack.c.bf16 %v30, %v29
  %v60 = vpack.c.bf16 %v32, %v31
  %v61 = vpack.c.bf16 %v34, %v33
  %v62 = vpack.c.bf16 %v36, %v35
  %v63 = vpack.c.bf16 %v38, %v37
  %v64 = vpack.c.bf16 %v40, %v39
  %v65 = vpack.c.bf16 %v42, %v41
  %v66 = vpack.c.bf16 %v44, %v43
  %v67 = vpack.c.bf16 %v46, %v45
  %v68 = vpack.c.bf16 %v48, %v47
  %v69 = vpack.c.bf16 %v50, %v49
  %v70 = vpack.c.bf16 %v52, %v51
  %v71 = vld [vmem:[%s1] sm:$0xf]
  %v72 = vld [vmem:[%s1 + $0x4] sm:$0xf]
  %v73 = vld [vmem:[%s1 + $0x8] sm:$0xf]
  %v74 = vld [vmem:[%s1 + $0xc] sm:$0xf]
  %s75 = sadd.s32 %s15, 1
  %s76 = scalar_lea.vmem %s0, %s75
  %v77 = vld [vmem:[%s76] sm:$0xff]
  %v78 = vld [vmem:[%s76 + $0x8] sm:$0xff]
  %v79 = vld [vmem:[%s76 + $0x10] sm:$0xff]
  %v80 = vld [vmem:[%s76 + $0x18] sm:$0xff]
  %v81 = vld [vmem:[%s76 + $0x20] sm:$0xff]
  %v82 = vld [vmem:[%s76 + $0x28] sm:$0xff]
  %v83 = vld [vmem:[%s76 + $0x30] sm:$0xff]
  %v84 = vld [vmem:[%s76 + $0x38] sm:$0xff]
  %v85 = vld [vmem:[%s76 + $0x40] sm:$0xff]
  %v86 = vld [vmem:[%s76 + $0x48] sm:$0xff]
  %v87 = vld [vmem:[%s76 + $0x50] sm:$0xff]
  %v88 = vld [vmem:[%s76 + $0x58] sm:$0xff]
  %v89 = vld [vmem:[%s76 + $0x60] sm:$0xff]
  %v90 = vld [vmem:[%s76 + $0x68] sm:$0xff]
  %v91 = vld [vmem:[%s76 + $0x70] sm:$0xff]
  %v92 = vld [vmem:[%s76 + $0x78] sm:$0xff]
  %v93 = vld [vmem:[%s76 + $0x80] sm:$0xff]
  %v94 = vld [vmem:[%s76 + $0x88] sm:$0xff]
  %v95 = vld [vmem:[%s76 + $0x90] sm:$0xff]
  %v96 = vld [vmem:[%s76 + $0x98] sm:$0xff]
  %v97 = vld [vmem:[%s76 + $0xa0] sm:$0xff]
  %v98 = vld [vmem:[%s76 + $0xa8] sm:$0xff]
  %v99 = vld [vmem:[%s76 + $0xb0] sm:$0xff]
  %v100 = vld [vmem:[%s76 + $0xb8] sm:$0xff]
  %v101 = vld [vmem:[%s76 + $0xc0] sm:$0xff]
  %v102 = vld [vmem:[%s76 + $0xc8] sm:$0xff]
  %v103 = vld [vmem:[%s76 + $0xd0] sm:$0xff]
  %v104 = vld [vmem:[%s76 + $0xd8] sm:$0xff]
  %v105 = vld [vmem:[%s76 + $0xe0] sm:$0xff]
  %v106 = vld [vmem:[%s76 + $0xe8] sm:$0xff]
  %v107 = vld [vmem:[%s76 + $0xf0] sm:$0xff]
  %v108 = vld [vmem:[%s76 + $0xf8] sm:$0xff]
  %v109 = vld [vmem:[%s76 + $0x100] sm:$0xff]
  %v110 = vld [vmem:[%s76 + $0x108] sm:$0xff]
  %v111 = vld [vmem:[%s76 + $0x110] sm:$0xff]
  %v112 = vld [vmem:[%s76 + $0x118] sm:$0xff]
  %v113 = vpack.c.bf16 %v78, %v77
  %v114 = vpack.c.bf16 %v80, %v79
  %v115 = vpack.c.bf16 %v82, %v81
  %v116 = vpack.c.bf16 %v84, %v83
  %v117 = vpack.c.bf16 %v86, %v85
  %v118 = vpack.c.bf16 %v88, %v87
  %v119 = vpack.c.bf16 %v90, %v89
  %v120 = vpack.c.bf16 %v92, %v91
  %v121 = vpack.c.bf16 %v94, %v93
  %v122 = vpack.c.bf16 %v96, %v95
  %v123 = vpack.c.bf16 %v98, %v97
  %v124 = vpack.c.bf16 %v100, %v99
  %v125 = vpack.c.bf16 %v102, %v101
  %v126 = vpack.c.bf16 %v104, %v103
  %v127 = vpack.c.bf16 %v106, %v105
  %v128 = vpack.c.bf16 %v108, %v107
  %v129 = vpack.c.bf16 %v110, %v109
  %v130 = vpack.c.bf16 %v112, %v111
  %s131 = scalar_lea.vmem %s1, 16
  %v132 = vld [vmem:[%s131] sm:$0xf]
  %v133 = vld [vmem:[%s131 + $0x4] sm:$0xf]
  %v134 = vld [vmem:[%s131 + $0x8] sm:$0xf]
  %v135 = vld [vmem:[%s131 + $0xc] sm:$0xf]
  %v140 = vunpack.c.l.b16 %v132
  %v141 = vunpack.c.l.b16 %v133
  %v142 = vunpack.c.l.b16 %v134
  %v143 = vunpack.c.l.b16 %v135
  %v144 = vpack.c.b16 %v141, %v140
  %v145 = vpack.c.b16 %v143, %v142
  %vm148 = vcmask 261120
  %v150 = vsel %vm148, %v113, 0
  %v153 = vsel %vm148, %v114, 0
  %v156 = vsel %vm148, %v115, 0
  %v159 = vsel %vm148, %v116, 0
  %v162 = vsel %vm148, %v117, 0
  %v165 = vsel %vm148, %v118, 0
  %v168 = vsel %vm148, %v119, 0
  %v171 = vsel %vm148, %v120, 0
  %v174 = vsel %vm148, %v121, 0
  %v177 = vsel %vm148, %v122, 0
  %v180 = vsel %vm148, %v123, 0
  %v183 = vsel %vm148, %v124, 0
  %v186 = vsel %vm148, %v125, 0
  %v189 = vsel %vm148, %v126, 0
  %v192 = vsel %vm148, %v127, 0
  %v195 = vsel %vm148, %v128, 0
  %v198 = vsel %vm148, %v129, 0
  %v201 = vsel %vm148, %v130, 0
  %203 = vmatpush.bf16.msra.mxu0 0
  %204 = vmatpush.bf16.msra.mxu0 0
  %205 = vmatpush.bf16.msra.mxu0 0
  %206 = vmatpush.bf16.msra.mxu0 0
  %207 = vmatpush.bf16.msra.mxu0 0
  %208 = vmatpush.bf16.msra.mxu0 0
  %209 = vmatpush.bf16.msra.mxu0 %v145
  %210 = vmatpush.bf16.msra.mxu0 %v144
  %211 = vmatmul.bf16.gmra.mxu0 %v150
  %v212 = vpop.f32.mrf.mxu0
  %v213 = vadd.f32 0.0, %v212
  %v214 = vpop.f32.mrf.mxu0
  %v215 = vadd.f32 0.0, %v214
  %216 = vmatmul.bf16.gmra.mxu0 %v153
  %v217 = vpop.f32.mrf.mxu0
  %v218 = vadd.f32 0.0, %v217
  %v219 = vpop.f32.mrf.mxu0
  %v220 = vadd.f32 0.0, %v219
  %221 = vmatmul.bf16.gmra.mxu0 %v156
  %v222 = vpop.f32.mrf.mxu0
  %v223 = vadd.f32 0.0, %v222
  %v224 = vpop.f32.mrf.mxu0
  %v225 = vadd.f32 0.0, %v224
  %226 = vmatmul.bf16.gmra.mxu0 %v159
  %v227 = vpop.f32.mrf.mxu0
  %v228 = vadd.f32 0.0, %v227
  %v229 = vpop.f32.mrf.mxu0
  %v230 = vadd.f32 0.0, %v229
  %231 = vmatmul.bf16.gmra.mxu0 %v162
  %v232 = vpop.f32.mrf.mxu0
  %v233 = vadd.f32 0.0, %v232
  %v234 = vpop.f32.mrf.mxu0
  %v235 = vadd.f32 0.0, %v234
  %236 = vmatmul.bf16.gmra.mxu0 %v165
  %v237 = vpop.f32.mrf.mxu0
  %v238 = vadd.f32 0.0, %v237
  %v239 = vpop.f32.mrf.mxu0
  %v240 = vadd.f32 0.0, %v239
  %241 = vmatmul.bf16.gmra.mxu0 %v168
  %v242 = vpop.f32.mrf.mxu0
  %v243 = vadd.f32 0.0, %v242
  %v244 = vpop.f32.mrf.mxu0
  %v245 = vadd.f32 0.0, %v244
  %246 = vmatmul.bf16.gmra.mxu0 %v171
  %v247 = vpop.f32.mrf.mxu0
  %v248 = vadd.f32 0.0, %v247
  %v249 = vpop.f32.mrf.mxu0
  %v250 = vadd.f32 0.0, %v249
  %251 = vmatmul.bf16.gmra.mxu0 %v174
  %v252 = vpop.f32.mrf.mxu0
  %v253 = vadd.f32 0.0, %v252
  %v254 = vpop.f32.mrf.mxu0
  %v255 = vadd.f32 0.0, %v254
  %256 = vmatmul.bf16.gmra.mxu0 %v177
  %v257 = vpop.f32.mrf.mxu0
  %v258 = vadd.f32 0.0, %v257
  %v259 = vpop.f32.mrf.mxu0
  %v260 = vadd.f32 0.0, %v259
  %261 = vmatmul.bf16.gmra.mxu0 %v180
  %v262 = vpop.f32.mrf.mxu0
  %v263 = vadd.f32 0.0, %v262
  %v264 = vpop.f32.mrf.mxu0
  %v265 = vadd.f32 0.0, %v264
  %266 = vmatmul.bf16.gmra.mxu0 %v183
  %v267 = vpop.f32.mrf.mxu0
  %v268 = vadd.f32 0.0, %v267
  %v269 = vpop.f32.mrf.mxu0
  %v270 = vadd.f32 0.0, %v269
  %271 = vmatmul.bf16.gmra.mxu0 %v186
  %v272 = vpop.f32.mrf.mxu0
  %v273 = vadd.f32 0.0, %v272
  %v274 = vpop.f32.mrf.mxu0
  %v275 = vadd.f32 0.0, %v274
  %276 = vmatmul.bf16.gmra.mxu0 %v189
  %v277 = vpop.f32.mrf.mxu0
  %v278 = vadd.f32 0.0, %v277
  %v279 = vpop.f32.mrf.mxu0
  %v280 = vadd.f32 0.0, %v279
  %281 = vmatmul.bf16.gmra.mxu0 %v192
  %v282 = vpop.f32.mrf.mxu0
  %v283 = vadd.f32 0.0, %v282
  %v284 = vpop.f32.mrf.mxu0
  %v285 = vadd.f32 0.0, %v284
  %286 = vmatmul.bf16.gmra.mxu0 %v195
  %v287 = vpop.f32.mrf.mxu0
  %v288 = vadd.f32 0.0, %v287
  %v289 = vpop.f32.mrf.mxu0
  %v290 = vadd.f32 0.0, %v289
  %291 = vmatmul.bf16.gmra.mxu0 %v198
  %v292 = vpop.f32.mrf.mxu0
  %v293 = vadd.f32 0.0, %v292
  %v294 = vpop.f32.mrf.mxu0
  %v295 = vadd.f32 0.0, %v294
  %296 = vmatmul.bf16.gmra.mxu0 %v201
  %v297 = vpop.f32.mrf.mxu0
  %v298 = vadd.f32 0.0, %v297
  %v299 = vpop.f32.mrf.mxu0
  %v300 = vadd.f32 0.0, %v299
  %301 = vdwg.mxu0
  %v306 = vunpack.c.l.b16 %v71
  %v307 = vunpack.c.l.b16 %v72
  %v308 = vunpack.c.l.b16 %v73
  %v309 = vunpack.c.l.b16 %v74
  %v310 = vpack.c.b16 %v307, %v306
  %v311 = vpack.c.b16 %v309, %v308
  %v315 = vsel %vm148, %v53, 0
  %v318 = vsel %vm148, %v54, 0
  %v321 = vsel %vm148, %v55, 0
  %v324 = vsel %vm148, %v56, 0
  %v327 = vsel %vm148, %v57, 0
  %v330 = vsel %vm148, %v58, 0
  %v333 = vsel %vm148, %v59, 0
  %v336 = vsel %vm148, %v60, 0
  %v339 = vsel %vm148, %v61, 0
  %v342 = vsel %vm148, %v62, 0
  %v345 = vsel %vm148, %v63, 0
  %v348 = vsel %vm148, %v64, 0
  %v351 = vsel %vm148, %v65, 0
  %v354 = vsel %vm148, %v66, 0
  %v357 = vsel %vm148, %v67, 0
  %v360 = vsel %vm148, %v68, 0
  %v363 = vsel %vm148, %v69, 0
  %v366 = vsel %vm148, %v70, 0
  %368 = vmatpush.bf16.msra.mxu0 0
  %369 = vmatpush.bf16.msra.mxu0 0
  %370 = vmatpush.bf16.msra.mxu0 0
  %371 = vmatpush.bf16.msra.mxu0 0
  %372 = vmatpush.bf16.msra.mxu0 0
  %373 = vmatpush.bf16.msra.mxu0 0
  %374 = vmatpush.bf16.msra.mxu0 %v311
  %375 = vmatpush.bf16.msra.mxu0 %v310
  %376 = vmatmul.bf16.gmra.mxu0 %v315
  %v377 = vpop.f32.mrf.mxu0
  %v378 = vadd.f32 %v213, %v377
  %v379 = vpop.f32.mrf.mxu0
  %v380 = vadd.f32 %v215, %v379
  %381 = vmatmul.bf16.gmra.mxu0 %v318
  %v382 = vpop.f32.mrf.mxu0
  %v383 = vadd.f32 %v218, %v382
  %v384 = vpop.f32.mrf.mxu0
  %v385 = vadd.f32 %v220, %v384
  %386 = vmatmul.bf16.gmra.mxu0 %v321
  %v387 = vpop.f32.mrf.mxu0
  %v388 = vadd.f32 %v223, %v387
  %v389 = vpop.f32.mrf.mxu0
  %v390 = vadd.f32 %v225, %v389
  %391 = vmatmul.bf16.gmra.mxu0 %v324
  %v392 = vpop.f32.mrf.mxu0
  %v393 = vadd.f32 %v228, %v392
  %v394 = vpop.f32.mrf.mxu0
  %v395 = vadd.f32 %v230, %v394
  %396 = vmatmul.bf16.gmra.mxu0 %v327
  %v397 = vpop.f32.mrf.mxu0
  %v398 = vadd.f32 %v233, %v397
  %v399 = vpop.f32.mrf.mxu0
  %v400 = vadd.f32 %v235, %v399
  %401 = vmatmul.bf16.gmra.mxu0 %v330
  %v402 = vpop.f32.mrf.mxu0
  %v403 = vadd.f32 %v238, %v402
  %v404 = vpop.f32.mrf.mxu0
  %v405 = vadd.f32 %v240, %v404
  %406 = vmatmul.bf16.gmra.mxu0 %v333
  %v407 = vpop.f32.mrf.mxu0
  %v408 = vadd.f32 %v243, %v407
  %v409 = vpop.f32.mrf.mxu0
  %v410 = vadd.f32 %v245, %v409
  %411 = vmatmul.bf16.gmra.mxu0 %v336
  %v412 = vpop.f32.mrf.mxu0
  %v413 = vadd.f32 %v248, %v412
  %v414 = vpop.f32.mrf.mxu0
  %v415 = vadd.f32 %v250, %v414
  %416 = vmatmul.bf16.gmra.mxu0 %v339
  %v417 = vpop.f32.mrf.mxu0
  %v418 = vadd.f32 %v253, %v417
  %v419 = vpop.f32.mrf.mxu0
  %v420 = vadd.f32 %v255, %v419
  %421 = vmatmul.bf16.gmra.mxu0 %v342
  %v422 = vpop.f32.mrf.mxu0
  %v423 = vadd.f32 %v258, %v422
  %v424 = vpop.f32.mrf.mxu0
  %v425 = vadd.f32 %v260, %v424
  %426 = vmatmul.bf16.gmra.mxu0 %v345
  %v427 = vpop.f32.mrf.mxu0
  %v428 = vadd.f32 %v263, %v427
  %v429 = vpop.f32.mrf.mxu0
  %v430 = vadd.f32 %v265, %v429
  %431 = vmatmul.bf16.gmra.mxu0 %v348
  %v432 = vpop.f32.mrf.mxu0
  %v433 = vadd.f32 %v268, %v432
  %v434 = vpop.f32.mrf.mxu0
  %v435 = vadd.f32 %v270, %v434
  %436 = vmatmul.bf16.gmra.mxu0 %v351
  %v437 = vpop.f32.mrf.mxu0
  %v438 = vadd.f32 %v273, %v437
  %v439 = vpop.f32.mrf.mxu0
  %v440 = vadd.f32 %v275, %v439
  %441 = vmatmul.bf16.gmra.mxu0 %v354
  %v442 = vpop.f32.mrf.mxu0
  %v443 = vadd.f32 %v278, %v442
  %v444 = vpop.f32.mrf.mxu0
  %v445 = vadd.f32 %v280, %v444
  %446 = vmatmul.bf16.gmra.mxu0 %v357
  %v447 = vpop.f32.mrf.mxu0
  %v448 = vadd.f32 %v283, %v447
  %v449 = vpop.f32.mrf.mxu0
  %v450 = vadd.f32 %v285, %v449
  %451 = vmatmul.bf16.gmra.mxu0 %v360
  %v452 = vpop.f32.mrf.mxu0
  %v453 = vadd.f32 %v288, %v452
  %v454 = vpop.f32.mrf.mxu0
  %v455 = vadd.f32 %v290, %v454
  %456 = vmatmul.bf16.gmra.mxu0 %v363
  %v457 = vpop.f32.mrf.mxu0
  %v458 = vadd.f32 %v293, %v457
  %v459 = vpop.f32.mrf.mxu0
  %v460 = vadd.f32 %v295, %v459
  %461 = vmatmul.bf16.gmra.mxu0 %v366
  %v462 = vpop.f32.mrf.mxu0
  %v463 = vadd.f32 %v298, %v462
  %v464 = vpop.f32.mrf.mxu0
  %v465 = vadd.f32 %v300, %v464
  %466 = vdwg.mxu0
  %s467 = sadd.s32 %s15, 2
  %s468 = scalar_lea.vmem %s0, %s467
  %v469 = vld [vmem:[%s468] sm:$0xff]
  %v470 = vld [vmem:[%s468 + $0x8] sm:$0xff]
  %v471 = vld [vmem:[%s468 + $0x10] sm:$0xff]
  %v472 = vld [vmem:[%s468 + $0x18] sm:$0xff]
  %v473 = vld [vmem:[%s468 + $0x20] sm:$0xff]
  %v474 = vld [vmem:[%s468 + $0x28] sm:$0xff]
  %v475 = vld [vmem:[%s468 + $0x30] sm:$0xff]
  %v476 = vld [vmem:[%s468 + $0x38] sm:$0xff]
  %v477 = vld [vmem:[%s468 + $0x40] sm:$0xff]
  %v478 = vld [vmem:[%s468 + $0x48] sm:$0xff]
  %v479 = vld [vmem:[%s468 + $0x50] sm:$0xff]
  %v480 = vld [vmem:[%s468 + $0x58] sm:$0xff]
  %v481 = vld [vmem:[%s468 + $0x60] sm:$0xff]
  %v482 = vld [vmem:[%s468 + $0x68] sm:$0xff]
  %v483 = vld [vmem:[%s468 + $0x70] sm:$0xff]
  %v484 = vld [vmem:[%s468 + $0x78] sm:$0xff]
  %v485 = vld [vmem:[%s468 + $0x80] sm:$0xff]
  %v486 = vld [vmem:[%s468 + $0x88] sm:$0xff]
  %v487 = vld [vmem:[%s468 + $0x90] sm:$0xff]
  %v488 = vld [vmem:[%s468 + $0x98] sm:$0xff]
  %v489 = vld [vmem:[%s468 + $0xa0] sm:$0xff]
  %v490 = vld [vmem:[%s468 + $0xa8] sm:$0xff]
  %v491 = vld [vmem:[%s468 + $0xb0] sm:$0xff]
  %v492 = vld [vmem:[%s468 + $0xb8] sm:$0xff]
  %v493 = vld [vmem:[%s468 + $0xc0] sm:$0xff]
  %v494 = vld [vmem:[%s468 + $0xc8] sm:$0xff]
  %v495 = vld [vmem:[%s468 + $0xd0] sm:$0xff]
  %v496 = vld [vmem:[%s468 + $0xd8] sm:$0xff]
  %v497 = vld [vmem:[%s468 + $0xe0] sm:$0xff]
  %v498 = vld [vmem:[%s468 + $0xe8] sm:$0xff]
  %v499 = vld [vmem:[%s468 + $0xf0] sm:$0xff]
  %v500 = vld [vmem:[%s468 + $0xf8] sm:$0xff]
  %v501 = vld [vmem:[%s468 + $0x100] sm:$0xff]
  %v502 = vld [vmem:[%s468 + $0x108] sm:$0xff]
  %v503 = vld [vmem:[%s468 + $0x110] sm:$0xff]
  %v504 = vld [vmem:[%s468 + $0x118] sm:$0xff]
  %v505 = vpack.c.bf16 %v470, %v469
  %v506 = vpack.c.bf16 %v472, %v471
  %v507 = vpack.c.bf16 %v474, %v473
  %v508 = vpack.c.bf16 %v476, %v475
  %v509 = vpack.c.bf16 %v478, %v477
  %v510 = vpack.c.bf16 %v480, %v479
  %v511 = vpack.c.bf16 %v482, %v481
  %v512 = vpack.c.bf16 %v484, %v483
  %v513 = vpack.c.bf16 %v486, %v485
  %v514 = vpack.c.bf16 %v488, %v487
  %v515 = vpack.c.bf16 %v490, %v489
  %v516 = vpack.c.bf16 %v492, %v491
  %v517 = vpack.c.bf16 %v494, %v493
  %v518 = vpack.c.bf16 %v496, %v495
  %v519 = vpack.c.bf16 %v498, %v497
  %v520 = vpack.c.bf16 %v500, %v499
  %v521 = vpack.c.bf16 %v502, %v501
  %v522 = vpack.c.bf16 %v504, %v503
  %s523 = scalar_lea.vmem %s1, 32
  %v524 = vld [vmem:[%s523] sm:$0xf]
  %v525 = vld [vmem:[%s523 + $0x4] sm:$0xf]
  %v526 = vld [vmem:[%s523 + $0x8] sm:$0xf]
  %v527 = vld [vmem:[%s523 + $0xc] sm:$0xf]
  %v532 = vunpack.c.l.b16 %v524
  %v533 = vunpack.c.l.b16 %v525
  %v534 = vunpack.c.l.b16 %v526
  %v535 = vunpack.c.l.b16 %v527
  %v536 = vpack.c.b16 %v533, %v532
  %v537 = vpack.c.b16 %v535, %v534
  %v541 = vsel %vm148, %v505, 0
  %v544 = vsel %vm148, %v506, 0
  %v547 = vsel %vm148, %v507, 0
  %v550 = vsel %vm148, %v508, 0
  %v553 = vsel %vm148, %v509, 0
  %v556 = vsel %vm148, %v510, 0
  %v559 = vsel %vm148, %v511, 0
  %v562 = vsel %vm148, %v512, 0
  %v565 = vsel %vm148, %v513, 0
  %v568 = vsel %vm148, %v514, 0
  %v571 = vsel %vm148, %v515, 0
  %v574 = vsel %vm148, %v516, 0
  %v577 = vsel %vm148, %v517, 0
  %v580 = vsel %vm148, %v518, 0
  %v583 = vsel %vm148, %v519, 0
  %v586 = vsel %vm148, %v520, 0
  %v589 = vsel %vm148, %v521, 0
  %v592 = vsel %vm148, %v522, 0
  %594 = vmatpush.bf16.msra.mxu0 0
  %595 = vmatpush.bf16.msra.mxu0 0
  %596 = vmatpush.bf16.msra.mxu0 0
  %597 = vmatpush.bf16.msra.mxu0 0
  %598 = vmatpush.bf16.msra.mxu0 0
  %599 = vmatpush.bf16.msra.mxu0 0
  %600 = vmatpush.bf16.msra.mxu0 %v537
  %601 = vmatpush.bf16.msra.mxu0 %v536
  %602 = vmatmul.bf16.gmra.mxu0 %v541
  %v603 = vpop.f32.mrf.mxu0
  %v604 = vadd.f32 0.0, %v603
  %v605 = vpop.f32.mrf.mxu0
  %v606 = vadd.f32 0.0, %v605
  %607 = vmatmul.bf16.gmra.mxu0 %v544
  %v608 = vpop.f32.mrf.mxu0
  %v609 = vadd.f32 0.0, %v608
  %v610 = vpop.f32.mrf.mxu0
  %v611 = vadd.f32 0.0, %v610
  %612 = vmatmul.bf16.gmra.mxu0 %v547
  %v613 = vpop.f32.mrf.mxu0
  %v614 = vadd.f32 0.0, %v613
  %v615 = vpop.f32.mrf.mxu0
  %v616 = vadd.f32 0.0, %v615
  %617 = vmatmul.bf16.gmra.mxu0 %v550
  %v618 = vpop.f32.mrf.mxu0
  %v619 = vadd.f32 0.0, %v618
  %v620 = vpop.f32.mrf.mxu0
  %v621 = vadd.f32 0.0, %v620
  %622 = vmatmul.bf16.gmra.mxu0 %v553
  %v623 = vpop.f32.mrf.mxu0
  %v624 = vadd.f32 0.0, %v623
  %v625 = vpop.f32.mrf.mxu0
  %v626 = vadd.f32 0.0, %v625
  %627 = vmatmul.bf16.gmra.mxu0 %v556
  %v628 = vpop.f32.mrf.mxu0
  %v629 = vadd.f32 0.0, %v628
  %v630 = vpop.f32.mrf.mxu0
  %v631 = vadd.f32 0.0, %v630
  %632 = vmatmul.bf16.gmra.mxu0 %v559
  %v633 = vpop.f32.mrf.mxu0
  %v634 = vadd.f32 0.0, %v633
  %v635 = vpop.f32.mrf.mxu0
  %v636 = vadd.f32 0.0, %v635
  %637 = vmatmul.bf16.gmra.mxu0 %v562
  %v638 = vpop.f32.mrf.mxu0
  %v639 = vadd.f32 0.0, %v638
  %v640 = vpop.f32.mrf.mxu0
  %v641 = vadd.f32 0.0, %v640
  %642 = vmatmul.bf16.gmra.mxu0 %v565
  %v643 = vpop.f32.mrf.mxu0
  %v644 = vadd.f32 0.0, %v643
  %v645 = vpop.f32.mrf.mxu0
  %v646 = vadd.f32 0.0, %v645
  %647 = vmatmul.bf16.gmra.mxu0 %v568
  %v648 = vpop.f32.mrf.mxu0
  %v649 = vadd.f32 0.0, %v648
  %v650 = vpop.f32.mrf.mxu0
  %v651 = vadd.f32 0.0, %v650
  %652 = vmatmul.bf16.gmra.mxu0 %v571
  %v653 = vpop.f32.mrf.mxu0
  %v654 = vadd.f32 0.0, %v653
  %v655 = vpop.f32.mrf.mxu0
  %v656 = vadd.f32 0.0, %v655
  %657 = vmatmul.bf16.gmra.mxu0 %v574
  %v658 = vpop.f32.mrf.mxu0
  %v659 = vadd.f32 0.0, %v658
  %v660 = vpop.f32.mrf.mxu0
  %v661 = vadd.f32 0.0, %v660
  %662 = vmatmul.bf16.gmra.mxu0 %v577
  %v663 = vpop.f32.mrf.mxu0
  %v664 = vadd.f32 0.0, %v663
  %v665 = vpop.f32.mrf.mxu0
  %v666 = vadd.f32 0.0, %v665
  %667 = vmatmul.bf16.gmra.mxu0 %v580
  %v668 = vpop.f32.mrf.mxu0
  %v669 = vadd.f32 0.0, %v668
  %v670 = vpop.f32.mrf.mxu0
  %v671 = vadd.f32 0.0, %v670
  %672 = vmatmul.bf16.gmra.mxu0 %v583
  %v673 = vpop.f32.mrf.mxu0
  %v674 = vadd.f32 0.0, %v673
  %v675 = vpop.f32.mrf.mxu0
  %v676 = vadd.f32 0.0, %v675
  %677 = vmatmul.bf16.gmra.mxu0 %v586
  %v678 = vpop.f32.mrf.mxu0
  %v679 = vadd.f32 0.0, %v678
  %v680 = vpop.f32.mrf.mxu0
  %v681 = vadd.f32 0.0, %v680
  %682 = vmatmul.bf16.gmra.mxu0 %v589
  %v683 = vpop.f32.mrf.mxu0
  %v684 = vadd.f32 0.0, %v683
  %v685 = vpop.f32.mrf.mxu0
  %v686 = vadd.f32 0.0, %v685
  %687 = vmatmul.bf16.gmra.mxu0 %v592
  %v688 = vpop.f32.mrf.mxu0
  %v689 = vadd.f32 0.0, %v688
  %v690 = vpop.f32.mrf.mxu0
  %v691 = vadd.f32 0.0, %v690
  %692 = vdwg.mxu0
  %v693 = vadd.f32 %v378, %v604
  %v694 = vadd.f32 %v380, %v606
  %v695 = vadd.f32 %v383, %v609
  %v696 = vadd.f32 %v385, %v611
  %v697 = vadd.f32 %v388, %v614
  %v698 = vadd.f32 %v390, %v616
  %v699 = vadd.f32 %v393, %v619
  %v700 = vadd.f32 %v395, %v621
  %v701 = vadd.f32 %v398, %v624
  %v702 = vadd.f32 %v400, %v626
  %v703 = vadd.f32 %v403, %v629
  %v704 = vadd.f32 %v405, %v631
  %v705 = vadd.f32 %v408, %v634
  %v706 = vadd.f32 %v410, %v636
  %v707 = vadd.f32 %v413, %v639
  %v708 = vadd.f32 %v415, %v641
  %v709 = vadd.f32 %v418, %v644
  %v710 = vadd.f32 %v420, %v646
  %v711 = vadd.f32 %v423, %v649
  %v712 = vadd.f32 %v425, %v651
  %v713 = vadd.f32 %v428, %v654
  %v714 = vadd.f32 %v430, %v656
  %v715 = vadd.f32 %v433, %v659
  %v716 = vadd.f32 %v435, %v661
  %v717 = vadd.f32 %v438, %v664
  %v718 = vadd.f32 %v440, %v666
  %v719 = vadd.f32 %v443, %v669
  %v720 = vadd.f32 %v445, %v671
  %v721 = vadd.f32 %v448, %v674
  %v722 = vadd.f32 %v450, %v676
  %v723 = vadd.f32 %v453, %v679
  %v724 = vadd.f32 %v455, %v681
  %v725 = vadd.f32 %v458, %v684
  %v726 = vadd.f32 %v460, %v686
  %v727 = vadd.f32 %v463, %v689
  %v728 = vadd.f32 %v465, %v691
  %s729 = sadd.s32 %s15, 18
  %s730 = scalar_lea.vmem %s0, %s729
  %v731 = vld [vmem:[%s730] sm:$0xff]
  %v732 = vld [vmem:[%s730 + $0x8] sm:$0xff]
  %v733 = vld [vmem:[%s730 + $0x10] sm:$0xff]
  %v734 = vld [vmem:[%s730 + $0x18] sm:$0xff]
  %v735 = vld [vmem:[%s730 + $0x20] sm:$0xff]
  %v736 = vld [vmem:[%s730 + $0x28] sm:$0xff]
  %v737 = vld [vmem:[%s730 + $0x30] sm:$0xff]
  %v738 = vld [vmem:[%s730 + $0x38] sm:$0xff]
  %v739 = vld [vmem:[%s730 + $0x40] sm:$0xff]
  %v740 = vld [vmem:[%s730 + $0x48] sm:$0xff]
  %v741 = vld [vmem:[%s730 + $0x50] sm:$0xff]
  %v742 = vld [vmem:[%s730 + $0x58] sm:$0xff]
  %v743 = vld [vmem:[%s730 + $0x60] sm:$0xff]
  %v744 = vld [vmem:[%s730 + $0x68] sm:$0xff]
  %v745 = vld [vmem:[%s730 + $0x70] sm:$0xff]
  %v746 = vld [vmem:[%s730 + $0x78] sm:$0xff]
  %v747 = vld [vmem:[%s730 + $0x80] sm:$0xff]
  %v748 = vld [vmem:[%s730 + $0x88] sm:$0xff]
  %v749 = vld [vmem:[%s730 + $0x90] sm:$0xff]
  %v750 = vld [vmem:[%s730 + $0x98] sm:$0xff]
  %v751 = vld [vmem:[%s730 + $0xa0] sm:$0xff]
  %v752 = vld [vmem:[%s730 + $0xa8] sm:$0xff]
  %v753 = vld [vmem:[%s730 + $0xb0] sm:$0xff]
  %v754 = vld [vmem:[%s730 + $0xb8] sm:$0xff]
  %v755 = vld [vmem:[%s730 + $0xc0] sm:$0xff]
  %v756 = vld [vmem:[%s730 + $0xc8] sm:$0xff]
  %v757 = vld [vmem:[%s730 + $0xd0] sm:$0xff]
  %v758 = vld [vmem:[%s730 + $0xd8] sm:$0xff]
  %v759 = vld [vmem:[%s730 + $0xe0] sm:$0xff]
  %v760 = vld [vmem:[%s730 + $0xe8] sm:$0xff]
  %v761 = vld [vmem:[%s730 + $0xf0] sm:$0xff]
  %v762 = vld [vmem:[%s730 + $0xf8] sm:$0xff]
  %v763 = vld [vmem:[%s730 + $0x100] sm:$0xff]
  %v764 = vld [vmem:[%s730 + $0x108] sm:$0xff]
  %v765 = vld [vmem:[%s730 + $0x110] sm:$0xff]
  %v766 = vld [vmem:[%s730 + $0x118] sm:$0xff]
  %v767 = vpack.c.bf16 %v732, %v731
  %v768 = vpack.c.bf16 %v734, %v733
  %v769 = vpack.c.bf16 %v736, %v735
  %v770 = vpack.c.bf16 %v738, %v737
  %v771 = vpack.c.bf16 %v740, %v739
  %v772 = vpack.c.bf16 %v742, %v741
  %v773 = vpack.c.bf16 %v744, %v743
  %v774 = vpack.c.bf16 %v746, %v745
  %v775 = vpack.c.bf16 %v748, %v747
  %v776 = vpack.c.bf16 %v750, %v749
  %v777 = vpack.c.bf16 %v752, %v751
  %v778 = vpack.c.bf16 %v754, %v753
  %v779 = vpack.c.bf16 %v756, %v755
  %v780 = vpack.c.bf16 %v758, %v757
  %v781 = vpack.c.bf16 %v760, %v759
  %v782 = vpack.c.bf16 %v762, %v761
  %v783 = vpack.c.bf16 %v764, %v763
  %v784 = vpack.c.bf16 %v766, %v765
  %s785 = scalar_lea.vmem %s1, 48
  %v786 = vld [vmem:[%s785] sm:$0xf]
  %v787 = vld [vmem:[%s785 + $0x4] sm:$0xf]
  %v788 = vld [vmem:[%s785 + $0x8] sm:$0xf]
  %v789 = vld [vmem:[%s785 + $0xc] sm:$0xf]
  %v794 = vunpack.c.l.b16 %v786
  %v795 = vunpack.c.l.b16 %v787
  %v796 = vunpack.c.l.b16 %v788
  %v797 = vunpack.c.l.b16 %v789
  %v798 = vpack.c.b16 %v795, %v794
  %v799 = vpack.c.b16 %v797, %v796
  %v803 = vsel %vm148, %v767, 0
  %v806 = vsel %vm148, %v768, 0
  %v809 = vsel %vm148, %v769, 0
  %v812 = vsel %vm148, %v770, 0
  %v815 = vsel %vm148, %v771, 0
  %v818 = vsel %vm148, %v772, 0
  %v821 = vsel %vm148, %v773, 0
  %v824 = vsel %vm148, %v774, 0
  %v827 = vsel %vm148, %v775, 0
  %v830 = vsel %vm148, %v776, 0
  %v833 = vsel %vm148, %v777, 0
  %v836 = vsel %vm148, %v778, 0
  %v839 = vsel %vm148, %v779, 0
  %v842 = vsel %vm148, %v780, 0
  %v845 = vsel %vm148, %v781, 0
  %v848 = vsel %vm148, %v782, 0
  %v851 = vsel %vm148, %v783, 0
  %v854 = vsel %vm148, %v784, 0
  %856 = vmatpush.bf16.msra.mxu0 0
  %857 = vmatpush.bf16.msra.mxu0 0
  %858 = vmatpush.bf16.msra.mxu0 0
  %859 = vmatpush.bf16.msra.mxu0 0
  %860 = vmatpush.bf16.msra.mxu0 0
  %861 = vmatpush.bf16.msra.mxu0 0
  %862 = vmatpush.bf16.msra.mxu0 %v799
  %863 = vmatpush.bf16.msra.mxu0 %v798
  %864 = vmatmul.bf16.gmra.mxu0 %v803
  %v865 = vpop.f32.mrf.mxu0
  %v866 = vadd.f32 0.0, %v865
  %v867 = vpop.f32.mrf.mxu0
  %v868 = vadd.f32 0.0, %v867
  %869 = vmatmul.bf16.gmra.mxu0 %v806
  %v870 = vpop.f32.mrf.mxu0
  %v871 = vadd.f32 0.0, %v870
  %v872 = vpop.f32.mrf.mxu0
  %v873 = vadd.f32 0.0, %v872
  %874 = vmatmul.bf16.gmra.mxu0 %v809
  %v875 = vpop.f32.mrf.mxu0
  %v876 = vadd.f32 0.0, %v875
  %v877 = vpop.f32.mrf.mxu0
  %v878 = vadd.f32 0.0, %v877
  %879 = vmatmul.bf16.gmra.mxu0 %v812
  %v880 = vpop.f32.mrf.mxu0
  %v881 = vadd.f32 0.0, %v880
  %v882 = vpop.f32.mrf.mxu0
  %v883 = vadd.f32 0.0, %v882
  %884 = vmatmul.bf16.gmra.mxu0 %v815
  %v885 = vpop.f32.mrf.mxu0
  %v886 = vadd.f32 0.0, %v885
  %v887 = vpop.f32.mrf.mxu0
  %v888 = vadd.f32 0.0, %v887
  %889 = vmatmul.bf16.gmra.mxu0 %v818
  %v890 = vpop.f32.mrf.mxu0
  %v891 = vadd.f32 0.0, %v890
  %v892 = vpop.f32.mrf.mxu0
  %v893 = vadd.f32 0.0, %v892
  %894 = vmatmul.bf16.gmra.mxu0 %v821
  %v895 = vpop.f32.mrf.mxu0
  %v896 = vadd.f32 0.0, %v895
  %v897 = vpop.f32.mrf.mxu0
  %v898 = vadd.f32 0.0, %v897
  %899 = vmatmul.bf16.gmra.mxu0 %v824
  %v900 = vpop.f32.mrf.mxu0
  %v901 = vadd.f32 0.0, %v900
  %v902 = vpop.f32.mrf.mxu0
  %v903 = vadd.f32 0.0, %v902
  %904 = vmatmul.bf16.gmra.mxu0 %v827
  %v905 = vpop.f32.mrf.mxu0
  %v906 = vadd.f32 0.0, %v905
  %v907 = vpop.f32.mrf.mxu0
  %v908 = vadd.f32 0.0, %v907
  %909 = vmatmul.bf16.gmra.mxu0 %v830
  %v910 = vpop.f32.mrf.mxu0
  %v911 = vadd.f32 0.0, %v910
  %v912 = vpop.f32.mrf.mxu0
  %v913 = vadd.f32 0.0, %v912
  %914 = vmatmul.bf16.gmra.mxu0 %v833
  %v915 = vpop.f32.mrf.mxu0
  %v916 = vadd.f32 0.0, %v915
  %v917 = vpop.f32.mrf.mxu0
  %v918 = vadd.f32 0.0, %v917
  %919 = vmatmul.bf16.gmra.mxu0 %v836
  %v920 = vpop.f32.mrf.mxu0
  %v921 = vadd.f32 0.0, %v920
  %v922 = vpop.f32.mrf.mxu0
  %v923 = vadd.f32 0.0, %v922
  %924 = vmatmul.bf16.gmra.mxu0 %v839
  %v925 = vpop.f32.mrf.mxu0
  %v926 = vadd.f32 0.0, %v925
  %v927 = vpop.f32.mrf.mxu0
  %v928 = vadd.f32 0.0, %v927
  %929 = vmatmul.bf16.gmra.mxu0 %v842
  %v930 = vpop.f32.mrf.mxu0
  %v931 = vadd.f32 0.0, %v930
  %v932 = vpop.f32.mrf.mxu0
  %v933 = vadd.f32 0.0, %v932
  %934 = vmatmul.bf16.gmra.mxu0 %v845
  %v935 = vpop.f32.mrf.mxu0
  %v936 = vadd.f32 0.0, %v935
  %v937 = vpop.f32.mrf.mxu0
  %v938 = vadd.f32 0.0, %v937
  %939 = vmatmul.bf16.gmra.mxu0 %v848
  %v940 = vpop.f32.mrf.mxu0
  %v941 = vadd.f32 0.0, %v940
  %v942 = vpop.f32.mrf.mxu0
  %v943 = vadd.f32 0.0, %v942
  %944 = vmatmul.bf16.gmra.mxu0 %v851
  %v945 = vpop.f32.mrf.mxu0
  %v946 = vadd.f32 0.0, %v945
  %v947 = vpop.f32.mrf.mxu0
  %v948 = vadd.f32 0.0, %v947
  %949 = vmatmul.bf16.gmra.mxu0 %v854
  %v950 = vpop.f32.mrf.mxu0
  %v951 = vadd.f32 0.0, %v950
  %v952 = vpop.f32.mrf.mxu0
  %v953 = vadd.f32 0.0, %v952
  %954 = vdwg.mxu0
  %v955 = vadd.f32 %v693, %v866
  %v956 = vadd.f32 %v694, %v868
  %v957 = vadd.f32 %v695, %v871
  %v958 = vadd.f32 %v696, %v873
  %v959 = vadd.f32 %v697, %v876
  %v960 = vadd.f32 %v698, %v878
  %v961 = vadd.f32 %v699, %v881
  %v962 = vadd.f32 %v700, %v883
  %v963 = vadd.f32 %v701, %v886
  %v964 = vadd.f32 %v702, %v888
  %v965 = vadd.f32 %v703, %v891
  %v966 = vadd.f32 %v704, %v893
  %v967 = vadd.f32 %v705, %v896
  %v968 = vadd.f32 %v706, %v898
  %v969 = vadd.f32 %v707, %v901
  %v970 = vadd.f32 %v708, %v903
  %v971 = vadd.f32 %v709, %v906
  %v972 = vadd.f32 %v710, %v908
  %v973 = vadd.f32 %v711, %v911
  %v974 = vadd.f32 %v712, %v913
  %v975 = vadd.f32 %v713, %v916
  %v976 = vadd.f32 %v714, %v918
  %v977 = vadd.f32 %v715, %v921
  %v978 = vadd.f32 %v716, %v923
  %v979 = vadd.f32 %v717, %v926
  %v980 = vadd.f32 %v718, %v928
  %v981 = vadd.f32 %v719, %v931
  %v982 = vadd.f32 %v720, %v933
  %v983 = vadd.f32 %v721, %v936
  %v984 = vadd.f32 %v722, %v938
  %v985 = vadd.f32 %v723, %v941
  %v986 = vadd.f32 %v724, %v943
  %v987 = vadd.f32 %v725, %v946
  %v988 = vadd.f32 %v726, %v948
  %v989 = vadd.f32 %v727, %v951
  %v990 = vadd.f32 %v728, %v953
  %s991 = sadd.s32 %s15, 19
  %s992 = scalar_lea.vmem %s0, %s991
  %v993 = vld [vmem:[%s992] sm:$0xff]
  %v994 = vld [vmem:[%s992 + $0x8] sm:$0xff]
  %v995 = vld [vmem:[%s992 + $0x10] sm:$0xff]
  %v996 = vld [vmem:[%s992 + $0x18] sm:$0xff]
  %v997 = vld [vmem:[%s992 + $0x20] sm:$0xff]
  %v998 = vld [vmem:[%s992 + $0x28] sm:$0xff]
  %v999 = vld [vmem:[%s992 + $0x30] sm:$0xff]
  %v1000 = vld [vmem:[%s992 + $0x38] sm:$0xff]
  %v1001 = vld [vmem:[%s992 + $0x40] sm:$0xff]
  %v1002 = vld [vmem:[%s992 + $0x48] sm:$0xff]
  %v1003 = vld [vmem:[%s992 + $0x50] sm:$0xff]
  %v1004 = vld [vmem:[%s992 + $0x58] sm:$0xff]
  %v1005 = vld [vmem:[%s992 + $0x60] sm:$0xff]
  %v1006 = vld [vmem:[%s992 + $0x68] sm:$0xff]
  %v1007 = vld [vmem:[%s992 + $0x70] sm:$0xff]
  %v1008 = vld [vmem:[%s992 + $0x78] sm:$0xff]
  %v1009 = vld [vmem:[%s992 + $0x80] sm:$0xff]
  %v1010 = vld [vmem:[%s992 + $0x88] sm:$0xff]
  %v1011 = vld [vmem:[%s992 + $0x90] sm:$0xff]
  %v1012 = vld [vmem:[%s992 + $0x98] sm:$0xff]
  %v1013 = vld [vmem:[%s992 + $0xa0] sm:$0xff]
  %v1014 = vld [vmem:[%s992 + $0xa8] sm:$0xff]
  %v1015 = vld [vmem:[%s992 + $0xb0] sm:$0xff]
  %v1016 = vld [vmem:[%s992 + $0xb8] sm:$0xff]
  %v1017 = vld [vmem:[%s992 + $0xc0] sm:$0xff]
  %v1018 = vld [vmem:[%s992 + $0xc8] sm:$0xff]
  %v1019 = vld [vmem:[%s992 + $0xd0] sm:$0xff]
  %v1020 = vld [vmem:[%s992 + $0xd8] sm:$0xff]
  %v1021 = vld [vmem:[%s992 + $0xe0] sm:$0xff]
  %v1022 = vld [vmem:[%s992 + $0xe8] sm:$0xff]
  %v1023 = vld [vmem:[%s992 + $0xf0] sm:$0xff]
  %v1024 = vld [vmem:[%s992 + $0xf8] sm:$0xff]
  %v1025 = vld [vmem:[%s992 + $0x100] sm:$0xff]
  %v1026 = vld [vmem:[%s992 + $0x108] sm:$0xff]
  %v1027 = vld [vmem:[%s992 + $0x110] sm:$0xff]
  %v1028 = vld [vmem:[%s992 + $0x118] sm:$0xff]
  %v1029 = vpack.c.bf16 %v994, %v993
  %v1030 = vpack.c.bf16 %v996, %v995
  %v1031 = vpack.c.bf16 %v998, %v997
  %v1032 = vpack.c.bf16 %v1000, %v999
  %v1033 = vpack.c.bf16 %v1002, %v1001
  %v1034 = vpack.c.bf16 %v1004, %v1003
  %v1035 = vpack.c.bf16 %v1006, %v1005
  %v1036 = vpack.c.bf16 %v1008, %v1007
  %v1037 = vpack.c.bf16 %v1010, %v1009
  %v1038 = vpack.c.bf16 %v1012, %v1011
  %v1039 = vpack.c.bf16 %v1014, %v1013
  %v1040 = vpack.c.bf16 %v1016, %v1015
  %v1041 = vpack.c.bf16 %v1018, %v1017
  %v1042 = vpack.c.bf16 %v1020, %v1019
  %v1043 = vpack.c.bf16 %v1022, %v1021
  %v1044 = vpack.c.bf16 %v1024, %v1023
  %v1045 = vpack.c.bf16 %v1026, %v1025
  %v1046 = vpack.c.bf16 %v1028, %v1027
  %s1047 = scalar_lea.vmem %s1, 64
  %v1048 = vld [vmem:[%s1047] sm:$0xf]
  %v1049 = vld [vmem:[%s1047 + $0x4] sm:$0xf]
  %v1050 = vld [vmem:[%s1047 + $0x8] sm:$0xf]
  %v1051 = vld [vmem:[%s1047 + $0xc] sm:$0xf]
  %v1056 = vunpack.c.l.b16 %v1048
  %v1057 = vunpack.c.l.b16 %v1049
  %v1058 = vunpack.c.l.b16 %v1050
  %v1059 = vunpack.c.l.b16 %v1051
  %v1060 = vpack.c.b16 %v1057, %v1056
  %v1061 = vpack.c.b16 %v1059, %v1058
  %v1065 = vsel %vm148, %v1029, 0
  %v1068 = vsel %vm148, %v1030, 0
  %v1071 = vsel %vm148, %v1031, 0
  %v1074 = vsel %vm148, %v1032, 0
  %v1077 = vsel %vm148, %v1033, 0
  %v1080 = vsel %vm148, %v1034, 0
  %v1083 = vsel %vm148, %v1035, 0
  %v1086 = vsel %vm148, %v1036, 0
  %v1089 = vsel %vm148, %v1037, 0
  %v1092 = vsel %vm148, %v1038, 0
  %v1095 = vsel %vm148, %v1039, 0
  %v1098 = vsel %vm148, %v1040, 0
  %v1101 = vsel %vm148, %v1041, 0
  %v1104 = vsel %vm148, %v1042, 0
  %v1107 = vsel %vm148, %v1043, 0
  %v1110 = vsel %vm148, %v1044, 0
  %v1113 = vsel %vm148, %v1045, 0
  %v1116 = vsel %vm148, %v1046, 0
  %1118 = vmatpush.bf16.msra.mxu0 0
  %1119 = vmatpush.bf16.msra.mxu0 0
  %1120 = vmatpush.bf16.msra.mxu0 0
  %1121 = vmatpush.bf16.msra.mxu0 0
  %1122 = vmatpush.bf16.msra.mxu0 0
  %1123 = vmatpush.bf16.msra.mxu0 0
  %1124 = vmatpush.bf16.msra.mxu0 %v1061
  %1125 = vmatpush.bf16.msra.mxu0 %v1060
  %1126 = vmatmul.bf16.gmra.mxu0 %v1065
  %v1127 = vpop.f32.mrf.mxu0
  %v1128 = vadd.f32 0.0, %v1127
  %v1129 = vpop.f32.mrf.mxu0
  %v1130 = vadd.f32 0.0, %v1129
  %1131 = vmatmul.bf16.gmra.mxu0 %v1068
  %v1132 = vpop.f32.mrf.mxu0
  %v1133 = vadd.f32 0.0, %v1132
  %v1134 = vpop.f32.mrf.mxu0
  %v1135 = vadd.f32 0.0, %v1134
  %1136 = vmatmul.bf16.gmra.mxu0 %v1071
  %v1137 = vpop.f32.mrf.mxu0
  %v1138 = vadd.f32 0.0, %v1137
  %v1139 = vpop.f32.mrf.mxu0
  %v1140 = vadd.f32 0.0, %v1139
  %1141 = vmatmul.bf16.gmra.mxu0 %v1074
  %v1142 = vpop.f32.mrf.mxu0
  %v1143 = vadd.f32 0.0, %v1142
  %v1144 = vpop.f32.mrf.mxu0
  %v1145 = vadd.f32 0.0, %v1144
  %1146 = vmatmul.bf16.gmra.mxu0 %v1077
  %v1147 = vpop.f32.mrf.mxu0
  %v1148 = vadd.f32 0.0, %v1147
  %v1149 = vpop.f32.mrf.mxu0
  %v1150 = vadd.f32 0.0, %v1149
  %1151 = vmatmul.bf16.gmra.mxu0 %v1080
  %v1152 = vpop.f32.mrf.mxu0
  %v1153 = vadd.f32 0.0, %v1152
  %v1154 = vpop.f32.mrf.mxu0
  %v1155 = vadd.f32 0.0, %v1154
  %1156 = vmatmul.bf16.gmra.mxu0 %v1083
  %v1157 = vpop.f32.mrf.mxu0
  %v1158 = vadd.f32 0.0, %v1157
  %v1159 = vpop.f32.mrf.mxu0
  %v1160 = vadd.f32 0.0, %v1159
  %1161 = vmatmul.bf16.gmra.mxu0 %v1086
  %v1162 = vpop.f32.mrf.mxu0
  %v1163 = vadd.f32 0.0, %v1162
  %v1164 = vpop.f32.mrf.mxu0
  %v1165 = vadd.f32 0.0, %v1164
  %1166 = vmatmul.bf16.gmra.mxu0 %v1089
  %v1167 = vpop.f32.mrf.mxu0
  %v1168 = vadd.f32 0.0, %v1167
  %v1169 = vpop.f32.mrf.mxu0
  %v1170 = vadd.f32 0.0, %v1169
  %1171 = vmatmul.bf16.gmra.mxu0 %v1092
  %v1172 = vpop.f32.mrf.mxu0
  %v1173 = vadd.f32 0.0, %v1172
  %v1174 = vpop.f32.mrf.mxu0
  %v1175 = vadd.f32 0.0, %v1174
  %1176 = vmatmul.bf16.gmra.mxu0 %v1095
  %v1177 = vpop.f32.mrf.mxu0
  %v1178 = vadd.f32 0.0, %v1177
  %v1179 = vpop.f32.mrf.mxu0
  %v1180 = vadd.f32 0.0, %v1179
  %1181 = vmatmul.bf16.gmra.mxu0 %v1098
  %v1182 = vpop.f32.mrf.mxu0
  %v1183 = vadd.f32 0.0, %v1182
  %v1184 = vpop.f32.mrf.mxu0
  %v1185 = vadd.f32 0.0, %v1184
  %1186 = vmatmul.bf16.gmra.mxu0 %v1101
  %v1187 = vpop.f32.mrf.mxu0
  %v1188 = vadd.f32 0.0, %v1187
  %v1189 = vpop.f32.mrf.mxu0
  %v1190 = vadd.f32 0.0, %v1189
  %1191 = vmatmul.bf16.gmra.mxu0 %v1104
  %v1192 = vpop.f32.mrf.mxu0
  %v1193 = vadd.f32 0.0, %v1192
  %v1194 = vpop.f32.mrf.mxu0
  %v1195 = vadd.f32 0.0, %v1194
  %1196 = vmatmul.bf16.gmra.mxu0 %v1107
  %v1197 = vpop.f32.mrf.mxu0
  %v1198 = vadd.f32 0.0, %v1197
  %v1199 = vpop.f32.mrf.mxu0
  %v1200 = vadd.f32 0.0, %v1199
  %1201 = vmatmul.bf16.gmra.mxu0 %v1110
  %v1202 = vpop.f32.mrf.mxu0
  %v1203 = vadd.f32 0.0, %v1202
  %v1204 = vpop.f32.mrf.mxu0
  %v1205 = vadd.f32 0.0, %v1204
  %1206 = vmatmul.bf16.gmra.mxu0 %v1113
  %v1207 = vpop.f32.mrf.mxu0
  %v1208 = vadd.f32 0.0, %v1207
  %v1209 = vpop.f32.mrf.mxu0
  %v1210 = vadd.f32 0.0, %v1209
  %1211 = vmatmul.bf16.gmra.mxu0 %v1116
  %v1212 = vpop.f32.mrf.mxu0
  %v1213 = vadd.f32 0.0, %v1212
  %v1214 = vpop.f32.mrf.mxu0
  %v1215 = vadd.f32 0.0, %v1214
  %1216 = vdwg.mxu0
  %v1217 = vadd.f32 %v955, %v1128
  %v1218 = vadd.f32 %v956, %v1130
  %v1219 = vadd.f32 %v957, %v1133
  %v1220 = vadd.f32 %v958, %v1135
  %v1221 = vadd.f32 %v959, %v1138
  %v1222 = vadd.f32 %v960, %v1140
  %v1223 = vadd.f32 %v961, %v1143
  %v1224 = vadd.f32 %v962, %v1145
  %v1225 = vadd.f32 %v963, %v1148
  %v1226 = vadd.f32 %v964, %v1150
  %v1227 = vadd.f32 %v965, %v1153
  %v1228 = vadd.f32 %v966, %v1155
  %v1229 = vadd.f32 %v967, %v1158
  %v1230 = vadd.f32 %v968, %v1160
  %v1231 = vadd.f32 %v969, %v1163
  %v1232 = vadd.f32 %v970, %v1165
  %v1233 = vadd.f32 %v971, %v1168
  %v1234 = vadd.f32 %v972, %v1170
  %v1235 = vadd.f32 %v973, %v1173
  %v1236 = vadd.f32 %v974, %v1175
  %v1237 = vadd.f32 %v975, %v1178
  %v1238 = vadd.f32 %v976, %v1180
  %v1239 = vadd.f32 %v977, %v1183
  %v1240 = vadd.f32 %v978, %v1185
  %v1241 = vadd.f32 %v979, %v1188
  %v1242 = vadd.f32 %v980, %v1190
  %v1243 = vadd.f32 %v981, %v1193
  %v1244 = vadd.f32 %v982, %v1195
  %v1245 = vadd.f32 %v983, %v1198
  %v1246 = vadd.f32 %v984, %v1200
  %v1247 = vadd.f32 %v985, %v1203
  %v1248 = vadd.f32 %v986, %v1205
  %v1249 = vadd.f32 %v987, %v1208
  %v1250 = vadd.f32 %v988, %v1210
  %v1251 = vadd.f32 %v989, %v1213
  %v1252 = vadd.f32 %v990, %v1215
  %s1253 = sadd.s32 %s15, 20
  %s1254 = scalar_lea.vmem %s0, %s1253
  %v1255 = vld [vmem:[%s1254] sm:$0xff]
  %v1256 = vld [vmem:[%s1254 + $0x8] sm:$0xff]
  %v1257 = vld [vmem:[%s1254 + $0x10] sm:$0xff]
  %v1258 = vld [vmem:[%s1254 + $0x18] sm:$0xff]
  %v1259 = vld [vmem:[%s1254 + $0x20] sm:$0xff]
  %v1260 = vld [vmem:[%s1254 + $0x28] sm:$0xff]
  %v1261 = vld [vmem:[%s1254 + $0x30] sm:$0xff]
  %v1262 = vld [vmem:[%s1254 + $0x38] sm:$0xff]
  %v1263 = vld [vmem:[%s1254 + $0x40] sm:$0xff]
  %v1264 = vld [vmem:[%s1254 + $0x48] sm:$0xff]
  %v1265 = vld [vmem:[%s1254 + $0x50] sm:$0xff]
  %v1266 = vld [vmem:[%s1254 + $0x58] sm:$0xff]
  %v1267 = vld [vmem:[%s1254 + $0x60] sm:$0xff]
  %v1268 = vld [vmem:[%s1254 + $0x68] sm:$0xff]
  %v1269 = vld [vmem:[%s1254 + $0x70] sm:$0xff]
  %v1270 = vld [vmem:[%s1254 + $0x78] sm:$0xff]
  %v1271 = vld [vmem:[%s1254 + $0x80] sm:$0xff]
  %v1272 = vld [vmem:[%s1254 + $0x88] sm:$0xff]
  %v1273 = vld [vmem:[%s1254 + $0x90] sm:$0xff]
  %v1274 = vld [vmem:[%s1254 + $0x98] sm:$0xff]
  %v1275 = vld [vmem:[%s1254 + $0xa0] sm:$0xff]
  %v1276 = vld [vmem:[%s1254 + $0xa8] sm:$0xff]
  %v1277 = vld [vmem:[%s1254 + $0xb0] sm:$0xff]
  %v1278 = vld [vmem:[%s1254 + $0xb8] sm:$0xff]
  %v1279 = vld [vmem:[%s1254 + $0xc0] sm:$0xff]
  %v1280 = vld [vmem:[%s1254 + $0xc8] sm:$0xff]
  %v1281 = vld [vmem:[%s1254 + $0xd0] sm:$0xff]
  %v1282 = vld [vmem:[%s1254 + $0xd8] sm:$0xff]
  %v1283 = vld [vmem:[%s1254 + $0xe0] sm:$0xff]
  %v1284 = vld [vmem:[%s1254 + $0xe8] sm:$0xff]
  %v1285 = vld [vmem:[%s1254 + $0xf0] sm:$0xff]
  %v1286 = vld [vmem:[%s1254 + $0xf8] sm:$0xff]
  %v1287 = vld [vmem:[%s1254 + $0x100] sm:$0xff]
  %v1288 = vld [vmem:[%s1254 + $0x108] sm:$0xff]
  %v1289 = vld [vmem:[%s1254 + $0x110] sm:$0xff]
  %v1290 = vld [vmem:[%s1254 + $0x118] sm:$0xff]
  %v1291 = vpack.c.bf16 %v1256, %v1255
  %v1292 = vpack.c.bf16 %v1258, %v1257
  %v1293 = vpack.c.bf16 %v1260, %v1259
  %v1294 = vpack.c.bf16 %v1262, %v1261
  %v1295 = vpack.c.bf16 %v1264, %v1263
  %v1296 = vpack.c.bf16 %v1266, %v1265
  %v1297 = vpack.c.bf16 %v1268, %v1267
  %v1298 = vpack.c.bf16 %v1270, %v1269
  %v1299 = vpack.c.bf16 %v1272, %v1271
  %v1300 = vpack.c.bf16 %v1274, %v1273
  %v1301 = vpack.c.bf16 %v1276, %v1275
  %v1302 = vpack.c.bf16 %v1278, %v1277
  %v1303 = vpack.c.bf16 %v1280, %v1279
  %v1304 = vpack.c.bf16 %v1282, %v1281
  %v1305 = vpack.c.bf16 %v1284, %v1283
  %v1306 = vpack.c.bf16 %v1286, %v1285
  %v1307 = vpack.c.bf16 %v1288, %v1287
  %v1308 = vpack.c.bf16 %v1290, %v1289
  %s1309 = scalar_lea.vmem %s1, 80
  %v1310 = vld [vmem:[%s1309] sm:$0xf]
  %v1311 = vld [vmem:[%s1309 + $0x4] sm:$0xf]
  %v1312 = vld [vmem:[%s1309 + $0x8] sm:$0xf]
  %v1313 = vld [vmem:[%s1309 + $0xc] sm:$0xf]
  %v1318 = vunpack.c.l.b16 %v1310
  %v1319 = vunpack.c.l.b16 %v1311
  %v1320 = vunpack.c.l.b16 %v1312
  %v1321 = vunpack.c.l.b16 %v1313
  %v1322 = vpack.c.b16 %v1319, %v1318
  %v1323 = vpack.c.b16 %v1321, %v1320
  %v1327 = vsel %vm148, %v1291, 0
  %v1330 = vsel %vm148, %v1292, 0
  %v1333 = vsel %vm148, %v1293, 0
  %v1336 = vsel %vm148, %v1294, 0
  %v1339 = vsel %vm148, %v1295, 0
  %v1342 = vsel %vm148, %v1296, 0
  %v1345 = vsel %vm148, %v1297, 0
  %v1348 = vsel %vm148, %v1298, 0
  %v1351 = vsel %vm148, %v1299, 0
  %v1354 = vsel %vm148, %v1300, 0
  %v1357 = vsel %vm148, %v1301, 0
  %v1360 = vsel %vm148, %v1302, 0
  %v1363 = vsel %vm148, %v1303, 0
  %v1366 = vsel %vm148, %v1304, 0
  %v1369 = vsel %vm148, %v1305, 0
  %v1372 = vsel %vm148, %v1306, 0
  %v1375 = vsel %vm148, %v1307, 0
  %v1378 = vsel %vm148, %v1308, 0
  %1380 = vmatpush.bf16.msra.mxu0 0
  %1381 = vmatpush.bf16.msra.mxu0 0
  %1382 = vmatpush.bf16.msra.mxu0 0
  %1383 = vmatpush.bf16.msra.mxu0 0
  %1384 = vmatpush.bf16.msra.mxu0 0
  %1385 = vmatpush.bf16.msra.mxu0 0
  %1386 = vmatpush.bf16.msra.mxu0 %v1323
  %1387 = vmatpush.bf16.msra.mxu0 %v1322
  %1388 = vmatmul.bf16.gmra.mxu0 %v1327
  %v1389 = vpop.f32.mrf.mxu0
  %v1390 = vadd.f32 0.0, %v1389
  %v1391 = vpop.f32.mrf.mxu0
  %v1392 = vadd.f32 0.0, %v1391
  %1393 = vmatmul.bf16.gmra.mxu0 %v1330
  %v1394 = vpop.f32.mrf.mxu0
  %v1395 = vadd.f32 0.0, %v1394
  %v1396 = vpop.f32.mrf.mxu0
  %v1397 = vadd.f32 0.0, %v1396
  %1398 = vmatmul.bf16.gmra.mxu0 %v1333
  %v1399 = vpop.f32.mrf.mxu0
  %v1400 = vadd.f32 0.0, %v1399
  %v1401 = vpop.f32.mrf.mxu0
  %v1402 = vadd.f32 0.0, %v1401
  %1403 = vmatmul.bf16.gmra.mxu0 %v1336
  %v1404 = vpop.f32.mrf.mxu0
  %v1405 = vadd.f32 0.0, %v1404
  %v1406 = vpop.f32.mrf.mxu0
  %v1407 = vadd.f32 0.0, %v1406
  %1408 = vmatmul.bf16.gmra.mxu0 %v1339
  %v1409 = vpop.f32.mrf.mxu0
  %v1410 = vadd.f32 0.0, %v1409
  %v1411 = vpop.f32.mrf.mxu0
  %v1412 = vadd.f32 0.0, %v1411
  %1413 = vmatmul.bf16.gmra.mxu0 %v1342
  %v1414 = vpop.f32.mrf.mxu0
  %v1415 = vadd.f32 0.0, %v1414
  %v1416 = vpop.f32.mrf.mxu0
  %v1417 = vadd.f32 0.0, %v1416
  %1418 = vmatmul.bf16.gmra.mxu0 %v1345
  %v1419 = vpop.f32.mrf.mxu0
  %v1420 = vadd.f32 0.0, %v1419
  %v1421 = vpop.f32.mrf.mxu0
  %v1422 = vadd.f32 0.0, %v1421
  %1423 = vmatmul.bf16.gmra.mxu0 %v1348
  %v1424 = vpop.f32.mrf.mxu0
  %v1425 = vadd.f32 0.0, %v1424
  %v1426 = vpop.f32.mrf.mxu0
  %v1427 = vadd.f32 0.0, %v1426
  %1428 = vmatmul.bf16.gmra.mxu0 %v1351
  %v1429 = vpop.f32.mrf.mxu0
  %v1430 = vadd.f32 0.0, %v1429
  %v1431 = vpop.f32.mrf.mxu0
  %v1432 = vadd.f32 0.0, %v1431
  %1433 = vmatmul.bf16.gmra.mxu0 %v1354
  %v1434 = vpop.f32.mrf.mxu0
  %v1435 = vadd.f32 0.0, %v1434
  %v1436 = vpop.f32.mrf.mxu0
  %v1437 = vadd.f32 0.0, %v1436
  %1438 = vmatmul.bf16.gmra.mxu0 %v1357
  %v1439 = vpop.f32.mrf.mxu0
  %v1440 = vadd.f32 0.0, %v1439
  %v1441 = vpop.f32.mrf.mxu0
  %v1442 = vadd.f32 0.0, %v1441
  %1443 = vmatmul.bf16.gmra.mxu0 %v1360
  %v1444 = vpop.f32.mrf.mxu0
  %v1445 = vadd.f32 0.0, %v1444
  %v1446 = vpop.f32.mrf.mxu0
  %v1447 = vadd.f32 0.0, %v1446
  %1448 = vmatmul.bf16.gmra.mxu0 %v1363
  %v1449 = vpop.f32.mrf.mxu0
  %v1450 = vadd.f32 0.0, %v1449
  %v1451 = vpop.f32.mrf.mxu0
  %v1452 = vadd.f32 0.0, %v1451
  %1453 = vmatmul.bf16.gmra.mxu0 %v1366
  %v1454 = vpop.f32.mrf.mxu0
  %v1455 = vadd.f32 0.0, %v1454
  %v1456 = vpop.f32.mrf.mxu0
  %v1457 = vadd.f32 0.0, %v1456
  %1458 = vmatmul.bf16.gmra.mxu0 %v1369
  %v1459 = vpop.f32.mrf.mxu0
  %v1460 = vadd.f32 0.0, %v1459
  %v1461 = vpop.f32.mrf.mxu0
  %v1462 = vadd.f32 0.0, %v1461
  %1463 = vmatmul.bf16.gmra.mxu0 %v1372
  %v1464 = vpop.f32.mrf.mxu0
  %v1465 = vadd.f32 0.0, %v1464
  %v1466 = vpop.f32.mrf.mxu0
  %v1467 = vadd.f32 0.0, %v1466
  %1468 = vmatmul.bf16.gmra.mxu0 %v1375
  %v1469 = vpop.f32.mrf.mxu0
  %v1470 = vadd.f32 0.0, %v1469
  %v1471 = vpop.f32.mrf.mxu0
  %v1472 = vadd.f32 0.0, %v1471
  %1473 = vmatmul.bf16.gmra.mxu0 %v1378
  %v1474 = vpop.f32.mrf.mxu0
  %v1475 = vadd.f32 0.0, %v1474
  %v1476 = vpop.f32.mrf.mxu0
  %v1477 = vadd.f32 0.0, %v1476
  %1478 = vdwg.mxu0
  %v1479 = vadd.f32 %v1217, %v1390
  %v1480 = vadd.f32 %v1218, %v1392
  %v1481 = vadd.f32 %v1219, %v1395
  %v1482 = vadd.f32 %v1220, %v1397
  %v1483 = vadd.f32 %v1221, %v1400
  %v1484 = vadd.f32 %v1222, %v1402
  %v1485 = vadd.f32 %v1223, %v1405
  %v1486 = vadd.f32 %v1224, %v1407
  %v1487 = vadd.f32 %v1225, %v1410
  %v1488 = vadd.f32 %v1226, %v1412
  %v1489 = vadd.f32 %v1227, %v1415
  %v1490 = vadd.f32 %v1228, %v1417
  %v1491 = vadd.f32 %v1229, %v1420
  %v1492 = vadd.f32 %v1230, %v1422
  %v1493 = vadd.f32 %v1231, %v1425
  %v1494 = vadd.f32 %v1232, %v1427
  %v1495 = vadd.f32 %v1233, %v1430
  %v1496 = vadd.f32 %v1234, %v1432
  %v1497 = vadd.f32 %v1235, %v1435
  %v1498 = vadd.f32 %v1236, %v1437
  %v1499 = vadd.f32 %v1237, %v1440
  %v1500 = vadd.f32 %v1238, %v1442
  %v1501 = vadd.f32 %v1239, %v1445
  %v1502 = vadd.f32 %v1240, %v1447
  %v1503 = vadd.f32 %v1241, %v1450
  %v1504 = vadd.f32 %v1242, %v1452
  %v1505 = vadd.f32 %v1243, %v1455
  %v1506 = vadd.f32 %v1244, %v1457
  %v1507 = vadd.f32 %v1245, %v1460
  %v1508 = vadd.f32 %v1246, %v1462
  %v1509 = vadd.f32 %v1247, %v1465
  %v1510 = vadd.f32 %v1248, %v1467
  %v1511 = vadd.f32 %v1249, %v1470
  %v1512 = vadd.f32 %v1250, %v1472
  %v1513 = vadd.f32 %v1251, %v1475
  %v1514 = vadd.f32 %v1252, %v1477
  %s1515 = sadd.s32 %s15, 36
  %s1516 = scalar_lea.vmem %s0, %s1515
  %v1517 = vld [vmem:[%s1516] sm:$0xff]
  %v1518 = vld [vmem:[%s1516 + $0x8] sm:$0xff]
  %v1519 = vld [vmem:[%s1516 + $0x10] sm:$0xff]
  %v1520 = vld [vmem:[%s1516 + $0x18] sm:$0xff]
  %v1521 = vld [vmem:[%s1516 + $0x20] sm:$0xff]
  %v1522 = vld [vmem:[%s1516 + $0x28] sm:$0xff]
  %v1523 = vld [vmem:[%s1516 + $0x30] sm:$0xff]
  %v1524 = vld [vmem:[%s1516 + $0x38] sm:$0xff]
  %v1525 = vld [vmem:[%s1516 + $0x40] sm:$0xff]
  %v1526 = vld [vmem:[%s1516 + $0x48] sm:$0xff]
  %v1527 = vld [vmem:[%s1516 + $0x50] sm:$0xff]
  %v1528 = vld [vmem:[%s1516 + $0x58] sm:$0xff]
  %v1529 = vld [vmem:[%s1516 + $0x60] sm:$0xff]
  %v1530 = vld [vmem:[%s1516 + $0x68] sm:$0xff]
  %v1531 = vld [vmem:[%s1516 + $0x70] sm:$0xff]
  %v1532 = vld [vmem:[%s1516 + $0x78] sm:$0xff]
  %v1533 = vld [vmem:[%s1516 + $0x80] sm:$0xff]
  %v1534 = vld [vmem:[%s1516 + $0x88] sm:$0xff]
  %v1535 = vld [vmem:[%s1516 + $0x90] sm:$0xff]
  %v1536 = vld [vmem:[%s1516 + $0x98] sm:$0xff]
  %v1537 = vld [vmem:[%s1516 + $0xa0] sm:$0xff]
  %v1538 = vld [vmem:[%s1516 + $0xa8] sm:$0xff]
  %v1539 = vld [vmem:[%s1516 + $0xb0] sm:$0xff]
  %v1540 = vld [vmem:[%s1516 + $0xb8] sm:$0xff]
  %v1541 = vld [vmem:[%s1516 + $0xc0] sm:$0xff]
  %v1542 = vld [vmem:[%s1516 + $0xc8] sm:$0xff]
  %v1543 = vld [vmem:[%s1516 + $0xd0] sm:$0xff]
  %v1544 = vld [vmem:[%s1516 + $0xd8] sm:$0xff]
  %v1545 = vld [vmem:[%s1516 + $0xe0] sm:$0xff]
  %v1546 = vld [vmem:[%s1516 + $0xe8] sm:$0xff]
  %v1547 = vld [vmem:[%s1516 + $0xf0] sm:$0xff]
  %v1548 = vld [vmem:[%s1516 + $0xf8] sm:$0xff]
  %v1549 = vld [vmem:[%s1516 + $0x100] sm:$0xff]
  %v1550 = vld [vmem:[%s1516 + $0x108] sm:$0xff]
  %v1551 = vld [vmem:[%s1516 + $0x110] sm:$0xff]
  %v1552 = vld [vmem:[%s1516 + $0x118] sm:$0xff]
  %v1553 = vpack.c.bf16 %v1518, %v1517
  %v1554 = vpack.c.bf16 %v1520, %v1519
  %v1555 = vpack.c.bf16 %v1522, %v1521
  %v1556 = vpack.c.bf16 %v1524, %v1523
  %v1557 = vpack.c.bf16 %v1526, %v1525
  %v1558 = vpack.c.bf16 %v1528, %v1527
  %v1559 = vpack.c.bf16 %v1530, %v1529
  %v1560 = vpack.c.bf16 %v1532, %v1531
  %v1561 = vpack.c.bf16 %v1534, %v1533
  %v1562 = vpack.c.bf16 %v1536, %v1535
  %v1563 = vpack.c.bf16 %v1538, %v1537
  %v1564 = vpack.c.bf16 %v1540, %v1539
  %v1565 = vpack.c.bf16 %v1542, %v1541
  %v1566 = vpack.c.bf16 %v1544, %v1543
  %v1567 = vpack.c.bf16 %v1546, %v1545
  %v1568 = vpack.c.bf16 %v1548, %v1547
  %v1569 = vpack.c.bf16 %v1550, %v1549
  %v1570 = vpack.c.bf16 %v1552, %v1551
  %s1571 = scalar_lea.vmem %s1, 96
  %v1572 = vld [vmem:[%s1571] sm:$0xf]
  %v1573 = vld [vmem:[%s1571 + $0x4] sm:$0xf]
  %v1574 = vld [vmem:[%s1571 + $0x8] sm:$0xf]
  %v1575 = vld [vmem:[%s1571 + $0xc] sm:$0xf]
  %v1580 = vunpack.c.l.b16 %v1572
  %v1581 = vunpack.c.l.b16 %v1573
  %v1582 = vunpack.c.l.b16 %v1574
  %v1583 = vunpack.c.l.b16 %v1575
  %v1584 = vpack.c.b16 %v1581, %v1580
  %v1585 = vpack.c.b16 %v1583, %v1582
  %v1589 = vsel %vm148, %v1553, 0
  %v1592 = vsel %vm148, %v1554, 0
  %v1595 = vsel %vm148, %v1555, 0
  %v1598 = vsel %vm148, %v1556, 0
  %v1601 = vsel %vm148, %v1557, 0
  %v1604 = vsel %vm148, %v1558, 0
  %v1607 = vsel %vm148, %v1559, 0
  %v1610 = vsel %vm148, %v1560, 0
  %v1613 = vsel %vm148, %v1561, 0
  %v1616 = vsel %vm148, %v1562, 0
  %v1619 = vsel %vm148, %v1563, 0
  %v1622 = vsel %vm148, %v1564, 0
  %v1625 = vsel %vm148, %v1565, 0
  %v1628 = vsel %vm148, %v1566, 0
  %v1631 = vsel %vm148, %v1567, 0
  %v1634 = vsel %vm148, %v1568, 0
  %v1637 = vsel %vm148, %v1569, 0
  %v1640 = vsel %vm148, %v1570, 0
  %1642 = vmatpush.bf16.msra.mxu0 0
  %1643 = vmatpush.bf16.msra.mxu0 0
  %1644 = vmatpush.bf16.msra.mxu0 0
  %1645 = vmatpush.bf16.msra.mxu0 0
  %1646 = vmatpush.bf16.msra.mxu0 0
  %1647 = vmatpush.bf16.msra.mxu0 0
  %1648 = vmatpush.bf16.msra.mxu0 %v1585
  %1649 = vmatpush.bf16.msra.mxu0 %v1584
  %1650 = vmatmul.bf16.gmra.mxu0 %v1589
  %v1651 = vpop.f32.mrf.mxu0
  %v1652 = vadd.f32 0.0, %v1651
  %v1653 = vpop.f32.mrf.mxu0
  %v1654 = vadd.f32 0.0, %v1653
  %1655 = vmatmul.bf16.gmra.mxu0 %v1592
  %v1656 = vpop.f32.mrf.mxu0
  %v1657 = vadd.f32 0.0, %v1656
  %v1658 = vpop.f32.mrf.mxu0
  %v1659 = vadd.f32 0.0, %v1658
  %1660 = vmatmul.bf16.gmra.mxu0 %v1595
  %v1661 = vpop.f32.mrf.mxu0
  %v1662 = vadd.f32 0.0, %v1661
  %v1663 = vpop.f32.mrf.mxu0
  %v1664 = vadd.f32 0.0, %v1663
  %1665 = vmatmul.bf16.gmra.mxu0 %v1598
  %v1666 = vpop.f32.mrf.mxu0
  %v1667 = vadd.f32 0.0, %v1666
  %v1668 = vpop.f32.mrf.mxu0
  %v1669 = vadd.f32 0.0, %v1668
  %1670 = vmatmul.bf16.gmra.mxu0 %v1601
  %v1671 = vpop.f32.mrf.mxu0
  %v1672 = vadd.f32 0.0, %v1671
  %v1673 = vpop.f32.mrf.mxu0
  %v1674 = vadd.f32 0.0, %v1673
  %1675 = vmatmul.bf16.gmra.mxu0 %v1604
  %v1676 = vpop.f32.mrf.mxu0
  %v1677 = vadd.f32 0.0, %v1676
  %v1678 = vpop.f32.mrf.mxu0
  %v1679 = vadd.f32 0.0, %v1678
  %1680 = vmatmul.bf16.gmra.mxu0 %v1607
  %v1681 = vpop.f32.mrf.mxu0
  %v1682 = vadd.f32 0.0, %v1681
  %v1683 = vpop.f32.mrf.mxu0
  %v1684 = vadd.f32 0.0, %v1683
  %1685 = vmatmul.bf16.gmra.mxu0 %v1610
  %v1686 = vpop.f32.mrf.mxu0
  %v1687 = vadd.f32 0.0, %v1686
  %v1688 = vpop.f32.mrf.mxu0
  %v1689 = vadd.f32 0.0, %v1688
  %1690 = vmatmul.bf16.gmra.mxu0 %v1613
  %v1691 = vpop.f32.mrf.mxu0
  %v1692 = vadd.f32 0.0, %v1691
  %v1693 = vpop.f32.mrf.mxu0
  %v1694 = vadd.f32 0.0, %v1693
  %1695 = vmatmul.bf16.gmra.mxu0 %v1616
  %v1696 = vpop.f32.mrf.mxu0
  %v1697 = vadd.f32 0.0, %v1696
  %v1698 = vpop.f32.mrf.mxu0
  %v1699 = vadd.f32 0.0, %v1698
  %1700 = vmatmul.bf16.gmra.mxu0 %v1619
  %v1701 = vpop.f32.mrf.mxu0
  %v1702 = vadd.f32 0.0, %v1701
  %v1703 = vpop.f32.mrf.mxu0
  %v1704 = vadd.f32 0.0, %v1703
  %1705 = vmatmul.bf16.gmra.mxu0 %v1622
  %v1706 = vpop.f32.mrf.mxu0
  %v1707 = vadd.f32 0.0, %v1706
  %v1708 = vpop.f32.mrf.mxu0
  %v1709 = vadd.f32 0.0, %v1708
  %1710 = vmatmul.bf16.gmra.mxu0 %v1625
  %v1711 = vpop.f32.mrf.mxu0
  %v1712 = vadd.f32 0.0, %v1711
  %v1713 = vpop.f32.mrf.mxu0
  %v1714 = vadd.f32 0.0, %v1713
  %1715 = vmatmul.bf16.gmra.mxu0 %v1628
  %v1716 = vpop.f32.mrf.mxu0
  %v1717 = vadd.f32 0.0, %v1716
  %v1718 = vpop.f32.mrf.mxu0
  %v1719 = vadd.f32 0.0, %v1718
  %1720 = vmatmul.bf16.gmra.mxu0 %v1631
  %v1721 = vpop.f32.mrf.mxu0
  %v1722 = vadd.f32 0.0, %v1721
  %v1723 = vpop.f32.mrf.mxu0
  %v1724 = vadd.f32 0.0, %v1723
  %1725 = vmatmul.bf16.gmra.mxu0 %v1634
  %v1726 = vpop.f32.mrf.mxu0
  %v1727 = vadd.f32 0.0, %v1726
  %v1728 = vpop.f32.mrf.mxu0
  %v1729 = vadd.f32 0.0, %v1728
  %1730 = vmatmul.bf16.gmra.mxu0 %v1637
  %v1731 = vpop.f32.mrf.mxu0
  %v1732 = vadd.f32 0.0, %v1731
  %v1733 = vpop.f32.mrf.mxu0
  %v1734 = vadd.f32 0.0, %v1733
  %1735 = vmatmul.bf16.gmra.mxu0 %v1640
  %v1736 = vpop.f32.mrf.mxu0
  %v1737 = vadd.f32 0.0, %v1736
  %v1738 = vpop.f32.mrf.mxu0
  %v1739 = vadd.f32 0.0, %v1738
  %1740 = vdwg.mxu0
  %v1741 = vadd.f32 %v1479, %v1652
  %v1742 = vadd.f32 %v1480, %v1654
  %v1743 = vadd.f32 %v1481, %v1657
  %v1744 = vadd.f32 %v1482, %v1659
  %v1745 = vadd.f32 %v1483, %v1662
  %v1746 = vadd.f32 %v1484, %v1664
  %v1747 = vadd.f32 %v1485, %v1667
  %v1748 = vadd.f32 %v1486, %v1669
  %v1749 = vadd.f32 %v1487, %v1672
  %v1750 = vadd.f32 %v1488, %v1674
  %v1751 = vadd.f32 %v1489, %v1677
  %v1752 = vadd.f32 %v1490, %v1679
  %v1753 = vadd.f32 %v1491, %v1682
  %v1754 = vadd.f32 %v1492, %v1684
  %v1755 = vadd.f32 %v1493, %v1687
  %v1756 = vadd.f32 %v1494, %v1689
  %v1757 = vadd.f32 %v1495, %v1692
  %v1758 = vadd.f32 %v1496, %v1694
  %v1759 = vadd.f32 %v1497, %v1697
  %v1760 = vadd.f32 %v1498, %v1699
  %v1761 = vadd.f32 %v1499, %v1702
  %v1762 = vadd.f32 %v1500, %v1704
  %v1763 = vadd.f32 %v1501, %v1707
  %v1764 = vadd.f32 %v1502, %v1709
  %v1765 = vadd.f32 %v1503, %v1712
  %v1766 = vadd.f32 %v1504, %v1714
  %v1767 = vadd.f32 %v1505, %v1717
  %v1768 = vadd.f32 %v1506, %v1719
  %v1769 = vadd.f32 %v1507, %v1722
  %v1770 = vadd.f32 %v1508, %v1724
  %v1771 = vadd.f32 %v1509, %v1727
  %v1772 = vadd.f32 %v1510, %v1729
  %v1773 = vadd.f32 %v1511, %v1732
  %v1774 = vadd.f32 %v1512, %v1734
  %v1775 = vadd.f32 %v1513, %v1737
  %v1776 = vadd.f32 %v1514, %v1739
  %s1777 = sadd.s32 %s15, 37
  %s1778 = scalar_lea.vmem %s0, %s1777
  %v1779 = vld [vmem:[%s1778] sm:$0xff]
  %v1780 = vld [vmem:[%s1778 + $0x8] sm:$0xff]
  %v1781 = vld [vmem:[%s1778 + $0x10] sm:$0xff]
  %v1782 = vld [vmem:[%s1778 + $0x18] sm:$0xff]
  %v1783 = vld [vmem:[%s1778 + $0x20] sm:$0xff]
  %v1784 = vld [vmem:[%s1778 + $0x28] sm:$0xff]
  %v1785 = vld [vmem:[%s1778 + $0x30] sm:$0xff]
  %v1786 = vld [vmem:[%s1778 + $0x38] sm:$0xff]
  %v1787 = vld [vmem:[%s1778 + $0x40] sm:$0xff]
  %v1788 = vld [vmem:[%s1778 + $0x48] sm:$0xff]
  %v1789 = vld [vmem:[%s1778 + $0x50] sm:$0xff]
  %v1790 = vld [vmem:[%s1778 + $0x58] sm:$0xff]
  %v1791 = vld [vmem:[%s1778 + $0x60] sm:$0xff]
  %v1792 = vld [vmem:[%s1778 + $0x68] sm:$0xff]
  %v1793 = vld [vmem:[%s1778 + $0x70] sm:$0xff]
  %v1794 = vld [vmem:[%s1778 + $0x78] sm:$0xff]
  %v1795 = vld [vmem:[%s1778 + $0x80] sm:$0xff]
  %v1796 = vld [vmem:[%s1778 + $0x88] sm:$0xff]
  %v1797 = vld [vmem:[%s1778 + $0x90] sm:$0xff]
  %v1798 = vld [vmem:[%s1778 + $0x98] sm:$0xff]
  %v1799 = vld [vmem:[%s1778 + $0xa0] sm:$0xff]
  %v1800 = vld [vmem:[%s1778 + $0xa8] sm:$0xff]
  %v1801 = vld [vmem:[%s1778 + $0xb0] sm:$0xff]
  %v1802 = vld [vmem:[%s1778 + $0xb8] sm:$0xff]
  %v1803 = vld [vmem:[%s1778 + $0xc0] sm:$0xff]
  %v1804 = vld [vmem:[%s1778 + $0xc8] sm:$0xff]
  %v1805 = vld [vmem:[%s1778 + $0xd0] sm:$0xff]
  %v1806 = vld [vmem:[%s1778 + $0xd8] sm:$0xff]
  %v1807 = vld [vmem:[%s1778 + $0xe0] sm:$0xff]
  %v1808 = vld [vmem:[%s1778 + $0xe8] sm:$0xff]
  %v1809 = vld [vmem:[%s1778 + $0xf0] sm:$0xff]
  %v1810 = vld [vmem:[%s1778 + $0xf8] sm:$0xff]
  %v1811 = vld [vmem:[%s1778 + $0x100] sm:$0xff]
  %v1812 = vld [vmem:[%s1778 + $0x108] sm:$0xff]
  %v1813 = vld [vmem:[%s1778 + $0x110] sm:$0xff]
  %v1814 = vld [vmem:[%s1778 + $0x118] sm:$0xff]
  %v1815 = vpack.c.bf16 %v1780, %v1779
  %v1816 = vpack.c.bf16 %v1782, %v1781
  %v1817 = vpack.c.bf16 %v1784, %v1783
  %v1818 = vpack.c.bf16 %v1786, %v1785
  %v1819 = vpack.c.bf16 %v1788, %v1787
  %v1820 = vpack.c.bf16 %v1790, %v1789
  %v1821 = vpack.c.bf16 %v1792, %v1791
  %v1822 = vpack.c.bf16 %v1794, %v1793
  %v1823 = vpack.c.bf16 %v1796, %v1795
  %v1824 = vpack.c.bf16 %v1798, %v1797
  %v1825 = vpack.c.bf16 %v1800, %v1799
  %v1826 = vpack.c.bf16 %v1802, %v1801
  %v1827 = vpack.c.bf16 %v1804, %v1803
  %v1828 = vpack.c.bf16 %v1806, %v1805
  %v1829 = vpack.c.bf16 %v1808, %v1807
  %v1830 = vpack.c.bf16 %v1810, %v1809
  %v1831 = vpack.c.bf16 %v1812, %v1811
  %v1832 = vpack.c.bf16 %v1814, %v1813
  %s1833 = scalar_lea.vmem %s1, 112
  %v1834 = vld [vmem:[%s1833] sm:$0xf]
  %v1835 = vld [vmem:[%s1833 + $0x4] sm:$0xf]
  %v1836 = vld [vmem:[%s1833 + $0x8] sm:$0xf]
  %v1837 = vld [vmem:[%s1833 + $0xc] sm:$0xf]
  %v1842 = vunpack.c.l.b16 %v1834
  %v1843 = vunpack.c.l.b16 %v1835
  %v1844 = vunpack.c.l.b16 %v1836
  %v1845 = vunpack.c.l.b16 %v1837
  %v1846 = vpack.c.b16 %v1843, %v1842
  %v1847 = vpack.c.b16 %v1845, %v1844
  %v1851 = vsel %vm148, %v1815, 0
  %v1854 = vsel %vm148, %v1816, 0
  %v1857 = vsel %vm148, %v1817, 0
  %v1860 = vsel %vm148, %v1818, 0
  %v1863 = vsel %vm148, %v1819, 0
  %v1866 = vsel %vm148, %v1820, 0
  %v1869 = vsel %vm148, %v1821, 0
  %v1872 = vsel %vm148, %v1822, 0
  %v1875 = vsel %vm148, %v1823, 0
  %v1878 = vsel %vm148, %v1824, 0
  %v1881 = vsel %vm148, %v1825, 0
  %v1884 = vsel %vm148, %v1826, 0
  %v1887 = vsel %vm148, %v1827, 0
  %v1890 = vsel %vm148, %v1828, 0
  %v1893 = vsel %vm148, %v1829, 0
  %v1896 = vsel %vm148, %v1830, 0
  %v1899 = vsel %vm148, %v1831, 0
  %v1902 = vsel %vm148, %v1832, 0
  %1904 = vmatpush.bf16.msra.mxu0 0
  %1905 = vmatpush.bf16.msra.mxu0 0
  %1906 = vmatpush.bf16.msra.mxu0 0
  %1907 = vmatpush.bf16.msra.mxu0 0
  %1908 = vmatpush.bf16.msra.mxu0 0
  %1909 = vmatpush.bf16.msra.mxu0 0
  %1910 = vmatpush.bf16.msra.mxu0 %v1847
  %1911 = vmatpush.bf16.msra.mxu0 %v1846
  %1912 = vmatmul.bf16.gmra.mxu0 %v1851
  %v1913 = vpop.f32.mrf.mxu0
  %v1914 = vadd.f32 0.0, %v1913
  %v1915 = vpop.f32.mrf.mxu0
  %v1916 = vadd.f32 0.0, %v1915
  %1917 = vmatmul.bf16.gmra.mxu0 %v1854
  %v1918 = vpop.f32.mrf.mxu0
  %v1919 = vadd.f32 0.0, %v1918
  %v1920 = vpop.f32.mrf.mxu0
  %v1921 = vadd.f32 0.0, %v1920
  %1922 = vmatmul.bf16.gmra.mxu0 %v1857
  %v1923 = vpop.f32.mrf.mxu0
  %v1924 = vadd.f32 0.0, %v1923
  %v1925 = vpop.f32.mrf.mxu0
  %v1926 = vadd.f32 0.0, %v1925
  %1927 = vmatmul.bf16.gmra.mxu0 %v1860
  %v1928 = vpop.f32.mrf.mxu0
  %v1929 = vadd.f32 0.0, %v1928
  %v1930 = vpop.f32.mrf.mxu0
  %v1931 = vadd.f32 0.0, %v1930
  %1932 = vmatmul.bf16.gmra.mxu0 %v1863
  %v1933 = vpop.f32.mrf.mxu0
  %v1934 = vadd.f32 0.0, %v1933
  %v1935 = vpop.f32.mrf.mxu0
  %v1936 = vadd.f32 0.0, %v1935
  %1937 = vmatmul.bf16.gmra.mxu0 %v1866
  %v1938 = vpop.f32.mrf.mxu0
  %v1939 = vadd.f32 0.0, %v1938
  %v1940 = vpop.f32.mrf.mxu0
  %v1941 = vadd.f32 0.0, %v1940
  %1942 = vmatmul.bf16.gmra.mxu0 %v1869
  %v1943 = vpop.f32.mrf.mxu0
  %v1944 = vadd.f32 0.0, %v1943
  %v1945 = vpop.f32.mrf.mxu0
  %v1946 = vadd.f32 0.0, %v1945
  %1947 = vmatmul.bf16.gmra.mxu0 %v1872
  %v1948 = vpop.f32.mrf.mxu0
  %v1949 = vadd.f32 0.0, %v1948
  %v1950 = vpop.f32.mrf.mxu0
  %v1951 = vadd.f32 0.0, %v1950
  %1952 = vmatmul.bf16.gmra.mxu0 %v1875
  %v1953 = vpop.f32.mrf.mxu0
  %v1954 = vadd.f32 0.0, %v1953
  %v1955 = vpop.f32.mrf.mxu0
  %v1956 = vadd.f32 0.0, %v1955
  %1957 = vmatmul.bf16.gmra.mxu0 %v1878
  %v1958 = vpop.f32.mrf.mxu0
  %v1959 = vadd.f32 0.0, %v1958
  %v1960 = vpop.f32.mrf.mxu0
  %v1961 = vadd.f32 0.0, %v1960
  %1962 = vmatmul.bf16.gmra.mxu0 %v1881
  %v1963 = vpop.f32.mrf.mxu0
  %v1964 = vadd.f32 0.0, %v1963
  %v1965 = vpop.f32.mrf.mxu0
  %v1966 = vadd.f32 0.0, %v1965
  %1967 = vmatmul.bf16.gmra.mxu0 %v1884
  %v1968 = vpop.f32.mrf.mxu0
  %v1969 = vadd.f32 0.0, %v1968
  %v1970 = vpop.f32.mrf.mxu0
  %v1971 = vadd.f32 0.0, %v1970
  %1972 = vmatmul.bf16.gmra.mxu0 %v1887
  %v1973 = vpop.f32.mrf.mxu0
  %v1974 = vadd.f32 0.0, %v1973
  %v1975 = vpop.f32.mrf.mxu0
  %v1976 = vadd.f32 0.0, %v1975
  %1977 = vmatmul.bf16.gmra.mxu0 %v1890
  %v1978 = vpop.f32.mrf.mxu0
  %v1979 = vadd.f32 0.0, %v1978
  %v1980 = vpop.f32.mrf.mxu0
  %v1981 = vadd.f32 0.0, %v1980
  %1982 = vmatmul.bf16.gmra.mxu0 %v1893
  %v1983 = vpop.f32.mrf.mxu0
  %v1984 = vadd.f32 0.0, %v1983
  %v1985 = vpop.f32.mrf.mxu0
  %v1986 = vadd.f32 0.0, %v1985
  %1987 = vmatmul.bf16.gmra.mxu0 %v1896
  %v1988 = vpop.f32.mrf.mxu0
  %v1989 = vadd.f32 0.0, %v1988
  %v1990 = vpop.f32.mrf.mxu0
  %v1991 = vadd.f32 0.0, %v1990
  %1992 = vmatmul.bf16.gmra.mxu0 %v1899
  %v1993 = vpop.f32.mrf.mxu0
  %v1994 = vadd.f32 0.0, %v1993
  %v1995 = vpop.f32.mrf.mxu0
  %v1996 = vadd.f32 0.0, %v1995
  %1997 = vmatmul.bf16.gmra.mxu0 %v1902
  %v1998 = vpop.f32.mrf.mxu0
  %v1999 = vadd.f32 0.0, %v1998
  %v2000 = vpop.f32.mrf.mxu0
  %v2001 = vadd.f32 0.0, %v2000
  %2002 = vdwg.mxu0
  %v2003 = vadd.f32 %v1741, %v1914
  %v2004 = vadd.f32 %v1742, %v1916
  %v2005 = vadd.f32 %v1743, %v1919
  %v2006 = vadd.f32 %v1744, %v1921
  %v2007 = vadd.f32 %v1745, %v1924
  %v2008 = vadd.f32 %v1746, %v1926
  %v2009 = vadd.f32 %v1747, %v1929
  %v2010 = vadd.f32 %v1748, %v1931
  %v2011 = vadd.f32 %v1749, %v1934
  %v2012 = vadd.f32 %v1750, %v1936
  %v2013 = vadd.f32 %v1751, %v1939
  %v2014 = vadd.f32 %v1752, %v1941
  %v2015 = vadd.f32 %v1753, %v1944
  %v2016 = vadd.f32 %v1754, %v1946
  %v2017 = vadd.f32 %v1755, %v1949
  %v2018 = vadd.f32 %v1756, %v1951
  %v2019 = vadd.f32 %v1757, %v1954
  %v2020 = vadd.f32 %v1758, %v1956
  %v2021 = vadd.f32 %v1759, %v1959
  %v2022 = vadd.f32 %v1760, %v1961
  %v2023 = vadd.f32 %v1761, %v1964
  %v2024 = vadd.f32 %v1762, %v1966
  %v2025 = vadd.f32 %v1763, %v1969
  %v2026 = vadd.f32 %v1764, %v1971
  %v2027 = vadd.f32 %v1765, %v1974
  %v2028 = vadd.f32 %v1766, %v1976
  %v2029 = vadd.f32 %v1767, %v1979
  %v2030 = vadd.f32 %v1768, %v1981
  %v2031 = vadd.f32 %v1769, %v1984
  %v2032 = vadd.f32 %v1770, %v1986
  %v2033 = vadd.f32 %v1771, %v1989
  %v2034 = vadd.f32 %v1772, %v1991
  %v2035 = vadd.f32 %v1773, %v1994
  %v2036 = vadd.f32 %v1774, %v1996
  %v2037 = vadd.f32 %v1775, %v1999
  %v2038 = vadd.f32 %v1776, %v2001
  %s2039 = sadd.s32 %s15, 38
  %s2040 = scalar_lea.vmem %s0, %s2039
  %v2041 = vld [vmem:[%s2040] sm:$0xff]
  %v2042 = vld [vmem:[%s2040 + $0x8] sm:$0xff]
  %v2043 = vld [vmem:[%s2040 + $0x10] sm:$0xff]
  %v2044 = vld [vmem:[%s2040 + $0x18] sm:$0xff]
  %v2045 = vld [vmem:[%s2040 + $0x20] sm:$0xff]
  %v2046 = vld [vmem:[%s2040 + $0x28] sm:$0xff]
  %v2047 = vld [vmem:[%s2040 + $0x30] sm:$0xff]
  %v2048 = vld [vmem:[%s2040 + $0x38] sm:$0xff]
  %v2049 = vld [vmem:[%s2040 + $0x40] sm:$0xff]
  %v2050 = vld [vmem:[%s2040 + $0x48] sm:$0xff]
  %v2051 = vld [vmem:[%s2040 + $0x50] sm:$0xff]
  %v2052 = vld [vmem:[%s2040 + $0x58] sm:$0xff]
  %v2053 = vld [vmem:[%s2040 + $0x60] sm:$0xff]
  %v2054 = vld [vmem:[%s2040 + $0x68] sm:$0xff]
  %v2055 = vld [vmem:[%s2040 + $0x70] sm:$0xff]
  %v2056 = vld [vmem:[%s2040 + $0x78] sm:$0xff]
  %v2057 = vld [vmem:[%s2040 + $0x80] sm:$0xff]
  %v2058 = vld [vmem:[%s2040 + $0x88] sm:$0xff]
  %v2059 = vld [vmem:[%s2040 + $0x90] sm:$0xff]
  %v2060 = vld [vmem:[%s2040 + $0x98] sm:$0xff]
  %v2061 = vld [vmem:[%s2040 + $0xa0] sm:$0xff]
  %v2062 = vld [vmem:[%s2040 + $0xa8] sm:$0xff]
  %v2063 = vld [vmem:[%s2040 + $0xb0] sm:$0xff]
  %v2064 = vld [vmem:[%s2040 + $0xb8] sm:$0xff]
  %v2065 = vld [vmem:[%s2040 + $0xc0] sm:$0xff]
  %v2066 = vld [vmem:[%s2040 + $0xc8] sm:$0xff]
  %v2067 = vld [vmem:[%s2040 + $0xd0] sm:$0xff]
  %v2068 = vld [vmem:[%s2040 + $0xd8] sm:$0xff]
  %v2069 = vld [vmem:[%s2040 + $0xe0] sm:$0xff]
  %v2070 = vld [vmem:[%s2040 + $0xe8] sm:$0xff]
  %v2071 = vld [vmem:[%s2040 + $0xf0] sm:$0xff]
  %v2072 = vld [vmem:[%s2040 + $0xf8] sm:$0xff]
  %v2073 = vld [vmem:[%s2040 + $0x100] sm:$0xff]
  %v2074 = vld [vmem:[%s2040 + $0x108] sm:$0xff]
  %v2075 = vld [vmem:[%s2040 + $0x110] sm:$0xff]
  %v2076 = vld [vmem:[%s2040 + $0x118] sm:$0xff]
  %v2077 = vpack.c.bf16 %v2042, %v2041
  %v2078 = vpack.c.bf16 %v2044, %v2043
  %v2079 = vpack.c.bf16 %v2046, %v2045
  %v2080 = vpack.c.bf16 %v2048, %v2047
  %v2081 = vpack.c.bf16 %v2050, %v2049
  %v2082 = vpack.c.bf16 %v2052, %v2051
  %v2083 = vpack.c.bf16 %v2054, %v2053
  %v2084 = vpack.c.bf16 %v2056, %v2055
  %v2085 = vpack.c.bf16 %v2058, %v2057
  %v2086 = vpack.c.bf16 %v2060, %v2059
  %v2087 = vpack.c.bf16 %v2062, %v2061
  %v2088 = vpack.c.bf16 %v2064, %v2063
  %v2089 = vpack.c.bf16 %v2066, %v2065
  %v2090 = vpack.c.bf16 %v2068, %v2067
  %v2091 = vpack.c.bf16 %v2070, %v2069
  %v2092 = vpack.c.bf16 %v2072, %v2071
  %v2093 = vpack.c.bf16 %v2074, %v2073
  %v2094 = vpack.c.bf16 %v2076, %v2075
  %s2095 = scalar_lea.vmem %s1, 128
  %v2096 = vld [vmem:[%s2095] sm:$0xf]
  %v2097 = vld [vmem:[%s2095 + $0x4] sm:$0xf]
  %v2098 = vld [vmem:[%s2095 + $0x8] sm:$0xf]
  %v2099 = vld [vmem:[%s2095 + $0xc] sm:$0xf]
  %v2104 = vunpack.c.l.b16 %v2096
  %v2105 = vunpack.c.l.b16 %v2097
  %v2106 = vunpack.c.l.b16 %v2098
  %v2107 = vunpack.c.l.b16 %v2099
  %v2108 = vpack.c.b16 %v2105, %v2104
  %v2109 = vpack.c.b16 %v2107, %v2106
  %v2113 = vsel %vm148, %v2077, 0
  %v2116 = vsel %vm148, %v2078, 0
  %v2119 = vsel %vm148, %v2079, 0
  %v2122 = vsel %vm148, %v2080, 0
  %v2125 = vsel %vm148, %v2081, 0
  %v2128 = vsel %vm148, %v2082, 0
  %v2131 = vsel %vm148, %v2083, 0
  %v2134 = vsel %vm148, %v2084, 0
  %v2137 = vsel %vm148, %v2085, 0
  %v2140 = vsel %vm148, %v2086, 0
  %v2143 = vsel %vm148, %v2087, 0
  %v2146 = vsel %vm148, %v2088, 0
  %v2149 = vsel %vm148, %v2089, 0
  %v2152 = vsel %vm148, %v2090, 0
  %v2155 = vsel %vm148, %v2091, 0
  %v2158 = vsel %vm148, %v2092, 0
  %v2161 = vsel %vm148, %v2093, 0
  %v2164 = vsel %vm148, %v2094, 0
  %2166 = vmatpush.bf16.msra.mxu0 0
  %2167 = vmatpush.bf16.msra.mxu0 0
  %2168 = vmatpush.bf16.msra.mxu0 0
  %2169 = vmatpush.bf16.msra.mxu0 0
  %2170 = vmatpush.bf16.msra.mxu0 0
  %2171 = vmatpush.bf16.msra.mxu0 0
  %2172 = vmatpush.bf16.msra.mxu0 %v2109
  %2173 = vmatpush.bf16.msra.mxu0 %v2108
  %2174 = vmatmul.bf16.gmra.mxu0 %v2113
  %v2175 = vpop.f32.mrf.mxu0
  %v2176 = vadd.f32 0.0, %v2175
  %v2177 = vpop.f32.mrf.mxu0
  %v2178 = vadd.f32 0.0, %v2177
  %2179 = vmatmul.bf16.gmra.mxu0 %v2116
  %v2180 = vpop.f32.mrf.mxu0
  %v2181 = vadd.f32 0.0, %v2180
  %v2182 = vpop.f32.mrf.mxu0
  %v2183 = vadd.f32 0.0, %v2182
  %2184 = vmatmul.bf16.gmra.mxu0 %v2119
  %v2185 = vpop.f32.mrf.mxu0
  %v2186 = vadd.f32 0.0, %v2185
  %v2187 = vpop.f32.mrf.mxu0
  %v2188 = vadd.f32 0.0, %v2187
  %2189 = vmatmul.bf16.gmra.mxu0 %v2122
  %v2190 = vpop.f32.mrf.mxu0
  %v2191 = vadd.f32 0.0, %v2190
  %v2192 = vpop.f32.mrf.mxu0
  %v2193 = vadd.f32 0.0, %v2192
  %2194 = vmatmul.bf16.gmra.mxu0 %v2125
  %v2195 = vpop.f32.mrf.mxu0
  %v2196 = vadd.f32 0.0, %v2195
  %v2197 = vpop.f32.mrf.mxu0
  %v2198 = vadd.f32 0.0, %v2197
  %2199 = vmatmul.bf16.gmra.mxu0 %v2128
  %v2200 = vpop.f32.mrf.mxu0
  %v2201 = vadd.f32 0.0, %v2200
  %v2202 = vpop.f32.mrf.mxu0
  %v2203 = vadd.f32 0.0, %v2202
  %2204 = vmatmul.bf16.gmra.mxu0 %v2131
  %v2205 = vpop.f32.mrf.mxu0
  %v2206 = vadd.f32 0.0, %v2205
  %v2207 = vpop.f32.mrf.mxu0
  %v2208 = vadd.f32 0.0, %v2207
  %2209 = vmatmul.bf16.gmra.mxu0 %v2134
  %v2210 = vpop.f32.mrf.mxu0
  %v2211 = vadd.f32 0.0, %v2210
  %v2212 = vpop.f32.mrf.mxu0
  %v2213 = vadd.f32 0.0, %v2212
  %2214 = vmatmul.bf16.gmra.mxu0 %v2137
  %v2215 = vpop.f32.mrf.mxu0
  %v2216 = vadd.f32 0.0, %v2215
  %v2217 = vpop.f32.mrf.mxu0
  %v2218 = vadd.f32 0.0, %v2217
  %2219 = vmatmul.bf16.gmra.mxu0 %v2140
  %v2220 = vpop.f32.mrf.mxu0
  %v2221 = vadd.f32 0.0, %v2220
  %v2222 = vpop.f32.mrf.mxu0
  %v2223 = vadd.f32 0.0, %v2222
  %2224 = vmatmul.bf16.gmra.mxu0 %v2143
  %v2225 = vpop.f32.mrf.mxu0
  %v2226 = vadd.f32 0.0, %v2225
  %v2227 = vpop.f32.mrf.mxu0
  %v2228 = vadd.f32 0.0, %v2227
  %2229 = vmatmul.bf16.gmra.mxu0 %v2146
  %v2230 = vpop.f32.mrf.mxu0
  %v2231 = vadd.f32 0.0, %v2230
  %v2232 = vpop.f32.mrf.mxu0
  %v2233 = vadd.f32 0.0, %v2232
  %2234 = vmatmul.bf16.gmra.mxu0 %v2149
  %v2235 = vpop.f32.mrf.mxu0
  %v2236 = vadd.f32 0.0, %v2235
  %v2237 = vpop.f32.mrf.mxu0
  %v2238 = vadd.f32 0.0, %v2237
  %2239 = vmatmul.bf16.gmra.mxu0 %v2152
  %v2240 = vpop.f32.mrf.mxu0
  %v2241 = vadd.f32 0.0, %v2240
  %v2242 = vpop.f32.mrf.mxu0
  %v2243 = vadd.f32 0.0, %v2242
  %2244 = vmatmul.bf16.gmra.mxu0 %v2155
  %v2245 = vpop.f32.mrf.mxu0
  %v2246 = vadd.f32 0.0, %v2245
  %v2247 = vpop.f32.mrf.mxu0
  %v2248 = vadd.f32 0.0, %v2247
  %2249 = vmatmul.bf16.gmra.mxu0 %v2158
  %v2250 = vpop.f32.mrf.mxu0
  %v2251 = vadd.f32 0.0, %v2250
  %v2252 = vpop.f32.mrf.mxu0
  %v2253 = vadd.f32 0.0, %v2252
  %2254 = vmatmul.bf16.gmra.mxu0 %v2161
  %v2255 = vpop.f32.mrf.mxu0
  %v2256 = vadd.f32 0.0, %v2255
  %v2257 = vpop.f32.mrf.mxu0
  %v2258 = vadd.f32 0.0, %v2257
  %2259 = vmatmul.bf16.gmra.mxu0 %v2164
  %v2260 = vpop.f32.mrf.mxu0
  %v2261 = vadd.f32 0.0, %v2260
  %v2262 = vpop.f32.mrf.mxu0
  %v2263 = vadd.f32 0.0, %v2262
  %2264 = vdwg.mxu0
  %v2265 = vadd.f32 %v2003, %v2176
  %v2266 = vadd.f32 %v2004, %v2178
  %v2267 = vadd.f32 %v2005, %v2181
  %v2268 = vadd.f32 %v2006, %v2183
  %v2269 = vadd.f32 %v2007, %v2186
  %v2270 = vadd.f32 %v2008, %v2188
  %v2271 = vadd.f32 %v2009, %v2191
  %v2272 = vadd.f32 %v2010, %v2193
  %v2273 = vadd.f32 %v2011, %v2196
  %v2274 = vadd.f32 %v2012, %v2198
  %v2275 = vadd.f32 %v2013, %v2201
  %v2276 = vadd.f32 %v2014, %v2203
  %v2277 = vadd.f32 %v2015, %v2206
  %v2278 = vadd.f32 %v2016, %v2208
  %v2279 = vadd.f32 %v2017, %v2211
  %v2280 = vadd.f32 %v2018, %v2213
  %v2281 = vadd.f32 %v2019, %v2216
  %v2282 = vadd.f32 %v2020, %v2218
  %v2283 = vadd.f32 %v2021, %v2221
  %v2284 = vadd.f32 %v2022, %v2223
  %v2285 = vadd.f32 %v2023, %v2226
  %v2286 = vadd.f32 %v2024, %v2228
  %v2287 = vadd.f32 %v2025, %v2231
  %v2288 = vadd.f32 %v2026, %v2233
  %v2289 = vadd.f32 %v2027, %v2236
  %v2290 = vadd.f32 %v2028, %v2238
  %v2291 = vadd.f32 %v2029, %v2241
  %v2292 = vadd.f32 %v2030, %v2243
  %v2293 = vadd.f32 %v2031, %v2246
  %v2294 = vadd.f32 %v2032, %v2248
  %v2295 = vadd.f32 %v2033, %v2251
  %v2296 = vadd.f32 %v2034, %v2253
  %v2297 = vadd.f32 %v2035, %v2256
  %v2298 = vadd.f32 %v2036, %v2258
  %v2299 = vadd.f32 %v2037, %v2261
  %v2300 = vadd.f32 %v2038, %v2263
  %v2301 = vld [vmem:[%s2] sm:$0x1]
  %v2303 = vperm.slane %v2301, 0
  %v2305 = vadd.f32 %v2265, %v2303
  %v2306 = vadd.f32 %v2266, %v2303
  %v2307 = vadd.f32 %v2267, %v2303
  %v2308 = vadd.f32 %v2268, %v2303
  %v2309 = vadd.f32 %v2269, %v2303
  %v2310 = vadd.f32 %v2270, %v2303
  %v2311 = vadd.f32 %v2271, %v2303
  %v2312 = vadd.f32 %v2272, %v2303
  %v2313 = vadd.f32 %v2273, %v2303
  %v2314 = vadd.f32 %v2274, %v2303
  %v2315 = vadd.f32 %v2275, %v2303
  %v2316 = vadd.f32 %v2276, %v2303
  %v2317 = vadd.f32 %v2277, %v2303
  %v2318 = vadd.f32 %v2278, %v2303
  %v2319 = vadd.f32 %v2279, %v2303
  %v2320 = vadd.f32 %v2280, %v2303
  %v2321 = vadd.f32 %v2281, %v2303
  %v2322 = vadd.f32 %v2282, %v2303
  %v2323 = vadd.f32 %v2283, %v2303
  %v2324 = vadd.f32 %v2284, %v2303
  %v2325 = vadd.f32 %v2285, %v2303
  %v2326 = vadd.f32 %v2286, %v2303
  %v2327 = vadd.f32 %v2287, %v2303
  %v2328 = vadd.f32 %v2288, %v2303
  %v2329 = vadd.f32 %v2289, %v2303
  %v2330 = vadd.f32 %v2290, %v2303
  %v2331 = vadd.f32 %v2291, %v2303
  %v2332 = vadd.f32 %v2292, %v2303
  %v2333 = vadd.f32 %v2293, %v2303
  %v2334 = vadd.f32 %v2294, %v2303
  %v2335 = vadd.f32 %v2295, %v2303
  %v2336 = vadd.f32 %v2296, %v2303
  %v2337 = vadd.f32 %v2297, %v2303
  %v2338 = vadd.f32 %v2298, %v2303
  %v2339 = vadd.f32 %v2299, %v2303
  %v2340 = vadd.f32 %v2300, %v2303
  %v2341 = vmax.f32 %v2305, 0.0
  %v2342 = vmax.f32 %v2306, 0.0
  %v2343 = vmax.f32 %v2307, 0.0
  %v2344 = vmax.f32 %v2308, 0.0
  %v2345 = vmax.f32 %v2309, 0.0
  %v2346 = vmax.f32 %v2310, 0.0
  %v2347 = vmax.f32 %v2311, 0.0
  %v2348 = vmax.f32 %v2312, 0.0
  %v2349 = vmax.f32 %v2313, 0.0
  %v2350 = vmax.f32 %v2314, 0.0
  %v2351 = vmax.f32 %v2315, 0.0
  %v2352 = vmax.f32 %v2316, 0.0
  %v2353 = vmax.f32 %v2317, 0.0
  %v2354 = vmax.f32 %v2318, 0.0
  %v2355 = vmax.f32 %v2319, 0.0
  %v2356 = vmax.f32 %v2320, 0.0
  %v2357 = vmax.f32 %v2321, 0.0
  %v2358 = vmax.f32 %v2322, 0.0
  %v2359 = vmax.f32 %v2323, 0.0
  %v2360 = vmax.f32 %v2324, 0.0
  %v2361 = vmax.f32 %v2325, 0.0
  %v2362 = vmax.f32 %v2326, 0.0
  %v2363 = vmax.f32 %v2327, 0.0
  %v2364 = vmax.f32 %v2328, 0.0
  %v2365 = vmax.f32 %v2329, 0.0
  %v2366 = vmax.f32 %v2330, 0.0
  %v2367 = vmax.f32 %v2331, 0.0
  %v2368 = vmax.f32 %v2332, 0.0
  %v2369 = vmax.f32 %v2333, 0.0
  %v2370 = vmax.f32 %v2334, 0.0
  %v2371 = vmax.f32 %v2335, 0.0
  %v2372 = vmax.f32 %v2336, 0.0
  %v2373 = vmax.f32 %v2337, 0.0
  %v2374 = vmax.f32 %v2338, 0.0
  %v2375 = vmax.f32 %v2339, 0.0
  %v2376 = vmax.f32 %v2340, 0.0
  %2377 = vst.msk [vmem:[%s3] sm:$0xff] %vm148, %v2341
  %2378 = vst.msk [vmem:[%s3 + $0x8] sm:$0xff] %vm148, %v2342
  %2379 = vst.msk [vmem:[%s3 + $0x10] sm:$0xff] %vm148, %v2343
  %2380 = vst.msk [vmem:[%s3 + $0x18] sm:$0xff] %vm148, %v2344
  %2381 = vst.msk [vmem:[%s3 + $0x20] sm:$0xff] %vm148, %v2345
  %2382 = vst.msk [vmem:[%s3 + $0x28] sm:$0xff] %vm148, %v2346
  %2383 = vst.msk [vmem:[%s3 + $0x30] sm:$0xff] %vm148, %v2347
  %2384 = vst.msk [vmem:[%s3 + $0x38] sm:$0xff] %vm148, %v2348
  %2385 = vst.msk [vmem:[%s3 + $0x40] sm:$0xff] %vm148, %v2349
  %2386 = vst.msk [vmem:[%s3 + $0x48] sm:$0xff] %vm148, %v2350
  %2387 = vst.msk [vmem:[%s3 + $0x50] sm:$0xff] %vm148, %v2351
  %2388 = vst.msk [vmem:[%s3 + $0x58] sm:$0xff] %vm148, %v2352
  %2389 = vst.msk [vmem:[%s3 + $0x60] sm:$0xff] %vm148, %v2353
  %2390 = vst.msk [vmem:[%s3 + $0x68] sm:$0xff] %vm148, %v2354
  %2391 = vst.msk [vmem:[%s3 + $0x70] sm:$0xff] %vm148, %v2355
  %2392 = vst.msk [vmem:[%s3 + $0x78] sm:$0xff] %vm148, %v2356
  %2393 = vst.msk [vmem:[%s3 + $0x80] sm:$0xff] %vm148, %v2357
  %2394 = vst.msk [vmem:[%s3 + $0x88] sm:$0xff] %vm148, %v2358
  %2395 = vst.msk [vmem:[%s3 + $0x90] sm:$0xff] %vm148, %v2359
  %2396 = vst.msk [vmem:[%s3 + $0x98] sm:$0xff] %vm148, %v2360
  %2397 = vst.msk [vmem:[%s3 + $0xa0] sm:$0xff] %vm148, %v2361
  %2398 = vst.msk [vmem:[%s3 + $0xa8] sm:$0xff] %vm148, %v2362
  %2399 = vst.msk [vmem:[%s3 + $0xb0] sm:$0xff] %vm148, %v2363
  %2400 = vst.msk [vmem:[%s3 + $0xb8] sm:$0xff] %vm148, %v2364
  %2401 = vst.msk [vmem:[%s3 + $0xc0] sm:$0xff] %vm148, %v2365
  %2402 = vst.msk [vmem:[%s3 + $0xc8] sm:$0xff] %vm148, %v2366
  %2403 = vst.msk [vmem:[%s3 + $0xd0] sm:$0xff] %vm148, %v2367
  %2404 = vst.msk [vmem:[%s3 + $0xd8] sm:$0xff] %vm148, %v2368
  %2405 = vst.msk [vmem:[%s3 + $0xe0] sm:$0xff] %vm148, %v2369
  %2406 = vst.msk [vmem:[%s3 + $0xe8] sm:$0xff] %vm148, %v2370
  %2407 = vst.msk [vmem:[%s3 + $0xf0] sm:$0xff] %vm148, %v2371
  %2408 = vst.msk [vmem:[%s3 + $0xf8] sm:$0xff] %vm148, %v2372
  %2409 = vst.msk [vmem:[%s3 + $0x100] sm:$0xff] %vm148, %v2373
  %2410 = vst.msk [vmem:[%s3 + $0x108] sm:$0xff] %vm148, %v2374
  %2411 = vst.msk [vmem:[%s3 + $0x110] sm:$0xff] %vm148, %v2375
  %2412 = vst.msk [vmem:[%s3 + $0x118] sm:$0xff] %vm148, %v2376
  // Predicated region
  $region14: #{ssd_wrapper_forward.4} parent=0 // pred_check
    _
  $region15: #{ssd_wrapper_forward.4} parent=0 // pred_check_branch
    %2414 = sbr.rel (0) target = $region17
  $region16: #{ssd_wrapper_forward.4} parent=0 // pred_region
    _
  $region17: #{ssd_wrapper_forward.4} parent=0 // pred_fallthru
    _
  // Predicated region
  $region18: #{ssd_wrapper_forward.4} parent=0 // pred_check
    _
  $region19: #{ssd_wrapper_forward.4} parent=0 // pred_check_branch
    %2416 = sbr.rel (0) target = $region21
  $region20: #{ssd_wrapper_forward.4} parent=0 // pred_region
    _
  $region21: #{ssd_wrapper_forward.4} parent=0 // pred_fallthru
    _

// kernel: ssd_wrapper_forward.5
$region0: #{ssd_wrapper_forward.5}
  #allocation0 [shape = 'u32[]', space=smem, size = 0x4, offset = 0x4, fixed_abs, tag = 'smem constant byte address 0x4 - core index']
  #allocation1 [shape = 'u32[72,128]{1,0:T(1,128)}', space=vmem, size = 0x9000, scoped, tag = 'internal scratch']
  %s0 = inlined_call_operand.vmem [shape: f32[32,256], index: 0, kind: input, shape index: {}]
  %s1 = inlined_call_operand.vmem [shape: bf16[16,32], index: 1, kind: input, shape index: {}]
  %s2 = inlined_call_operand.vmem [shape: f32[16,1], index: 2, kind: input, shape index: {}]
  %s3 = inlined_call_operand.vmem [shape: f32[4,256], index: 3, kind: input, shape index: {}]
  %s4 = inlined_call_operand.vmem [shape: f32[8,256], index: 4, kind: output, shape index: {}]
  %s5 = sld [smem:[#allocation0]]
  $region87: #{ssd_wrapper_forward.5} parent=0
    _
  %s7 = ssub.s32 1, %s5
  %s8 = scalar_select 0, %s7, %s5
  $region1: #{ssd_wrapper_forward.5} parent=0
    #allocation2 [shape = 'u8[32768]{0}', space=vmem, size = 0x8000, scoped, tag = 'input window, operand 0']
    loop: start=0, step=1, limit=4
    $region2: #{ssd_wrapper_forward.5} parent=1 // loop_pre_header
      _
    $region3: #{ssd_wrapper_forward.5} parent=1 // loop_header
      %s10 = sphi 0, %s14
      %p11 = scmp.ge.s32.totalorder %s10, 4
      %s20 = sphi 0, %s22
      %s23 = sphi 0, %s20
      %s24 = sphi 0, %s23
      %s40 = sphi 0, %s24
      %s44 = sphi 0, %s44
      %s46 = sphi 0, %s44
      %s47 = sphi 0, %s46
      %s61 = sphi 0, %s47
      %s65 = sphi 0, %s65
      %s67 = sphi 0, %s65
      %s68 = sphi 0, %s67
      %s82 = sphi 0, %s68
      %s88 = sphi 0, %s90
      %s91 = sphi 0, %s88
      %s92 = sphi 0, %s91
      %s108 = sphi 0, %s92
      %s114 = sphi 0, %s116
      %s117 = sphi 0, %s114
      %s118 = sphi 0, %s117
      %s134 = sphi 0, %s118
    $region4: #{ssd_wrapper_forward.5} parent=1 // loop_header_branch
      %13 = sbr.rel (%p11) target = $region8
    $region5: #{ssd_wrapper_forward.5} parent=1 // loop_body
      %s15 = ssub.s32 %s10, 1
      %s16 = ssub.s32 %s10, 2
      %s17 = sadd.s32 %s10, 1
      %s18 = ssub.s32 %s10, %s17
      %p19 = scmp.eq.s32.totalorder %s18, 0
      %s21 = sadd.s32 %s20, 1
      %s22 = scalar_select %p19, %s20, %s21
      %p25 = pneg %p19
      %p26 = scmp.eq.s32.totalorder %s10, 1
      %p27 = por %p25, %p26
      %p28 = scmp.ne.s32.totalorder %s20, %s23
      %p29 = scmp.eq.s32.totalorder %s10, 0
      %p30 = por %p28, %p29
      %p31 = scmp.ne.s32.totalorder %s20, %s23
      %p32 = scmp.eq.s32.totalorder %s15, 1
      %p33 = por %p31, %p32
      %p34 = scmp.ne.s32.totalorder %s23, %s24
      %p35 = scmp.eq.s32.totalorder %s15, 0
      %p36 = por %p34, %p35
      %p37 = scmp.ne.s32.totalorder %s23, %s24
      %p38 = scmp.eq.s32.totalorder %s16, 1
      %p39 = por %p37, %p38
      %p41 = scmp.ne.s32.totalorder %s24, %s40
      %p42 = scmp.eq.s32.totalorder %s16, 0
      %p43 = por %p41, %p42
      %s45 = sadd.s32 %s44, 1
      %p48 = scmp.eq.s32.totalorder %s10, 1
      %p49 = scmp.ne.s32.totalorder %s44, %s46
      %p50 = scmp.eq.s32.totalorder %s10, 0
      %p51 = por %p49, %p50
      %p52 = scmp.ne.s32.totalorder %s44, %s46
      %p53 = scmp.eq.s32.totalorder %s15, 1
      %p54 = por %p52, %p53
      %p55 = scmp.ne.s32.totalorder %s46, %s47
      %p56 = scmp.eq.s32.totalorder %s15, 0
      %p57 = por %p55, %p56
      %p58 = scmp.ne.s32.totalorder %s46, %s47
      %p59 = scmp.eq.s32.totalorder %s16, 1
      %p60 = por %p58, %p59
      %p62 = scmp.ne.s32.totalorder %s47, %s61
      %p63 = scmp.eq.s32.totalorder %s16, 0
      %p64 = por %p62, %p63
      %s66 = sadd.s32 %s65, 1
      %p69 = scmp.eq.s32.totalorder %s10, 1
      %p70 = scmp.ne.s32.totalorder %s65, %s67
      %p71 = scmp.eq.s32.totalorder %s10, 0
      %p72 = por %p70, %p71
      %p73 = scmp.ne.s32.totalorder %s65, %s67
      %p74 = scmp.eq.s32.totalorder %s15, 1
      %p75 = por %p73, %p74
      %p76 = scmp.ne.s32.totalorder %s67, %s68
      %p77 = scmp.eq.s32.totalorder %s15, 0
      %p78 = por %p76, %p77
      %p79 = scmp.ne.s32.totalorder %s67, %s68
      %p80 = scmp.eq.s32.totalorder %s16, 1
      %p81 = por %p79, %p80
      %p83 = scmp.ne.s32.totalorder %s68, %s82
      %p84 = scmp.eq.s32.totalorder %s16, 0
      %p85 = por %p83, %p84
      %s86 = ssub.s32 %s10, %s17
      %p87 = scmp.eq.s32.totalorder %s86, 0
      %s89 = sadd.s32 %s88, 1
      %s90 = scalar_select %p87, %s88, %s89
      %p93 = pneg %p87
      %p94 = scmp.eq.s32.totalorder %s10, 1
      %p95 = por %p93, %p94
      %p96 = scmp.ne.s32.totalorder %s88, %s91
      %p97 = scmp.eq.s32.totalorder %s10, 0
      %p98 = por %p96, %p97
      %p99 = scmp.ne.s32.totalorder %s88, %s91
      %p100 = scmp.eq.s32.totalorder %s15, 1
      %p101 = por %p99, %p100
      %p102 = scmp.ne.s32.totalorder %s91, %s92
      %p103 = scmp.eq.s32.totalorder %s15, 0
      %p104 = por %p102, %p103
      %p105 = scmp.ne.s32.totalorder %s91, %s92
      %p106 = scmp.eq.s32.totalorder %s16, 1
      %p107 = por %p105, %p106
      %p109 = scmp.ne.s32.totalorder %s92, %s108
      %p110 = scmp.eq.s32.totalorder %s16, 0
      %p111 = por %p109, %p110
      %s112 = ssub.s32 %s10, %s17
      %p113 = scmp.eq.s32.totalorder %s112, 0
      %s115 = sadd.s32 %s114, 1
      %s116 = scalar_select %p113, %s114, %s115
      %p119 = pneg %p113
      %p120 = scmp.eq.s32.totalorder %s10, 1
      %p121 = por %p119, %p120
      %p122 = scmp.ne.s32.totalorder %s114, %s117
      %p123 = scmp.eq.s32.totalorder %s10, 0
      %p124 = por %p122, %p123
      %p125 = scmp.ne.s32.totalorder %s114, %s117
      %p126 = scmp.eq.s32.totalorder %s15, 1
      %p127 = por %p125, %p126
      %p128 = scmp.ne.s32.totalorder %s117, %s118
      %p129 = scmp.eq.s32.totalorder %s15, 0
      %p130 = por %p128, %p129
      %p131 = scmp.ne.s32.totalorder %s117, %s118
      %p132 = scmp.eq.s32.totalorder %s16, 1
      %p133 = por %p131, %p132
      %p135 = scmp.ne.s32.totalorder %s118, %s134
      %p136 = scmp.eq.s32.totalorder %s16, 0
      %p137 = por %p135, %p136
      %p138 = scmp.le.s32.totalorder 1, %s10
      %p139 = scmp.lt.s32.totalorder %s10, 3
      %p140 = pnand %p138, %p139
      %p141 = pneg %p140
      // Predicated region
      $region9: #{ssd_wrapper_forward.5} parent=5 // pred_check
        _
      $region10: #{ssd_wrapper_forward.5} parent=5 // pred_check_branch
        %143 = sbr.rel (%p140) target = $region12
      $region11: #{ssd_wrapper_forward.5} parent=5 // pred_region
        %s144 = ssub.s32 %s10, 1
        // Predicated region
        $region13: #{ssd_wrapper_forward.5} parent=11 // pred_check
          %p145 = pneg %p57
        $region14: #{ssd_wrapper_forward.5} parent=11 // pred_check_branch
          %147 = sbr.rel (%p145) target = $region16
        $region15: #{ssd_wrapper_forward.5} parent=11 // pred_region
          _
        $region16: #{ssd_wrapper_forward.5} parent=11 // pred_fallthru
          _
        // Predicated region
        $region17: #{ssd_wrapper_forward.5} parent=11 // pred_check
          %p148 = pneg %p78
        $region18: #{ssd_wrapper_forward.5} parent=11 // pred_check_branch
          %150 = sbr.rel (%p148) target = $region20
        $region19: #{ssd_wrapper_forward.5} parent=11 // pred_region
          _
        $region20: #{ssd_wrapper_forward.5} parent=11 // pred_fallthru
          _
      $region12: #{ssd_wrapper_forward.5} parent=5 // pred_fallthru
        _
      %p151 = scmp.lt.s32.totalorder %s10, 2
      // Predicated region
      $region21: #{ssd_wrapper_forward.5} parent=5 // pred_check
        %p152 = pneg %p151
      $region22: #{ssd_wrapper_forward.5} parent=5 // pred_check_branch
        %154 = sbr.rel (%p152) target = $region24
      $region23: #{ssd_wrapper_forward.5} parent=5 // pred_region
        // Predicated region
        $region25: #{ssd_wrapper_forward.5} parent=23 // pred_check
          %p155 = pneg %p30
        $region26: #{ssd_wrapper_forward.5} parent=23 // pred_check_branch
          %157 = sbr.rel (%p155) target = $region28
        $region27: #{ssd_wrapper_forward.5} parent=23 // pred_region
          %s158 = sand.u32 %s20, 1
          %s159 = sand.u32 %s20, 1
          %s160 = smul.addr %s159, 32
          %s161 = scalar_lea.vmem [#allocation2], %s160
          %s162 = smul.addr %s10, 8
          %s163 = scalar_lea.vmem %s0, %s162
          // Predicated region
          $region29: #{ssd_wrapper_forward.5} parent=27 // pred_check
            _
          $region30: #{ssd_wrapper_forward.5} parent=27 // pred_check_branch
            %165 = sbr.rel (0) target = $region32
          $region31: #{ssd_wrapper_forward.5} parent=27 // pred_region
            // Predicated region
            $region33: #{ssd_wrapper_forward.5} parent=31 // pred_check
              _
            $region34: #{ssd_wrapper_forward.5} parent=31 // pred_check_branch
              %167 = sbr.rel (0) target = $region36
            $region35: #{ssd_wrapper_forward.5} parent=31 // pred_region
              // Predicated region
              $region48: #{ssd_wrapper_forward.5} parent=35 // pred_check
                _
              $region49: #{ssd_wrapper_forward.5} parent=35 // pred_check_branch
                %189 = sbr.rel (0) target = $region51
              $region50: #{ssd_wrapper_forward.5} parent=35 // pred_region
                loop: start=0, step=1, limit=1
                $region52: #{ssd_wrapper_forward.5} parent=50 // loop_pre_header
                  _
                $region53: #{ssd_wrapper_forward.5} parent=50 // loop_header
                  %s191 = sphi 0, %s195
                  %p192 = scmp.ge.s32.totalorder %s191, 1
                  %s196 = sphi %s163, %s163
                  %s197 = sphi %s161, %s161
                $region54: #{ssd_wrapper_forward.5} parent=50 // loop_header_branch
                  %194 = sbr.rel (%p192) target = $region58
                $region55: #{ssd_wrapper_forward.5} parent=50 // loop_body
                  %v198 = vld [vmem:[%s196] sm:$0xff]
                  %199 = vst [vmem:[%s197] sm:$0xff] %v198
                  %v200 = vld [vmem:[%s196 + $0x10] sm:$0xff]
                  %201 = vst [vmem:[%s197 + $0x8] sm:$0xff] %v200
                  %v202 = vld [vmem:[%s196 + $0x20] sm:$0xff]
                  %203 = vst [vmem:[%s197 + $0x10] sm:$0xff] %v202
                  %v204 = vld [vmem:[%s196 + $0x30] sm:$0xff]
                  %205 = vst [vmem:[%s197 + $0x18] sm:$0xff] %v204
                $region56: #{ssd_wrapper_forward.5} parent=50 // loop_footer
                  %s195 = sadd.s32 1, %s191
                $region57: #{ssd_wrapper_forward.5} parent=50 // loop_footer_branch
                  %190 = sbr.rel target = $region53
                $region58: #{ssd_wrapper_forward.5} parent=50 // loop_exit
                  _
              $region51: #{ssd_wrapper_forward.5} parent=35 // pred_fallthru
                _
              // Predicated region
              $region59: #{ssd_wrapper_forward.5} parent=35 // pred_check
                _
              $region60: #{ssd_wrapper_forward.5} parent=35 // pred_check_branch
                %207 = sbr.rel target = $region62
              $region61: #{ssd_wrapper_forward.5} parent=35 // pred_region
                _
              $region62: #{ssd_wrapper_forward.5} parent=35 // pred_fallthru
                _
            $region36: #{ssd_wrapper_forward.5} parent=31 // pred_fallthru
              _
            // Predicated region
            $region37: #{ssd_wrapper_forward.5} parent=31 // pred_check
              _
            $region38: #{ssd_wrapper_forward.5} parent=31 // pred_check_branch
              %169 = sbr.rel target = $region40
            $region39: #{ssd_wrapper_forward.5} parent=31 // pred_region
              %s171 = ssub.s32 256, 1
              loop: start=0, step=1, limit=1
              $region41: #{ssd_wrapper_forward.5} parent=39 // loop_pre_header
                _
              $region42: #{ssd_wrapper_forward.5} parent=39 // loop_header
                %s173 = sphi 0, %s177
                %p174 = scmp.ge.s32.totalorder %s173, 1
                %s178 = sphi %s163, %s163
                %s179 = sphi %s161, %s161
              $region43: #{ssd_wrapper_forward.5} parent=39 // loop_header_branch
                %176 = sbr.rel (%p174) target = $region47
              $region44: #{ssd_wrapper_forward.5} parent=39 // loop_body
                %v180 = vld [vmem:[%s178] sm:%s171]
                %181 = vst [vmem:[%s179] sm:%s171] %v180
                %v182 = vld [vmem:[%s178 + $0x10] sm:%s171]
                %183 = vst [vmem:[%s179 + $0x8] sm:%s171] %v182
                %v184 = vld [vmem:[%s178 + $0x20] sm:%s171]
                %185 = vst [vmem:[%s179 + $0x10] sm:%s171] %v184
                %v186 = vld [vmem:[%s178 + $0x30] sm:%s171]
                %187 = vst [vmem:[%s179 + $0x18] sm:%s171] %v186
              $region45: #{ssd_wrapper_forward.5} parent=39 // loop_footer
                %s177 = sadd.s32 1, %s173
              $region46: #{ssd_wrapper_forward.5} parent=39 // loop_footer_branch
                %172 = sbr.rel target = $region42
              $region47: #{ssd_wrapper_forward.5} parent=39 // loop_exit
                _
            $region40: #{ssd_wrapper_forward.5} parent=31 // pred_fallthru
              _
          $region32: #{ssd_wrapper_forward.5} parent=27 // pred_fallthru
            _
          %208 = vnop
        $region28: #{ssd_wrapper_forward.5} parent=23 // pred_fallthru
          _
        // Predicated region
        $region63: #{ssd_wrapper_forward.5} parent=23 // pred_check
          %p209 = pneg %p98
        $region64: #{ssd_wrapper_forward.5} parent=23 // pred_check_branch
          %211 = sbr.rel (%p209) target = $region66
        $region65: #{ssd_wrapper_forward.5} parent=23 // pred_region
          %p212 = scmp.lt.s32.totalorder %s10, 1
          %s213 = scalar_select %p212, %s10, 1
          %s214 = smul.addr %s213, 4
          %s215 = scalar_lea.vmem %s3, %s214
        $region66: #{ssd_wrapper_forward.5} parent=23 // pred_fallthru
          _
      $region24: #{ssd_wrapper_forward.5} parent=5 // pred_fallthru
        _
      %p216 = scmp.le.s32.totalorder 1, %s10
      %p217 = scmp.lt.s32.totalorder %s10, 3
      %p218 = pnand %p216, %p217
      %p219 = pneg %p218
      // Predicated region
      $region67: #{ssd_wrapper_forward.5} parent=5 // pred_check
        _
      $region68: #{ssd_wrapper_forward.5} parent=5 // pred_check_branch
        %221 = sbr.rel (%p218) target = $region70
      $region69: #{ssd_wrapper_forward.5} parent=5 // pred_region
        %s222 = ssub.s32 %s10, 1
        %s223 = sand.u32 %s23, 1
        %s224 = sand.u32 %s23, 1
        %s225 = smul.addr %s224, 32
        %s226 = scalar_lea.vmem [#allocation2], %s225
        // Predicated region
        $region71: #{ssd_wrapper_forward.5} parent=69 // pred_check
          %p227 = pneg %p36
        $region72: #{ssd_wrapper_forward.5} parent=69 // pred_check_branch
          %229 = sbr.rel (%p227) target = $region74
        $region73: #{ssd_wrapper_forward.5} parent=69 // pred_region
          _
        $region74: #{ssd_wrapper_forward.5} parent=69 // pred_fallthru
          _
        %s230 = sand.u32 %s23, 1
        %s231 = sand.u32 %s23, 1
        %s232 = smul.addr %s231, 32
        %s233 = scalar_lea.vmem [#allocation2], %s232
        %p234 = pneg %p36
        %p235 = pneg %p33
        %p236 = pneg %p57
        %p237 = pneg %p54
        %p238 = pneg %p78
        %p239 = pneg %p75
        %p240 = scmp.lt.s32.totalorder %s15, 1
        %s241 = scalar_select %p240, %s15, 1
        %s242 = smul.addr %s241, 4
        %s243 = scalar_lea.vmem %s3, %s242
        %p244 = pneg %p104
        %p245 = pneg %p101
        %p246 = pneg %p130
        %p247 = pneg %p127
        %p248 = scmp.lt.s32.totalorder %s15, 1
        %s249 = scalar_select %p248, %s15, 1
        %s250 = smul.addr %s249, 8
        %s251 = scalar_lea.vmem %s4, %s250
        %p252 = scmp.lt.s32.totalorder %s15, 1
        %s253 = scalar_select %p252, %s15, 1
        %s254 = smul.addr %s253, 4
        %s255 = scalar_lea.vmem %s3, %s254
        %p256 = scmp.lt.s32.totalorder %s15, 1
        %s257 = scalar_select %p256, %s15, 1
        %s258 = smul.addr %s257, 8
        %s259 = scalar_lea.vmem %s4, %s258
        %v261 = vld [vmem:[%s226] sm:$0xff]
        %v262 = vld [vmem:[%s226 + $0x8] sm:$0xff]
        %v263 = vld [vmem:[%s226 + $0x10] sm:$0xff]
        %v264 = vld [vmem:[%s226 + $0x18] sm:$0xff]
        %v265 = vpack.c.bf16 %v262, %v261
        %v266 = vpack.c.bf16 %v264, %v263
        %v267 = vld [vmem:[%s1] sm:$0xf]
        %v268 = vld [vmem:[%s1 + $0x4] sm:$0xf]
        %v269 = vld [vmem:[%s2] sm:$0xff]
        %v270 = vld [vmem:[%s2 + $0x8] sm:$0xff]
        %272 = vset.pattern.permute.xlu0 0
        %273 = vperm.xlu0 %272, %v269
        %v274 = vpop.permute.xlu0 %273
        %277 = vset.pattern.permute.xlu0 0
        %278 = vperm.xlu0 %277, %v270
        %v279 = vpop.permute.xlu0 %278
        %v283 = vunpack.c.l.b16 %v267
        %v284 = vunpack.c.l.b16 %v268
        %v285 = vpack.c.b16 %v284, %v283
        %vm286 = vcmask 261120
        %v288 = vsel %vm286, %v285, 0
        %290 = vmatpush.bf16.msra.mxu0 0
        %291 = vmatpush.bf16.msra.mxu0 0
        %292 = vmatpush.bf16.msra.mxu0 0
        %293 = vmatpush.bf16.msra.mxu0 0
        %294 = vmatpush.bf16.msra.mxu0 0
        %295 = vmatpush.bf16.msra.mxu0 0
        %296 = vmatpush.bf16.msra.mxu0 %v266
        %297 = vmatpush.bf16.msra.mxu0 %v265
        %298 = vmatmul.bf16.gmra.mxu0 %v288
        %v299 = vpop.f32.mrf.mxu0
        %v300 = vadd.f32 %v274, %v299
        %v301 = vpop.f32.mrf.mxu0
        %v302 = vadd.f32 %v279, %v301
        %303 = vdwg.mxu0
        %vm304 = vcmask 1047556
        %v305 = vsel %vm304, %v300, -inf
        %vm306 = vcmask 1040384
        %v307 = vsel %vm306, %v302, -inf
        %v308 = vmax.f32 %v305, %v307
        %v309 = vrot.slane %v308, 4
        %v310 = vmax.f32 %v308, %v309
        %v311 = vrot.slane %v310, 2
        %v312 = vmax.f32 %v310, %v311
        %v313 = vrot.slane %v312, 1
        %v314 = vmax.f32 %v312, %v313
        %v315 = vsub.f32 %v300, %v314
        %v316 = vsub.f32 %v302, %v314
        %v317 = vmul.f32 %v315, 1.442695
        %v318 = vpow.pop %v317
        %v319 = vmul.f32 %v316, 1.442695
        %v320 = vpow.pop %v319
        %vm323 = vcmask 1043456
        %v324 = vrot.slane %v318, 4
        %v325 = vrot.slane %v320, 4
        %v326 = vsel %vm323, %v324, %v325
        %vm328 = vcmask 1044480
        %v329 = vsel %vm328, %v326, 0.0
        %v330 = vrot.slane %v329, 4
        %v331 = vadd.f32 %v329, %v330
        %v332 = vrot.slane %v331, 2
        %v333 = vadd.f32 %v331, %v332
        %v334 = vrot.slane %v333, 1
        %v335 = vadd.f32 %v333, %v334
        %v336 = vrcp.pop %v335
        %v337 = vmul.f32 %v318, %v336
        %v338 = vmul.f32 %v320, %v336
        %vm339 = vcmask 1047557
        %v340 = vsel %vm339, %v337, -inf
        %v341 = vsel %vm306, %v338, -inf
        %v342 = vmax.f32 %v340, %v341
        %v343 = vrot.slane %v342, 4
        %v344 = vmax.f32 %v342, %v343
        %v345 = vrot.slane %v344, 2
        %v346 = vmax.f32 %v344, %v345
        %v347 = vrot.slane %v346, 1
        %v348 = vmax.f32 %v346, %v347
        %v349 = vlaneseq
        %v350 = vshrl.u32 %v349, 7
        %vm351 = vcmp.ge.f32.partialorder %v337, %v348
        %vm352 = vcmp.ge.f32.partialorder %v338, %v348
        %v353 = vrot.slane %v350, 3
        %v354 = vsel %vm351, %v353, 4
        %v355 = vsel %vm352, %v353, 4
        %v356 = vsel %vm339, %v354, 2147483647
        %v357 = vsel %vm306, %v355, 2147483647
        %vm358 = vcmp.lt.s32.totalorder %v356, %v357
        %v359 = vsel %vm358, %v356, %v357
        %v360 = vrot.slane %v359, 4
        %vm361 = vcmp.lt.s32.totalorder %v359, %v360
        %v362 = vsel %vm361, %v359, %v360
        %v363 = vrot.slane %v362, 2
        %vm364 = vcmp.lt.s32.totalorder %v362, %v363
        %v365 = vsel %vm364, %v362, %v363
        %v366 = vrot.slane %v365, 1
        %vm367 = vcmp.lt.s32.totalorder %v365, %v366
        %v368 = vsel %vm367, %v365, %v366
        %v369 = vadd.s32 %v368, 1
        %v370 = vcvt.s32.f32 %v369
        %v371 = vld [vmem:[%s255] sm:$0xf]
        %v372 = vmul.f32 %v300, 0.1
        %v374 = vrot.slane %v371, 2
        %v376 = vmul.f32 %v372, %v374
        %v377 = vadd.f32 %v371, %v376
        %v378 = vmul.f32 %v300, 0.2
        %v379 = vmin.f32 %v378, 4.1351666
        %v380 = vmul.f32 %v379, 1.442695
        %v381 = vpow.pop %v380
        %v382 = vmul.f32 %v371, %v381
        %v383 = vmul.f32 %v382, 0.5
        %v385 = vrot.slane %v383, 2
        %v387 = vsub.f32 %v377, %v385
        %v388 = vmax.f32 %v387, 0.0
        %v389 = vmin.f32 %v388, 16.0
        %v390 = vadd.f32 %v377, %v385
        %v391 = vmax.f32 %v390, 0.0
        %v392 = vmin.f32 %v391, 16.0
        %v394 = vrot.slane %v392, 6
        %vm396 = vcmask 1041408
        %v397 = vsel %vm396, %v389, %v394
        %vm398 = vcmask 1042432
        %v399 = vsel %vm398, %v397, %v394
        %v400 = vsel %vm323, %v399, %v348
        %v401 = vsel %vm328, %v400, %v370
        %vm402 = vcmask 1045504
        %v403 = vsel %vm402, %v401, 0.0
        %vm404 = vcmask 1046528
        %v405 = vsel %vm404, %v403, 0.0
        %406 = vst [vmem:[%s259] sm:$0xff] %v405
        %p407 = scmp.lt.s32.totalorder %s15, 1
        %s408 = scalar_select %p407, %s15, 1
        %s409 = smul.addr %s408, 8
        %s410 = scalar_lea.vmem %s4, %s409
        // Predicated region
        $region75: #{ssd_wrapper_forward.5} parent=69 // pred_check
          %p411 = pneg %p127
        $region76: #{ssd_wrapper_forward.5} parent=69 // pred_check_branch
          %413 = sbr.rel (%p411) target = $region78
        $region77: #{ssd_wrapper_forward.5} parent=69 // pred_region
          _
        $region78: #{ssd_wrapper_forward.5} parent=69 // pred_fallthru
          _
      $region70: #{ssd_wrapper_forward.5} parent=5 // pred_fallthru
        _
      %p414 = scmp.le.s32.totalorder 2, %s10
      // Predicated region
      $region79: #{ssd_wrapper_forward.5} parent=5 // pred_check
        %p415 = pneg %p414
      $region80: #{ssd_wrapper_forward.5} parent=5 // pred_check_branch
        %417 = sbr.rel (%p415) target = $region82
      $region81: #{ssd_wrapper_forward.5} parent=5 // pred_region
        %s418 = ssub.s32 %s10, 2
        // Predicated region
        $region83: #{ssd_wrapper_forward.5} parent=81 // pred_check
          %p419 = pneg %p133
        $region84: #{ssd_wrapper_forward.5} parent=81 // pred_check_branch
          %421 = sbr.rel (%p419) target = $region86
        $region85: #{ssd_wrapper_forward.5} parent=81 // pred_region
          %p422 = scmp.lt.s32.totalorder %s16, 1
          %s423 = scalar_select %p422, %s16, 1
          %s424 = smul.addr %s423, 8
          %s425 = scalar_lea.vmem %s4, %s424
        $region86: #{ssd_wrapper_forward.5} parent=81 // pred_fallthru
          _
      $region82: #{ssd_wrapper_forward.5} parent=5 // pred_fallthru
        _
    $region6: #{ssd_wrapper_forward.5} parent=1 // loop_footer
      %s14 = sadd.s32 1, %s10
    $region7: #{ssd_wrapper_forward.5} parent=1 // loop_footer_branch
      %9 = sbr.rel target = $region3
    $region8: #{ssd_wrapper_forward.5} parent=1 // loop_exit
      _

</llo_original>
